<compile_context>
chip_gen: v6e
topology: v6e:2x2x1
jax: 0.10.0
libtpu: 0.0.40
codegen_flags: <defaults>
</compile_context>

<pallas_src>
import functools
import math

import jax
import jax.numpy as jnp
from jax import lax
from jax.experimental import pallas as pl
from jax.experimental.pallas import tpu as pltpu

LN_EPS = 1e-5  # nn.LayerNorm default


# ------------------------------ in-kernel helpers ----------------------------


def _layernorm(x, gamma, beta):
    mu = jnp.mean(x, axis=-1, keepdims=True)
    var = jnp.mean(jnp.square(x - mu), axis=-1, keepdims=True)
    return (x - mu) * lax.rsqrt(var + LN_EPS) * gamma + beta


def _softmax_lastdim(z):
    m = jnp.max(z, axis=-1, keepdims=True)
    e = jnp.exp(z - m)
    return e * pl.reciprocal(jnp.sum(e, axis=-1, keepdims=True), approx=True)


# ------------------------------ kernels --------------------------------------


def _attn_block_kernel(x_ref, g_ref, b_ref, wqkv_ref, wproj_ref, bproj_ref,
                       o_ref, *, heads, scale):
    """Fused Residual(PreNormDrop(SelfAttention)) for one batch element.

    o = x + Proj(concat_h softmax(softmax(q_h k_h^T * scale)) v_h) + b_proj
    (the reference module applies softmax twice -- kept for parity; all
    dropouts are identity in eval mode).
    """
    x = x_ref[0]                                            # (N, C) f32
    xn = _layernorm(x, g_ref[...], b_ref[...])
    qkv = jnp.dot(xn.astype(wqkv_ref.dtype), wqkv_ref[...],
                  preferred_element_type=jnp.float32)       # (N, 3C) f32
    C = x.shape[-1]
    hd = C // heads

    q = (qkv[:, :C] * scale).astype(jnp.bfloat16)           # scale folded into q
    k = qkv[:, C:2 * C].astype(jnp.bfloat16)
    v = qkv[:, 2 * C:].astype(jnp.bfloat16)

    outs = []
    for h in range(heads):                                  # static unroll
        lo = h * hd
        hi = lo + hd
        s = lax.dot_general(q[:, lo:hi], k[:, lo:hi],
                            (((1,), (1,)), ((), ())),       # q @ k^T, no transpose op
                            preferred_element_type=jnp.float32)      # (N, N)
        p = _softmax_lastdim(_softmax_lastdim(s))           # double softmax (parity)
        outs.append(jnp.dot(p.astype(jnp.bfloat16), v[:, lo:hi],
                            preferred_element_type=jnp.float32))     # (N, hd)
    attn = jnp.concatenate(outs, axis=-1)                   # (N, C) lane-dense f32

    y = jnp.dot(attn.astype(wproj_ref.dtype), wproj_ref[...],
                preferred_element_type=jnp.float32) + bproj_ref[...]
    o_ref[0] = (x + y).astype(o_ref.dtype)


def _ffn_block_kernel(x_ref, g_ref, b_ref, w1_ref, b1_ref, w2_ref, b2_ref,
                      o_ref):
    """Fused Residual(PreNorm(FeedForward)): o = x + W2(relu(W1 LN(x)+b1))+b2."""
    x = x_ref[...]
    xn = _layernorm(x, g_ref[...], b_ref[...])
    h = jnp.dot(xn.astype(w1_ref.dtype), w1_ref[...],
                preferred_element_type=jnp.float32) + b1_ref[...]
    h = jnp.maximum(h, 0.0)                                 # ReLU, f32 epilogue
    y = jnp.dot(h.astype(w2_ref.dtype), w2_ref[...],
                preferred_element_type=jnp.float32) + b2_ref[...]
    o_ref[...] = (x + y).astype(o_ref.dtype)


# ------------------------------ wrappers --------------------------------------


def _cdiv(a, b):
    return -(-a // b)


def _round_up(x, m):
    return ((x + m - 1) // m) * m


def _vmem_limit(bytes_hint):
    """Per-generation VMEM cap: 3/4 of physical (v5e/v6e 128 MiB, v7x 64 MiB)."""
    try:
        cap = int(pltpu.get_tpu_info().vmem_capacity_bytes)
    except Exception:  # query unavailable -> conservative, v7x-safe default
        cap = 64 << 20
    return int(min(max(int(bytes_hint), 16 << 20), (cap * 3) // 4))


def _choose_tm(M, tm_max=256):
    """Biggest MXU-friendly row tile that still gives >=2 tiles when M > 8
    (so both v7x TensorCores get work) and divides M as evenly as possible."""
    if M <= 8:
        return M
    n_tiles = max(2, _cdiv(M, tm_max))
    return min(tm_max, _round_up(_cdiv(M, n_tiles), 8))


def attention_block(x, p, *, heads):
    """Fused Residual(PreNormDrop(SelfAttention)), one pallas_call over batch."""
    B, N, C = x.shape
    hd = C // heads
    scale = hd ** (-0.5)                       # qk_scale=None default
    M = B * N

    resident = [p["ln_g"], p["ln_b"], p["w_qkv"], p["w_proj"], p["b_proj"]]
    resident_bytes = sum(2 * a.size * a.dtype.itemsize for a in resident)
    # double-buffered (1,N,C) in/out tiles + resident weights + f32 intermediates
    hint = (4 * (2 * N * C * 4) + resident_bytes
            + N * 3 * C * 4 + heads * N * N * 4 + 2 * N * C * 4 + (8 << 20))

    kernel = functools.partial(_attn_block_kernel, heads=heads, scale=scale)
    row_spec = pl.BlockSpec((1, N, C), lambda b: (b, 0, 0))
    # Grid-invariant operands: full-array block + constant index map -> one DMA.
    # TODO(synk): pipeline_mode=pl.Buffered(1) here to drop the second weight
    # buffer for large dim on v7x.
    res_specs = [pl.BlockSpec(a.shape, lambda b: (0, 0)) for a in resident]

    return pl.pallas_call(
        kernel,
        out_shape=jax.ShapeDtypeStruct((B, N, C), x.dtype),
        grid_spec=pltpu.PrefetchScalarGridSpec(
            num_scalar_prefetch=0,
            grid=(B,),
            in_specs=[row_spec] + res_specs,
            out_specs=row_spec,
        ),
        compiler_params=pltpu.CompilerParams(
            dimension_semantics=("parallel",),
            vmem_limit_bytes=_vmem_limit(hint),
        ),
        cost_estimate=pl.CostEstimate(
            flops=int(2 * M * C * 3 * C + 4 * B * heads * N * N * hd
                      + 2 * M * C * C),
            transcendentals=int(2 * B * heads * N * N),
            bytes_accessed=int(2 * M * C * 4 + resident_bytes // 2),
        ),
    )(x, *resident)


def ffn_block(x, p, *, tm_max=256):
    """Fused Residual(PreNorm(FeedForward)), row-tiled over M = B*N tokens."""
    B, N, C = x.shape
    M = B * N
    hidden = p["w1"].shape[1]
    x2d = x.reshape(M, C)

    tm = _choose_tm(M, tm_max)
    M_pad = _round_up(M, tm)
    if M_pad != M:
        # Padded rows see LayerNorm with zero variance (finite, rsqrt(eps));
        # results are sliced off below.
        x2d = jnp.pad(x2d, ((0, M_pad - M), (0, 0)))

    resident = [p["ln_g"], p["ln_b"], p["w1"], p["b1"], p["w2"], p["b2"]]
    resident_bytes = sum(2 * a.size * a.dtype.itemsize for a in resident)
    hint = (2 * (2 * tm * C * 4) + resident_bytes
            + 2 * tm * hidden * 4 + (8 << 20))

    row_spec = pl.BlockSpec((tm, C), lambda i: (i, 0))
    res_specs = [pl.BlockSpec(a.shape, lambda i: (0, 0)) for a in resident]

    # TODO(synk): for large dim/mlp_dim add a hidden-dim grid axis ("arbitrary")
    # with an f32 VMEM accumulator so w1/w2 stream in chunks instead of being
    # fully resident (needed to fit v7x's 64 MiB VMEM at e.g. 1024/4096).
    out2d = pl.pallas_call(
        _ffn_block_kernel,
        out_shape=jax.ShapeDtypeStruct((M_pad, C), x.dtype),
        grid_spec=pltpu.PrefetchScalarGridSpec(
            num_scalar_prefetch=0,
            grid=(M_pad // tm,),
            in_specs=[row_spec] + res_specs,
            out_specs=row_spec,
        ),
        compiler_params=pltpu.CompilerParams(
            dimension_semantics=("parallel",),
            vmem_limit_bytes=_vmem_limit(hint),
        ),
        cost_estimate=pl.CostEstimate(
            flops=int(4 * M * C * hidden),
            transcendentals=0,
            bytes_accessed=int(2 * M * C * 4 + resident_bytes // 2),
        ),
    )(x2d, *resident)

    if M_pad != M:
        out2d = out2d[:M]
    return out2d.reshape(B, N, C)


def transformer_forward(x, layer_params, *, heads, return_intermediate=True):
    """Matches TransformerModel.forward (IntermediateSequential semantics)."""
    out = x
    intermediates = {}
    i = 0
    for lp in layer_params:
        out = attention_block(out, lp["attn"], heads=heads)
        if return_intermediate:
            intermediates[str(i)] = out
        i += 1
        out = ffn_block(out, lp["ffn"])
        if return_intermediate:
            intermediates[str(i)] = out
        i += 1
    if return_intermediate:
        return out, intermediates
    return out


# ------------------------------ params / reference ----------------------------


def init_transformer_params(key, dim, depth, heads, mlp_dim):
    """nn.Linear-style init (uniform +-1/sqrt(fan_in)); weights stored (in,out)
    and cast to bf16 (MXU operands); biases / LN params stay f32."""
    params = []
    lim_d = 1.0 / math.sqrt(dim)
    lim_h = 1.0 / math.sqrt(mlp_dim)
    for _ in range(depth):
        key, kag, kab, k1, k2, k3, kfg, kfb, k4, k5, k6, k7 = jax.random.split(key, 12)
        attn = dict(
            ln_g=(1.0 + 0.05 * jax.random.normal(kag, (1, dim), jnp.float32)),
            ln_b=(0.05 * jax.random.normal(kab, (1, dim), jnp.float32)),
            w_qkv=jax.random.uniform(k1, (dim, 3 * dim), jnp.float32,
                                     -lim_d, lim_d).astype(jnp.bfloat16),
            w_proj=jax.random.uniform(k2, (dim, dim), jnp.float32,
                                      -lim_d, lim_d).astype(jnp.bfloat16),
            b_proj=jax.random.uniform(k3, (1, dim), jnp.float32, -lim_d, lim_d),
        )
        ffn = dict(
            ln_g=(1.0 + 0.05 * jax.random.normal(kfg, (1, dim), jnp.float32)),
            ln_b=(0.05 * jax.random.normal(kfb, (1, dim), jnp.float32)),
            w1=jax.random.uniform(k4, (dim, mlp_dim), jnp.float32,
                                  -lim_d, lim_d).astype(jnp.bfloat16),
            b1=jax.random.uniform(k5, (1, mlp_dim), jnp.float32, -lim_d, lim_d),
            w2=jax.random.uniform(k6, (mlp_dim, dim), jnp.float32,
                                  -lim_h, lim_h).astype(jnp.bfloat16),
            b2=jax.random.uniform(k7, (1, dim), jnp.float32, -lim_h, lim_h),
        )
        params.append(dict(attn=attn, ffn=ffn))
    return params


def reference_forward(x, layer_params, *, heads):
    """Pure-JAX reference with the same mixed-precision choices as the kernels."""
    def ln(z, g, b):
        mu = z.mean(-1, keepdims=True)
        var = ((z - mu) ** 2).mean(-1, keepdims=True)
        return (z - mu) / jnp.sqrt(var + LN_EPS) * g.reshape(-1) + b.reshape(-1)

    def mm(a, w):
        return jnp.dot(a.astype(jnp.bfloat16), w,
                       preferred_element_type=jnp.float32)

    B, N, C = x.shape
    hd = C // heads
    scale = hd ** (-0.5)
    out = x
    inter = {}
    i = 0
    for lp in layer_params:
        ap = lp["attn"]
        xn = ln(out, ap["ln_g"], ap["ln_b"])
        qkv = mm(xn.reshape(B * N, C), ap["w_qkv"])
        qkv = qkv.reshape(B, N, 3, heads, hd).transpose(2, 0, 3, 1, 4)
        q, k, v = qkv[0] * scale, qkv[1], qkv[2]
        s = jnp.einsum("bhnd,bhmd->bhnm", q.astype(jnp.bfloat16),
                       k.astype(jnp.bfloat16),
                       preferred_element_type=jnp.float32)
        p = jax.nn.softmax(jax.nn.softmax(s, axis=-1), axis=-1)
        a = jnp.einsum("bhnm,bhmd->bhnd", p.astype(jnp.bfloat16),
                       v.astype(jnp.bfloat16),
                       preferred_element_type=jnp.float32)
        a = a.transpose(0, 2, 1, 3).reshape(B * N, C)
        out = out + (mm(a, ap["w_proj"]) + ap["b_proj"].reshape(-1)).reshape(B, N, C)
        inter[str(i)] = out
        i += 1

        fp = lp["ffn"]
        xn = ln(out, fp["ln_g"], fp["ln_b"])
        h = jnp.maximum(mm(xn.reshape(B * N, C), fp["w1"]) + fp["b1"].reshape(-1), 0.0)
        y = mm(h, fp["w2"]) + fp["b2"].reshape(-1)
        out = out + y.reshape(B, N, C)
        inter[str(i)] = out
        i += 1
    return out, inter


# ------------------------------ main ------------------------------------------


if __name__ == "__main__":
    batch, seq, dim, depth, heads, mlp_dim = 2, 16, 128, 2, 4, 256

    key = jax.random.PRNGKey(0)
    kx, kp = jax.random.split(key)
    x = jax.random.normal(kx, (batch, seq, dim), jnp.float32)
    params = init_transformer_params(kp, dim, depth, heads, mlp_dim)

    fwd = jax.jit(functools.partial(transformer_forward, heads=heads,
                                    return_intermediate=True))
    out, inters = fwd(x, params)
    out = jax.block_until_ready(out)

    ref_out, ref_inters = reference_forward(x, params, heads=heads)

    assert out.shape == (batch, seq, dim)
    assert len(inters) == 2 * depth
    assert jnp.allclose(out, ref_out, atol=1e-2, rtol=1e-2)
    for name in inters:
        assert jnp.allclose(inters[name], ref_inters[name], atol=1e-2, rtol=1e-2)

    print("KERNEL_OK")
</pallas_src>

<mosaic_0001>
module attributes {stable_mosaic.version = 11 : i64} {
  func.func @_ffn_block_kernel(%arg0: i32, %arg1: memref<16x128xf32, #tpu.memory_space<vmem>>, %arg2: memref<1x128xf32, #tpu.memory_space<vmem>>, %arg3: memref<1x128xf32, #tpu.memory_space<vmem>>, %arg4: memref<128x256xbf16, #tpu.memory_space<vmem>>, %arg5: memref<1x256xf32, #tpu.memory_space<vmem>>, %arg6: memref<256x128xbf16, #tpu.memory_space<vmem>>, %arg7: memref<1x128xf32, #tpu.memory_space<vmem>>, %arg8: memref<16x128xf32, #tpu.memory_space<vmem>>) attributes {dimension_semantics = [#tpu.dimension_semantics<parallel>], iteration_bounds = array<i64: 2>, scalar_prefetch = 0 : i64, scratch_operands = 0 : i64, tpu.core_type = #tpu.core_type<tc>, window_params = [{transform_indices = @transform_0, window_bounds = array<i64: 16, 128>}, {pipeline_mode = #tpu.pipeline_mode<synchronous>, transform_indices = @transform_1, window_bounds = array<i64: 1, 128>}, {pipeline_mode = #tpu.pipeline_mode<synchronous>, transform_indices = @transform_2, window_bounds = array<i64: 1, 128>}, {pipeline_mode = #tpu.pipeline_mode<synchronous>, transform_indices = @transform_3, window_bounds = array<i64: 128, 256>}, {pipeline_mode = #tpu.pipeline_mode<synchronous>, transform_indices = @transform_4, window_bounds = array<i64: 1, 256>}, {pipeline_mode = #tpu.pipeline_mode<synchronous>, transform_indices = @transform_5, window_bounds = array<i64: 256, 128>}, {pipeline_mode = #tpu.pipeline_mode<synchronous>, transform_indices = @transform_6, window_bounds = array<i64: 1, 128>}, {transform_indices = @transform_7, window_bounds = array<i64: 16, 128>}]} {
    %c0 = arith.constant 0 : index
    %c0_0 = arith.constant 0 : index
    %0 = vector.load %arg1[%c0, %c0_0] : memref<16x128xf32, #tpu.memory_space<vmem>>, vector<16x128xf32>
    %c0_1 = arith.constant 0 : index
    %c0_2 = arith.constant 0 : index
    %1 = vector.load %arg2[%c0_1, %c0_2] : memref<1x128xf32, #tpu.memory_space<vmem>>, vector<1x128xf32>
    %c0_3 = arith.constant 0 : index
    %c0_4 = arith.constant 0 : index
    %2 = vector.load %arg3[%c0_3, %c0_4] : memref<1x128xf32, #tpu.memory_space<vmem>>, vector<1x128xf32>
    %cst = arith.constant dense<0.000000e+00> : vector<16xf32>
    %3 = vector.multi_reduction <add>, %0, %cst [1] : vector<16x128xf32> to vector<16xf32>
    %4 = vector.shape_cast %3 : vector<16xf32> to vector<16x1xf32>
    %cst_5 = arith.constant 1.280000e+02 : f32
    %5 = vector.broadcast %cst_5 : f32 to vector<16x1xf32>
    %6 = arith.divf %4, %5 : vector<16x1xf32>
    %7 = vector.broadcast %6 : vector<16x1xf32> to vector<16x128xf32>
    %8 = arith.subf %0, %7 : vector<16x128xf32>
    %9 = arith.mulf %8, %8 : vector<16x128xf32>
    %cst_6 = arith.constant dense<0.000000e+00> : vector<16xf32>
    %10 = vector.multi_reduction <add>, %9, %cst_6 [1] : vector<16x128xf32> to vector<16xf32>
    %11 = vector.shape_cast %10 : vector<16xf32> to vector<16x1xf32>
    %cst_7 = arith.constant 1.280000e+02 : f32
    %12 = vector.broadcast %cst_7 : f32 to vector<16x1xf32>
    %13 = arith.divf %11, %12 : vector<16x1xf32>
    %14 = vector.broadcast %6 : vector<16x1xf32> to vector<16x128xf32>
    %15 = arith.subf %0, %14 : vector<16x128xf32>
    %cst_8 = arith.constant 9.99999974E-6 : f32
    %16 = vector.broadcast %cst_8 : f32 to vector<16x1xf32>
    %17 = arith.addf %13, %16 : vector<16x1xf32>
    %18 = math.rsqrt %17 : vector<16x1xf32>
    %19 = vector.broadcast %18 : vector<16x1xf32> to vector<16x128xf32>
    %20 = arith.mulf %15, %19 : vector<16x128xf32>
    %21 = vector.broadcast %1 : vector<1x128xf32> to vector<16x128xf32>
    %22 = arith.mulf %20, %21 : vector<16x128xf32>
    %23 = vector.broadcast %2 : vector<1x128xf32> to vector<16x128xf32>
    %24 = arith.addf %22, %23 : vector<16x128xf32>
    %25 = arith.truncf %24 : vector<16x128xf32> to vector<16x128xbf16>
    %c0_9 = arith.constant 0 : index
    %c0_10 = arith.constant 0 : index
    %26 = vector.load %arg4[%c0_9, %c0_10] : memref<128x256xbf16, #tpu.memory_space<vmem>>, vector<128x256xbf16>
    %cst_11 = arith.constant dense<0.000000e+00> : vector<16x256xf32>
    %27 = tpu.matmul %25, %26, %cst_11 {dimension_numbers = #tpu.dot_dimension_numbers<[1], [0], [0], [1], [0, 0, 1, 1], [], []>} : vector<16x128xbf16>, vector<128x256xbf16>, vector<16x256xf32> -> vector<16x256xf32>
    %c0_12 = arith.constant 0 : index
    %c0_13 = arith.constant 0 : index
    %28 = vector.load %arg5[%c0_12, %c0_13] : memref<1x256xf32, #tpu.memory_space<vmem>>, vector<1x256xf32>
    %29 = vector.broadcast %28 : vector<1x256xf32> to vector<16x256xf32>
    %30 = arith.addf %27, %29 : vector<16x256xf32>
    %cst_14 = arith.constant 0.000000e+00 : f32
    %31 = vector.broadcast %cst_14 : f32 to vector<16x256xf32>
    %32 = arith.maximumf %30, %31 : vector<16x256xf32>
    %33 = arith.truncf %32 : vector<16x256xf32> to vector<16x256xbf16>
    %c0_15 = arith.constant 0 : index
    %c0_16 = arith.constant 0 : index
    %34 = vector.load %arg6[%c0_15, %c0_16] : memref<256x128xbf16, #tpu.memory_space<vmem>>, vector<256x128xbf16>
    %cst_17 = arith.constant dense<0.000000e+00> : vector<16x128xf32>
    %35 = tpu.matmul %33, %34, %cst_17 {dimension_numbers = #tpu.dot_dimension_numbers<[1], [0], [0], [1], [0, 0, 1, 1], [], []>} : vector<16x256xbf16>, vector<256x128xbf16>, vector<16x128xf32> -> vector<16x128xf32>
    %c0_18 = arith.constant 0 : index
    %c0_19 = arith.constant 0 : index
    %36 = vector.load %arg7[%c0_18, %c0_19] : memref<1x128xf32, #tpu.memory_space<vmem>>, vector<1x128xf32>
    %37 = vector.broadcast %36 : vector<1x128xf32> to vector<16x128xf32>
    %38 = arith.addf %35, %37 : vector<16x128xf32>
    %39 = arith.addf %0, %38 : vector<16x128xf32>
    %c0_20 = arith.constant 0 : index
    %c0_21 = arith.constant 0 : index
    %40 = vector.load %arg8[%c0_20, %c0_21] : memref<16x128xf32, #tpu.memory_space<vmem>>, vector<16x128xf32>
    tpu.vector_store %arg8[%c0_20, %c0_21], %39 {strides = array<i32>} : memref<16x128xf32, #tpu.memory_space<vmem>>, vector<16x128xf32>,
    return
  }
  func.func @transform_0(%arg0: i32) -> (i32, i32) {
    %c0_i32 = arith.constant 0 : i32
    %c0_i32_0 = arith.constant 0 : i32
    return %arg0, %c0_i32 : i32, i32
  }
  func.func @transform_1(%arg0: i32) -> (i32, i32) {
    %c0_i32 = arith.constant 0 : i32
    %c0_i32_0 = arith.constant 0 : i32
    %c0_i32_1 = arith.constant 0 : i32
    return %c0_i32, %c0_i32_0 : i32, i32
  }
  func.func @transform_2(%arg0: i32) -> (i32, i32) {
    %c0_i32 = arith.constant 0 : i32
    %c0_i32_0 = arith.constant 0 : i32
    %c0_i32_1 = arith.constant 0 : i32
    return %c0_i32, %c0_i32_0 : i32, i32
  }
  func.func @transform_3(%arg0: i32) -> (i32, i32) {
    %c0_i32 = arith.constant 0 : i32
    %c0_i32_0 = arith.constant 0 : i32
    %c0_i32_1 = arith.constant 0 : i32
    return %c0_i32, %c0_i32_0 : i32, i32
  }
  func.func @transform_4(%arg0: i32) -> (i32, i32) {
    %c0_i32 = arith.constant 0 : i32
    %c0_i32_0 = arith.constant 0 : i32
    %c0_i32_1 = arith.constant 0 : i32
    return %c0_i32, %c0_i32_0 : i32, i32
  }
  func.func @transform_5(%arg0: i32) -> (i32, i32) {
    %c0_i32 = arith.constant 0 : i32
    %c0_i32_0 = arith.constant 0 : i32
    %c0_i32_1 = arith.constant 0 : i32
    return %c0_i32, %c0_i32_0 : i32, i32
  }
  func.func @transform_6(%arg0: i32) -> (i32, i32) {
    %c0_i32 = arith.constant 0 : i32
    %c0_i32_0 = arith.constant 0 : i32
    %c0_i32_1 = arith.constant 0 : i32
    return %c0_i32, %c0_i32_0 : i32, i32
  }
  func.func @transform_7(%arg0: i32) -> (i32, i32) {
    %c0_i32 = arith.constant 0 : i32
    %c0_i32_0 = arith.constant 0 : i32
    return %arg0, %c0_i32 : i32, i32
  }
}

module attributes {stable_mosaic.version = 11 : i64} {
  func.func @_attn_block_kernel(%arg0: i32, %arg1: memref<1x16x128xf32, #tpu.memory_space<vmem>>, %arg2: memref<1x128xf32, #tpu.memory_space<vmem>>, %arg3: memref<1x128xf32, #tpu.memory_space<vmem>>, %arg4: memref<128x384xbf16, #tpu.memory_space<vmem>>, %arg5: memref<128x128xbf16, #tpu.memory_space<vmem>>, %arg6: memref<1x128xf32, #tpu.memory_space<vmem>>, %arg7: memref<1x16x128xf32, #tpu.memory_space<vmem>>) attributes {dimension_semantics = [#tpu.dimension_semantics<parallel>], iteration_bounds = array<i64: 2>, scalar_prefetch = 0 : i64, scratch_operands = 0 : i64, tpu.core_type = #tpu.core_type<tc>, window_params = [{transform_indices = @transform_0, window_bounds = array<i64: 1, 16, 128>}, {pipeline_mode = #tpu.pipeline_mode<synchronous>, transform_indices = @transform_1, window_bounds = array<i64: 1, 128>}, {pipeline_mode = #tpu.pipeline_mode<synchronous>, transform_indices = @transform_2, window_bounds = array<i64: 1, 128>}, {pipeline_mode = #tpu.pipeline_mode<synchronous>, transform_indices = @transform_3, window_bounds = array<i64: 128, 384>}, {pipeline_mode = #tpu.pipeline_mode<synchronous>, transform_indices = @transform_4, window_bounds = array<i64: 128, 128>}, {pipeline_mode = #tpu.pipeline_mode<synchronous>, transform_indices = @transform_5, window_bounds = array<i64: 1, 128>}, {transform_indices = @transform_6, window_bounds = array<i64: 1, 16, 128>}]} {
    %c0 = arith.constant 0 : index
    %c0_0 = arith.constant 0 : index
    %c0_1 = arith.constant 0 : index
    %0 = vector.load %arg1[%c0, %c0_0, %c0_1] : memref<1x16x128xf32, #tpu.memory_space<vmem>>, vector<1x16x128xf32>
    %1 = vector.shape_cast %0 : vector<1x16x128xf32> to vector<16x128xf32>
    %c0_2 = arith.constant 0 : index
    %c0_3 = arith.constant 0 : index
    %2 = vector.load %arg2[%c0_2, %c0_3] : memref<1x128xf32, #tpu.memory_space<vmem>>, vector<1x128xf32>
    %c0_4 = arith.constant 0 : index
    %c0_5 = arith.constant 0 : index
    %3 = vector.load %arg3[%c0_4, %c0_5] : memref<1x128xf32, #tpu.memory_space<vmem>>, vector<1x128xf32>
    %cst = arith.constant dense<0.000000e+00> : vector<16xf32>
    %4 = vector.multi_reduction <add>, %1, %cst [1] : vector<16x128xf32> to vector<16xf32>
    %5 = vector.shape_cast %4 : vector<16xf32> to vector<16x1xf32>
    %cst_6 = arith.constant 1.280000e+02 : f32
    %6 = vector.broadcast %cst_6 : f32 to vector<16x1xf32>
    %7 = arith.divf %5, %6 : vector<16x1xf32>
    %8 = vector.broadcast %7 : vector<16x1xf32> to vector<16x128xf32>
    %9 = arith.subf %1, %8 : vector<16x128xf32>
    %10 = arith.mulf %9, %9 : vector<16x128xf32>
    %cst_7 = arith.constant dense<0.000000e+00> : vector<16xf32>
    %11 = vector.multi_reduction <add>, %10, %cst_7 [1] : vector<16x128xf32> to vector<16xf32>
    %12 = vector.shape_cast %11 : vector<16xf32> to vector<16x1xf32>
    %cst_8 = arith.constant 1.280000e+02 : f32
    %13 = vector.broadcast %cst_8 : f32 to vector<16x1xf32>
    %14 = arith.divf %12, %13 : vector<16x1xf32>
    %15 = vector.broadcast %7 : vector<16x1xf32> to vector<16x128xf32>
    %16 = arith.subf %1, %15 : vector<16x128xf32>
    %cst_9 = arith.constant 9.99999974E-6 : f32
    %17 = vector.broadcast %cst_9 : f32 to vector<16x1xf32>
    %18 = arith.addf %14, %17 : vector<16x1xf32>
    %19 = math.rsqrt %18 : vector<16x1xf32>
    %20 = vector.broadcast %19 : vector<16x1xf32> to vector<16x128xf32>
    %21 = arith.mulf %16, %20 : vector<16x128xf32>
    %22 = vector.broadcast %2 : vector<1x128xf32> to vector<16x128xf32>
    %23 = arith.mulf %21, %22 : vector<16x128xf32>
    %24 = vector.broadcast %3 : vector<1x128xf32> to vector<16x128xf32>
    %25 = arith.addf %23, %24 : vector<16x128xf32>
    %26 = arith.truncf %25 : vector<16x128xf32> to vector<16x128xbf16>
    %c0_10 = arith.constant 0 : index
    %c0_11 = arith.constant 0 : index
    %27 = vector.load %arg4[%c0_10, %c0_11] : memref<128x384xbf16, #tpu.memory_space<vmem>>, vector<128x384xbf16>
    %cst_12 = arith.constant dense<0.000000e+00> : vector<16x384xf32>
    %28 = tpu.matmul %26, %27, %cst_12 {dimension_numbers = #tpu.dot_dimension_numbers<[1], [0], [0], [1], [0, 0, 1, 1], [], []>} : vector<16x128xbf16>, vector<128x384xbf16>, vector<16x384xf32> -> vector<16x384xf32>
    %29 = vector.extract_strided_slice %28 {offsets = [0, 0], sizes = [16, 128], strides = [1, 1]} : vector<16x384xf32> to vector<16x128xf32>
    %cst_13 = arith.constant 0.176776692 : f32
    %30 = vector.broadcast %cst_13 : f32 to vector<16x128xf32>
    %31 = arith.mulf %29, %30 : vector<16x128xf32>
    %32 = arith.truncf %31 : vector<16x128xf32> to vector<16x128xbf16>
    %33 = vector.extract_strided_slice %28 {offsets = [0, 128], sizes = [16, 128], strides = [1, 1]} : vector<16x384xf32> to vector<16x128xf32>
    %34 = arith.truncf %33 : vector<16x128xf32> to vector<16x128xbf16>
    %35 = vector.extract_strided_slice %28 {offsets = [0, 256], sizes = [16, 128], strides = [1, 1]} : vector<16x384xf32> to vector<16x128xf32>
    %36 = arith.truncf %35 : vector<16x128xf32> to vector<16x128xbf16>
    %37 = vector.extract_strided_slice %32 {offsets = [0, 0], sizes = [16, 32], strides = [1, 1]} : vector<16x128xbf16> to vector<16x32xbf16>
    %38 = vector.extract_strided_slice %34 {offsets = [0, 0], sizes = [16, 32], strides = [1, 1]} : vector<16x128xbf16> to vector<16x32xbf16>
    %cst_14 = arith.constant dense<0.000000e+00> : vector<16x16xf32>
    %39 = tpu.matmul %37, %38, %cst_14 {dimension_numbers = #tpu.dot_dimension_numbers<[1], [1], [0], [0], [0, 0, 1, 0], [], []>} : vector<16x32xbf16>, vector<16x32xbf16>, vector<16x16xf32> -> vector<16x16xf32>
    %cst_15 = arith.constant dense<0xFF800000> : vector<16xf32>
    %40 = vector.multi_reduction <maximumf>, %39, %cst_15 [1] : vector<16x16xf32> to vector<16xf32>
    %41 = vector.shape_cast %40 : vector<16xf32> to vector<16x1xf32>
    %42 = vector.broadcast %41 : vector<16x1xf32> to vector<16x16xf32>
    %43 = arith.subf %39, %42 : vector<16x16xf32>
    %44 = math.exp %43 : vector<16x16xf32>
    %cst_16 = arith.constant dense<0.000000e+00> : vector<16xf32>
    %45 = vector.multi_reduction <add>, %44, %cst_16 [1] : vector<16x16xf32> to vector<16xf32>
    %46 = vector.shape_cast %45 : vector<16xf32> to vector<16x1xf32>
    %47 = tpu.reciprocal %46 {approx = true} : vector<16x1xf32> -> vector<16x1xf32>
    %48 = vector.broadcast %47 : vector<16x1xf32> to vector<16x16xf32>
    %49 = arith.mulf %44, %48 : vector<16x16xf32>
    %cst_17 = arith.constant dense<0xFF800000> : vector<16xf32>
    %50 = vector.multi_reduction <maximumf>, %49, %cst_17 [1] : vector<16x16xf32> to vector<16xf32>
    %51 = vector.shape_cast %50 : vector<16xf32> to vector<16x1xf32>
    %52 = vector.broadcast %51 : vector<16x1xf32> to vector<16x16xf32>
    %53 = arith.subf %49, %52 : vector<16x16xf32>
    %54 = math.exp %53 : vector<16x16xf32>
    %cst_18 = arith.constant dense<0.000000e+00> : vector<16xf32>
    %55 = vector.multi_reduction <add>, %54, %cst_18 [1] : vector<16x16xf32> to vector<16xf32>
    %56 = vector.shape_cast %55 : vector<16xf32> to vector<16x1xf32>
    %57 = tpu.reciprocal %56 {approx = true} : vector<16x1xf32> -> vector<16x1xf32>
    %58 = vector.broadcast %57 : vector<16x1xf32> to vector<16x16xf32>
    %59 = arith.mulf %54, %58 : vector<16x16xf32>
    %60 = arith.truncf %59 : vector<16x16xf32> to vector<16x16xbf16>
    %61 = vector.extract_strided_slice %36 {offsets = [0, 0], sizes = [16, 32], strides = [1, 1]} : vector<16x128xbf16> to vector<16x32xbf16>
    %cst_19 = arith.constant dense<0.000000e+00> : vector<16x32xf32>
    %62 = tpu.matmul %60, %61, %cst_19 {dimension_numbers = #tpu.dot_dimension_numbers<[1], [0], [0], [1], [0, 0, 1, 1], [], []>} : vector<16x16xbf16>, vector<16x32xbf16>, vector<16x32xf32> -> vector<16x32xf32>
    %63 = vector.extract_strided_slice %32 {offsets = [0, 32], sizes = [16, 32], strides = [1, 1]} : vector<16x128xbf16> to vector<16x32xbf16>
    %64 = vector.extract_strided_slice %34 {offsets = [0, 32], sizes = [16, 32], strides = [1, 1]} : vector<16x128xbf16> to vector<16x32xbf16>
    %cst_20 = arith.constant dense<0.000000e+00> : vector<16x16xf32>
    %65 = tpu.matmul %63, %64, %cst_20 {dimension_numbers = #tpu.dot_dimension_numbers<[1], [1], [0], [0], [0, 0, 1, 0], [], []>} : vector<16x32xbf16>, vector<16x32xbf16>, vector<16x16xf32> -> vector<16x16xf32>
    %cst_21 = arith.constant dense<0xFF800000> : vector<16xf32>
    %66 = vector.multi_reduction <maximumf>, %65, %cst_21 [1] : vector<16x16xf32> to vector<16xf32>
    %67 = vector.shape_cast %66 : vector<16xf32> to vector<16x1xf32>
    %68 = vector.broadcast %67 : vector<16x1xf32> to vector<16x16xf32>
    %69 = arith.subf %65, %68 : vector<16x16xf32>
    %70 = math.exp %69 : vector<16x16xf32>
    %cst_22 = arith.constant dense<0.000000e+00> : vector<16xf32>
    %71 = vector.multi_reduction <add>, %70, %cst_22 [1] : vector<16x16xf32> to vector<16xf32>
    %72 = vector.shape_cast %71 : vector<16xf32> to vector<16x1xf32>
    %73 = tpu.reciprocal %72 {approx = true} : vector<16x1xf32> -> vector<16x1xf32>
    %74 = vector.broadcast %73 : vector<16x1xf32> to vector<16x16xf32>
    %75 = arith.mulf %70, %74 : vector<16x16xf32>
    %cst_23 = arith.constant dense<0xFF800000> : vector<16xf32>
    %76 = vector.multi_reduction <maximumf>, %75, %cst_23 [1] : vector<16x16xf32> to vector<16xf32>
    %77 = vector.shape_cast %76 : vector<16xf32> to vector<16x1xf32>
    %78 = vector.broadcast %77 : vector<16x1xf32> to vector<16x16xf32>
    %79 = arith.subf %75, %78 : vector<16x16xf32>
    %80 = math.exp %79 : vector<16x16xf32>
    %cst_24 = arith.constant dense<0.000000e+00> : vector<16xf32>
    %81 = vector.multi_reduction <add>, %80, %cst_24 [1] : vector<16x16xf32> to vector<16xf32>
    %82 = vector.shape_cast %81 : vector<16xf32> to vector<16x1xf32>
    %83 = tpu.reciprocal %82 {approx = true} : vector<16x1xf32> -> vector<16x1xf32>
    %84 = vector.broadcast %83 : vector<16x1xf32> to vector<16x16xf32>
    %85 = arith.mulf %80, %84 : vector<16x16xf32>
    %86 = arith.truncf %85 : vector<16x16xf32> to vector<16x16xbf16>
    %87 = vector.extract_strided_slice %36 {offsets = [0, 32], sizes = [16, 32], strides = [1, 1]} : vector<16x128xbf16> to vector<16x32xbf16>
    %cst_25 = arith.constant dense<0.000000e+00> : vector<16x32xf32>
    %88 = tpu.matmul %86, %87, %cst_25 {dimension_numbers = #tpu.dot_dimension_numbers<[1], [0], [0], [1], [0, 0, 1, 1], [], []>} : vector<16x16xbf16>, vector<16x32xbf16>, vector<16x32xf32> -> vector<16x32xf32>
    %89 = vector.extract_strided_slice %32 {offsets = [0, 64], sizes = [16, 32], strides = [1, 1]} : vector<16x128xbf16> to vector<16x32xbf16>
    %90 = vector.extract_strided_slice %34 {offsets = [0, 64], sizes = [16, 32], strides = [1, 1]} : vector<16x128xbf16> to vector<16x32xbf16>
    %cst_26 = arith.constant dense<0.000000e+00> : vector<16x16xf32>
    %91 = tpu.matmul %89, %90, %cst_26 {dimension_numbers = #tpu.dot_dimension_numbers<[1], [1], [0], [0], [0, 0, 1, 0], [], []>} : vector<16x32xbf16>, vector<16x32xbf16>, vector<16x16xf32> -> vector<16x16xf32>
    %cst_27 = arith.constant dense<0xFF800000> : vector<16xf32>
    %92 = vector.multi_reduction <maximumf>, %91, %cst_27 [1] : vector<16x16xf32> to vector<16xf32>
    %93 = vector.shape_cast %92 : vector<16xf32> to vector<16x1xf32>
    %94 = vector.broadcast %93 : vector<16x1xf32> to vector<16x16xf32>
    %95 = arith.subf %91, %94 : vector<16x16xf32>
    %96 = math.exp %95 : vector<16x16xf32>
    %cst_28 = arith.constant dense<0.000000e+00> : vector<16xf32>
    %97 = vector.multi_reduction <add>, %96, %cst_28 [1] : vector<16x16xf32> to vector<16xf32>
    %98 = vector.shape_cast %97 : vector<16xf32> to vector<16x1xf32>
    %99 = tpu.reciprocal %98 {approx = true} : vector<16x1xf32> -> vector<16x1xf32>
    %100 = vector.broadcast %99 : vector<16x1xf32> to vector<16x16xf32>
    %101 = arith.mulf %96, %100 : vector<16x16xf32>
    %cst_29 = arith.constant dense<0xFF800000> : vector<16xf32>
    %102 = vector.multi_reduction <maximumf>, %101, %cst_29 [1] : vector<16x16xf32> to vector<16xf32>
    %103 = vector.shape_cast %102 : vector<16xf32> to vector<16x1xf32>
    %104 = vector.broadcast %103 : vector<16x1xf32> to vector<16x16xf32>
    %105 = arith.subf %101, %104 : vector<16x16xf32>
    %106 = math.exp %105 : vector<16x16xf32>
    %cst_30 = arith.constant dense<0.000000e+00> : vector<16xf32>
    %107 = vector.multi_reduction <add>, %106, %cst_30 [1] : vector<16x16xf32> to vector<16xf32>
    %108 = vector.shape_cast %107 : vector<16xf32> to vector<16x1xf32>
    %109 = tpu.reciprocal %108 {approx = true} : vector<16x1xf32> -> vector<16x1xf32>
    %110 = vector.broadcast %109 : vector<16x1xf32> to vector<16x16xf32>
    %111 = arith.mulf %106, %110 : vector<16x16xf32>
    %112 = arith.truncf %111 : vector<16x16xf32> to vector<16x16xbf16>
    %113 = vector.extract_strided_slice %36 {offsets = [0, 64], sizes = [16, 32], strides = [1, 1]} : vector<16x128xbf16> to vector<16x32xbf16>
    %cst_31 = arith.constant dense<0.000000e+00> : vector<16x32xf32>
    %114 = tpu.matmul %112, %113, %cst_31 {dimension_numbers = #tpu.dot_dimension_numbers<[1], [0], [0], [1], [0, 0, 1, 1], [], []>} : vector<16x16xbf16>, vector<16x32xbf16>, vector<16x32xf32> -> vector<16x32xf32>
    %115 = vector.extract_strided_slice %32 {offsets = [0, 96], sizes = [16, 32], strides = [1, 1]} : vector<16x128xbf16> to vector<16x32xbf16>
    %116 = vector.extract_strided_slice %34 {offsets = [0, 96], sizes = [16, 32], strides = [1, 1]} : vector<16x128xbf16> to vector<16x32xbf16>
    %cst_32 = arith.constant dense<0.000000e+00> : vector<16x16xf32>
    %117 = tpu.matmul %115, %116, %cst_32 {dimension_numbers = #tpu.dot_dimension_numbers<[1], [1], [0], [0], [0, 0, 1, 0], [], []>} : vector<16x32xbf16>, vector<16x32xbf16>, vector<16x16xf32> -> vector<16x16xf32>
    %cst_33 = arith.constant dense<0xFF800000> : vector<16xf32>
    %118 = vector.multi_reduction <maximumf>, %117, %cst_33 [1] : vector<16x16xf32> to vector<16xf32>
    %119 = vector.shape_cast %118 : vector<16xf32> to vector<16x1xf32>
    %120 = vector.broadcast %119 : vector<16x1xf32> to vector<16x16xf32>
    %121 = arith.subf %117, %120 : vector<16x16xf32>
    %122 = math.exp %121 : vector<16x16xf32>
    %cst_34 = arith.constant dense<0.000000e+00> : vector<16xf32>
    %123 = vector.multi_reduction <add>, %122, %cst_34 [1] : vector<16x16xf32> to vector<16xf32>
    %124 = vector.shape_cast %123 : vector<16xf32> to vector<16x1xf32>
    %125 = tpu.reciprocal %124 {approx = true} : vector<16x1xf32> -> vector<16x1xf32>
    %126 = vector.broadcast %125 : vector<16x1xf32> to vector<16x16xf32>
    %127 = arith.mulf %122, %126 : vector<16x16xf32>
    %cst_35 = arith.constant dense<0xFF800000> : vector<16xf32>
    %128 = vector.multi_reduction <maximumf>, %127, %cst_35 [1] : vector<16x16xf32> to vector<16xf32>
    %129 = vector.shape_cast %128 : vector<16xf32> to vector<16x1xf32>
    %130 = vector.broadcast %129 : vector<16x1xf32> to vector<16x16xf32>
    %131 = arith.subf %127, %130 : vector<16x16xf32>
    %132 = math.exp %131 : vector<16x16xf32>
    %cst_36 = arith.constant dense<0.000000e+00> : vector<16xf32>
    %133 = vector.multi_reduction <add>, %132, %cst_36 [1] : vector<16x16xf32> to vector<16xf32>
    %134 = vector.shape_cast %133 : vector<16xf32> to vector<16x1xf32>
    %135 = tpu.reciprocal %134 {approx = true} : vector<16x1xf32> -> vector<16x1xf32>
    %136 = vector.broadcast %135 : vector<16x1xf32> to vector<16x16xf32>
    %137 = arith.mulf %132, %136 : vector<16x16xf32>
    %138 = arith.truncf %137 : vector<16x16xf32> to vector<16x16xbf16>
    %139 = vector.extract_strided_slice %36 {offsets = [0, 96], sizes = [16, 32], strides = [1, 1]} : vector<16x128xbf16> to vector<16x32xbf16>
    %cst_37 = arith.constant dense<0.000000e+00> : vector<16x32xf32>
    %140 = tpu.matmul %138, %139, %cst_37 {dimension_numbers = #tpu.dot_dimension_numbers<[1], [0], [0], [1], [0, 0, 1, 1], [], []>} : vector<16x16xbf16>, vector<16x32xbf16>, vector<16x32xf32> -> vector<16x32xf32>
    %141 = tpu.concatenate %62, %88, %114, %140 in 1 : vector<16x32xf32>, vector<16x32xf32>, vector<16x32xf32>, vector<16x32xf32> -> vector<16x128xf32>
    %142 = arith.truncf %141 : vector<16x128xf32> to vector<16x128xbf16>
    %c0_38 = arith.constant 0 : index
    %c0_39 = arith.constant 0 : index
    %143 = vector.load %arg5[%c0_38, %c0_39] : memref<128x128xbf16, #tpu.memory_space<vmem>>, vector<128x128xbf16>
    %cst_40 = arith.constant dense<0.000000e+00> : vector<16x128xf32>
    %144 = tpu.matmul %142, %143, %cst_40 {dimension_numbers = #tpu.dot_dimension_numbers<[1], [0], [0], [1], [0, 0, 1, 1], [], []>} : vector<16x128xbf16>, vector<128x128xbf16>, vector<16x128xf32> -> vector<16x128xf32>
    %c0_41 = arith.constant 0 : index
    %c0_42 = arith.constant 0 : index
    %145 = vector.load %arg6[%c0_41, %c0_42] : memref<1x128xf32, #tpu.memory_space<vmem>>, vector<1x128xf32>
    %146 = vector.broadcast %145 : vector<1x128xf32> to vector<16x128xf32>
    %147 = arith.addf %144, %146 : vector<16x128xf32>
    %148 = arith.addf %1, %147 : vector<16x128xf32>
    %c0_43 = arith.constant 0 : index
    %c0_44 = arith.constant 0 : index
    %c0_45 = arith.constant 0 : index
    %149 = vector.load %arg7[%c0_43, %c0_44, %c0_45] : memref<1x16x128xf32, #tpu.memory_space<vmem>>, vector<1x16x128xf32>
    %150 = vector.shape_cast %149 : vector<1x16x128xf32> to vector<16x128xf32>
    %151 = vector.shape_cast %148 : vector<16x128xf32> to vector<1x16x128xf32>
    tpu.vector_store %arg7[%c0_43, %c0_44, %c0_45], %151 {strides = array<i32>} : memref<1x16x128xf32, #tpu.memory_space<vmem>>, vector<1x16x128xf32>,
    return
  }
  func.func @transform_0(%arg0: i32) -> (i32, i32, i32) {
    %c0_i32 = arith.constant 0 : i32
    %c0_i32_0 = arith.constant 0 : i32
    %c0_i32_1 = arith.constant 0 : i32
    return %arg0, %c0_i32, %c0_i32_0 : i32, i32, i32
  }
  func.func @transform_1(%arg0: i32) -> (i32, i32) {
    %c0_i32 = arith.constant 0 : i32
    %c0_i32_0 = arith.constant 0 : i32
    %c0_i32_1 = arith.constant 0 : i32
    return %c0_i32, %c0_i32_0 : i32, i32
  }
  func.func @transform_2(%arg0: i32) -> (i32, i32) {
    %c0_i32 = arith.constant 0 : i32
    %c0_i32_0 = arith.constant 0 : i32
    %c0_i32_1 = arith.constant 0 : i32
    return %c0_i32, %c0_i32_0 : i32, i32
  }
  func.func @transform_3(%arg0: i32) -> (i32, i32) {
    %c0_i32 = arith.constant 0 : i32
    %c0_i32_0 = arith.constant 0 : i32
    %c0_i32_1 = arith.constant 0 : i32
    return %c0_i32, %c0_i32_0 : i32, i32
  }
  func.func @transform_4(%arg0: i32) -> (i32, i32) {
    %c0_i32 = arith.constant 0 : i32
    %c0_i32_0 = arith.constant 0 : i32
    %c0_i32_1 = arith.constant 0 : i32
    return %c0_i32, %c0_i32_0 : i32, i32
  }
  func.func @transform_5(%arg0: i32) -> (i32, i32) {
    %c0_i32 = arith.constant 0 : i32
    %c0_i32_0 = arith.constant 0 : i32
    %c0_i32_1 = arith.constant 0 : i32
    return %c0_i32, %c0_i32_0 : i32, i32
  }
  func.func @transform_6(%arg0: i32) -> (i32, i32, i32) {
    %c0_i32 = arith.constant 0 : i32
    %c0_i32_0 = arith.constant 0 : i32
    %c0_i32_1 = arith.constant 0 : i32
    return %arg0, %c0_i32, %c0_i32_0 : i32, i32, i32
  }
}

module attributes {stable_mosaic.version = 11 : i64} {
  func.func @_attn_block_kernel(%arg0: i32, %arg1: memref<1x16x128xf32, #tpu.memory_space<vmem>>, %arg2: memref<1x128xf32, #tpu.memory_space<vmem>>, %arg3: memref<1x128xf32, #tpu.memory_space<vmem>>, %arg4: memref<128x384xbf16, #tpu.memory_space<vmem>>, %arg5: memref<128x128xbf16, #tpu.memory_space<vmem>>, %arg6: memref<1x128xf32, #tpu.memory_space<vmem>>, %arg7: memref<1x16x128xf32, #tpu.memory_space<vmem>>) attributes {dimension_semantics = [#tpu.dimension_semantics<parallel>], iteration_bounds = array<i64: 2>, scalar_prefetch = 0 : i64, scratch_operands = 0 : i64, tpu.core_type = #tpu.core_type<tc>, window_params = [{transform_indices = @transform_0, window_bounds = array<i64: 1, 16, 128>}, {pipeline_mode = #tpu.pipeline_mode<synchronous>, transform_indices = @transform_1, window_bounds = array<i64: 1, 128>}, {pipeline_mode = #tpu.pipeline_mode<synchronous>, transform_indices = @transform_2, window_bounds = array<i64: 1, 128>}, {pipeline_mode = #tpu.pipeline_mode<synchronous>, transform_indices = @transform_3, window_bounds = array<i64: 128, 384>}, {pipeline_mode = #tpu.pipeline_mode<synchronous>, transform_indices = @transform_4, window_bounds = array<i64: 128, 128>}, {pipeline_mode = #tpu.pipeline_mode<synchronous>, transform_indices = @transform_5, window_bounds = array<i64: 1, 128>}, {transform_indices = @transform_6, window_bounds = array<i64: 1, 16, 128>}]} {
    %c0 = arith.constant 0 : index
    %c0_0 = arith.constant 0 : index
    %c0_1 = arith.constant 0 : index
    %0 = vector.load %arg1[%c0, %c0_0, %c0_1] : memref<1x16x128xf32, #tpu.memory_space<vmem>>, vector<1x16x128xf32>
    %1 = vector.shape_cast %0 : vector<1x16x128xf32> to vector<16x128xf32>
    %c0_2 = arith.constant 0 : index
    %c0_3 = arith.constant 0 : index
    %2 = vector.load %arg2[%c0_2, %c0_3] : memref<1x128xf32, #tpu.memory_space<vmem>>, vector<1x128xf32>
    %c0_4 = arith.constant 0 : index
    %c0_5 = arith.constant 0 : index
    %3 = vector.load %arg3[%c0_4, %c0_5] : memref<1x128xf32, #tpu.memory_space<vmem>>, vector<1x128xf32>
    %cst = arith.constant dense<0.000000e+00> : vector<16xf32>
    %4 = vector.multi_reduction <add>, %1, %cst [1] : vector<16x128xf32> to vector<16xf32>
    %5 = vector.shape_cast %4 : vector<16xf32> to vector<16x1xf32>
    %cst_6 = arith.constant 1.280000e+02 : f32
    %6 = vector.broadcast %cst_6 : f32 to vector<16x1xf32>
    %7 = arith.divf %5, %6 : vector<16x1xf32>
    %8 = vector.broadcast %7 : vector<16x1xf32> to vector<16x128xf32>
    %9 = arith.subf %1, %8 : vector<16x128xf32>
    %10 = arith.mulf %9, %9 : vector<16x128xf32>
    %cst_7 = arith.constant dense<0.000000e+00> : vector<16xf32>
    %11 = vector.multi_reduction <add>, %10, %cst_7 [1] : vector<16x128xf32> to vector<16xf32>
    %12 = vector.shape_cast %11 : vector<16xf32> to vector<16x1xf32>
    %cst_8 = arith.constant 1.280000e+02 : f32
    %13 = vector.broadcast %cst_8 : f32 to vector<16x1xf32>
    %14 = arith.divf %12, %13 : vector<16x1xf32>
    %15 = vector.broadcast %7 : vector<16x1xf32> to vector<16x128xf32>
    %16 = arith.subf %1, %15 : vector<16x128xf32>
    %cst_9 = arith.constant 9.99999974E-6 : f32
    %17 = vector.broadcast %cst_9 : f32 to vector<16x1xf32>
    %18 = arith.addf %14, %17 : vector<16x1xf32>
    %19 = math.rsqrt %18 : vector<16x1xf32>
    %20 = vector.broadcast %19 : vector<16x1xf32> to vector<16x128xf32>
    %21 = arith.mulf %16, %20 : vector<16x128xf32>
    %22 = vector.broadcast %2 : vector<1x128xf32> to vector<16x128xf32>
    %23 = arith.mulf %21, %22 : vector<16x128xf32>
    %24 = vector.broadcast %3 : vector<1x128xf32> to vector<16x128xf32>
    %25 = arith.addf %23, %24 : vector<16x128xf32>
    %26 = arith.truncf %25 : vector<16x128xf32> to vector<16x128xbf16>
    %c0_10 = arith.constant 0 : index
    %c0_11 = arith.constant 0 : index
    %27 = vector.load %arg4[%c0_10, %c0_11] : memref<128x384xbf16, #tpu.memory_space<vmem>>, vector<128x384xbf16>
    %cst_12 = arith.constant dense<0.000000e+00> : vector<16x384xf32>
    %28 = tpu.matmul %26, %27, %cst_12 {dimension_numbers = #tpu.dot_dimension_numbers<[1], [0], [0], [1], [0, 0, 1, 1], [], []>} : vector<16x128xbf16>, vector<128x384xbf16>, vector<16x384xf32> -> vector<16x384xf32>
    %29 = vector.extract_strided_slice %28 {offsets = [0, 0], sizes = [16, 128], strides = [1, 1]} : vector<16x384xf32> to vector<16x128xf32>
    %cst_13 = arith.constant 0.176776692 : f32
    %30 = vector.broadcast %cst_13 : f32 to vector<16x128xf32>
    %31 = arith.mulf %29, %30 : vector<16x128xf32>
    %32 = arith.truncf %31 : vector<16x128xf32> to vector<16x128xbf16>
    %33 = vector.extract_strided_slice %28 {offsets = [0, 128], sizes = [16, 128], strides = [1, 1]} : vector<16x384xf32> to vector<16x128xf32>
    %34 = arith.truncf %33 : vector<16x128xf32> to vector<16x128xbf16>
    %35 = vector.extract_strided_slice %28 {offsets = [0, 256], sizes = [16, 128], strides = [1, 1]} : vector<16x384xf32> to vector<16x128xf32>
    %36 = arith.truncf %35 : vector<16x128xf32> to vector<16x128xbf16>
    %37 = vector.extract_strided_slice %32 {offsets = [0, 0], sizes = [16, 32], strides = [1, 1]} : vector<16x128xbf16> to vector<16x32xbf16>
    %38 = vector.extract_strided_slice %34 {offsets = [0, 0], sizes = [16, 32], strides = [1, 1]} : vector<16x128xbf16> to vector<16x32xbf16>
    %cst_14 = arith.constant dense<0.000000e+00> : vector<16x16xf32>
    %39 = tpu.matmul %37, %38, %cst_14 {dimension_numbers = #tpu.dot_dimension_numbers<[1], [1], [0], [0], [0, 0, 1, 0], [], []>} : vector<16x32xbf16>, vector<16x32xbf16>, vector<16x16xf32> -> vector<16x16xf32>
    %cst_15 = arith.constant dense<0xFF800000> : vector<16xf32>
    %40 = vector.multi_reduction <maximumf>, %39, %cst_15 [1] : vector<16x16xf32> to vector<16xf32>
    %41 = vector.shape_cast %40 : vector<16xf32> to vector<16x1xf32>
    %42 = vector.broadcast %41 : vector<16x1xf32> to vector<16x16xf32>
    %43 = arith.subf %39, %42 : vector<16x16xf32>
    %44 = math.exp %43 : vector<16x16xf32>
    %cst_16 = arith.constant dense<0.000000e+00> : vector<16xf32>
    %45 = vector.multi_reduction <add>, %44, %cst_16 [1] : vector<16x16xf32> to vector<16xf32>
    %46 = vector.shape_cast %45 : vector<16xf32> to vector<16x1xf32>
    %47 = tpu.reciprocal %46 {approx = true} : vector<16x1xf32> -> vector<16x1xf32>
    %48 = vector.broadcast %47 : vector<16x1xf32> to vector<16x16xf32>
    %49 = arith.mulf %44, %48 : vector<16x16xf32>
    %cst_17 = arith.constant dense<0xFF800000> : vector<16xf32>
    %50 = vector.multi_reduction <maximumf>, %49, %cst_17 [1] : vector<16x16xf32> to vector<16xf32>
    %51 = vector.shape_cast %50 : vector<16xf32> to vector<16x1xf32>
    %52 = vector.broadcast %51 : vector<16x1xf32> to vector<16x16xf32>
    %53 = arith.subf %49, %52 : vector<16x16xf32>
    %54 = math.exp %53 : vector<16x16xf32>
    %cst_18 = arith.constant dense<0.000000e+00> : vector<16xf32>
    %55 = vector.multi_reduction <add>, %54, %cst_18 [1] : vector<16x16xf32> to vector<16xf32>
    %56 = vector.shape_cast %55 : vector<16xf32> to vector<16x1xf32>
    %57 = tpu.reciprocal %56 {approx = true} : vector<16x1xf32> -> vector<16x1xf32>
    %58 = vector.broadcast %57 : vector<16x1xf32> to vector<16x16xf32>
    %59 = arith.mulf %54, %58 : vector<16x16xf32>
    %60 = arith.truncf %59 : vector<16x16xf32> to vector<16x16xbf16>
    %61 = vector.extract_strided_slice %36 {offsets = [0, 0], sizes = [16, 32], strides = [1, 1]} : vector<16x128xbf16> to vector<16x32xbf16>
    %cst_19 = arith.constant dense<0.000000e+00> : vector<16x32xf32>
    %62 = tpu.matmul %60, %61, %cst_19 {dimension_numbers = #tpu.dot_dimension_numbers<[1], [0], [0], [1], [0, 0, 1, 1], [], []>} : vector<16x16xbf16>, vector<16x32xbf16>, vector<16x32xf32> -> vector<16x32xf32>
    %63 = vector.extract_strided_slice %32 {offsets = [0, 32], sizes = [16, 32], strides = [1, 1]} : vector<16x128xbf16> to vector<16x32xbf16>
    %64 = vector.extract_strided_slice %34 {offsets = [0, 32], sizes = [16, 32], strides = [1, 1]} : vector<16x128xbf16> to vector<16x32xbf16>
    %cst_20 = arith.constant dense<0.000000e+00> : vector<16x16xf32>
    %65 = tpu.matmul %63, %64, %cst_20 {dimension_numbers = #tpu.dot_dimension_numbers<[1], [1], [0], [0], [0, 0, 1, 0], [], []>} : vector<16x32xbf16>, vector<16x32xbf16>, vector<16x16xf32> -> vector<16x16xf32>
    %cst_21 = arith.constant dense<0xFF800000> : vector<16xf32>
    %66 = vector.multi_reduction <maximumf>, %65, %cst_21 [1] : vector<16x16xf32> to vector<16xf32>
    %67 = vector.shape_cast %66 : vector<16xf32> to vector<16x1xf32>
    %68 = vector.broadcast %67 : vector<16x1xf32> to vector<16x16xf32>
    %69 = arith.subf %65, %68 : vector<16x16xf32>
    %70 = math.exp %69 : vector<16x16xf32>
    %cst_22 = arith.constant dense<0.000000e+00> : vector<16xf32>
    %71 = vector.multi_reduction <add>, %70, %cst_22 [1] : vector<16x16xf32> to vector<16xf32>
    %72 = vector.shape_cast %71 : vector<16xf32> to vector<16x1xf32>
    %73 = tpu.reciprocal %72 {approx = true} : vector<16x1xf32> -> vector<16x1xf32>
    %74 = vector.broadcast %73 : vector<16x1xf32> to vector<16x16xf32>
    %75 = arith.mulf %70, %74 : vector<16x16xf32>
    %cst_23 = arith.constant dense<0xFF800000> : vector<16xf32>
    %76 = vector.multi_reduction <maximumf>, %75, %cst_23 [1] : vector<16x16xf32> to vector<16xf32>
    %77 = vector.shape_cast %76 : vector<16xf32> to vector<16x1xf32>
    %78 = vector.broadcast %77 : vector<16x1xf32> to vector<16x16xf32>
    %79 = arith.subf %75, %78 : vector<16x16xf32>
    %80 = math.exp %79 : vector<16x16xf32>
    %cst_24 = arith.constant dense<0.000000e+00> : vector<16xf32>
    %81 = vector.multi_reduction <add>, %80, %cst_24 [1] : vector<16x16xf32> to vector<16xf32>
    %82 = vector.shape_cast %81 : vector<16xf32> to vector<16x1xf32>
    %83 = tpu.reciprocal %82 {approx = true} : vector<16x1xf32> -> vector<16x1xf32>
    %84 = vector.broadcast %83 : vector<16x1xf32> to vector<16x16xf32>
    %85 = arith.mulf %80, %84 : vector<16x16xf32>
    %86 = arith.truncf %85 : vector<16x16xf32> to vector<16x16xbf16>
    %87 = vector.extract_strided_slice %36 {offsets = [0, 32], sizes = [16, 32], strides = [1, 1]} : vector<16x128xbf16> to vector<16x32xbf16>
    %cst_25 = arith.constant dense<0.000000e+00> : vector<16x32xf32>
    %88 = tpu.matmul %86, %87, %cst_25 {dimension_numbers = #tpu.dot_dimension_numbers<[1], [0], [0], [1], [0, 0, 1, 1], [], []>} : vector<16x16xbf16>, vector<16x32xbf16>, vector<16x32xf32> -> vector<16x32xf32>
    %89 = vector.extract_strided_slice %32 {offsets = [0, 64], sizes = [16, 32], strides = [1, 1]} : vector<16x128xbf16> to vector<16x32xbf16>
    %90 = vector.extract_strided_slice %34 {offsets = [0, 64], sizes = [16, 32], strides = [1, 1]} : vector<16x128xbf16> to vector<16x32xbf16>
    %cst_26 = arith.constant dense<0.000000e+00> : vector<16x16xf32>
    %91 = tpu.matmul %89, %90, %cst_26 {dimension_numbers = #tpu.dot_dimension_numbers<[1], [1], [0], [0], [0, 0, 1, 0], [], []>} : vector<16x32xbf16>, vector<16x32xbf16>, vector<16x16xf32> -> vector<16x16xf32>
    %cst_27 = arith.constant dense<0xFF800000> : vector<16xf32>
    %92 = vector.multi_reduction <maximumf>, %91, %cst_27 [1] : vector<16x16xf32> to vector<16xf32>
    %93 = vector.shape_cast %92 : vector<16xf32> to vector<16x1xf32>
    %94 = vector.broadcast %93 : vector<16x1xf32> to vector<16x16xf32>
    %95 = arith.subf %91, %94 : vector<16x16xf32>
    %96 = math.exp %95 : vector<16x16xf32>
    %cst_28 = arith.constant dense<0.000000e+00> : vector<16xf32>
    %97 = vector.multi_reduction <add>, %96, %cst_28 [1] : vector<16x16xf32> to vector<16xf32>
    %98 = vector.shape_cast %97 : vector<16xf32> to vector<16x1xf32>
    %99 = tpu.reciprocal %98 {approx = true} : vector<16x1xf32> -> vector<16x1xf32>
    %100 = vector.broadcast %99 : vector<16x1xf32> to vector<16x16xf32>
    %101 = arith.mulf %96, %100 : vector<16x16xf32>
    %cst_29 = arith.constant dense<0xFF800000> : vector<16xf32>
    %102 = vector.multi_reduction <maximumf>, %101, %cst_29 [1] : vector<16x16xf32> to vector<16xf32>
    %103 = vector.shape_cast %102 : vector<16xf32> to vector<16x1xf32>
    %104 = vector.broadcast %103 : vector<16x1xf32> to vector<16x16xf32>
    %105 = arith.subf %101, %104 : vector<16x16xf32>
    %106 = math.exp %105 : vector<16x16xf32>
    %cst_30 = arith.constant dense<0.000000e+00> : vector<16xf32>
    %107 = vector.multi_reduction <add>, %106, %cst_30 [1] : vector<16x16xf32> to vector<16xf32>
    %108 = vector.shape_cast %107 : vector<16xf32> to vector<16x1xf32>
    %109 = tpu.reciprocal %108 {approx = true} : vector<16x1xf32> -> vector<16x1xf32>
    %110 = vector.broadcast %109 : vector<16x1xf32> to vector<16x16xf32>
    %111 = arith.mulf %106, %110 : vector<16x16xf32>
    %112 = arith.truncf %111 : vector<16x16xf32> to vector<16x16xbf16>
    %113 = vector.extract_strided_slice %36 {offsets = [0, 64], sizes = [16, 32], strides = [1, 1]} : vector<16x128xbf16> to vector<16x32xbf16>
    %cst_31 = arith.constant dense<0.000000e+00> : vector<16x32xf32>
    %114 = tpu.matmul %112, %113, %cst_31 {dimension_numbers = #tpu.dot_dimension_numbers<[1], [0], [0], [1], [0, 0, 1, 1], [], []>} : vector<16x16xbf16>, vector<16x32xbf16>, vector<16x32xf32> -> vector<16x32xf32>
    %115 = vector.extract_strided_slice %32 {offsets = [0, 96], sizes = [16, 32], strides = [1, 1]} : vector<16x128xbf16> to vector<16x32xbf16>
    %116 = vector.extract_strided_slice %34 {offsets = [0, 96], sizes = [16, 32], strides = [1, 1]} : vector<16x128xbf16> to vector<16x32xbf16>
    %cst_32 = arith.constant dense<0.000000e+00> : vector<16x16xf32>
    %117 = tpu.matmul %115, %116, %cst_32 {dimension_numbers = #tpu.dot_dimension_numbers<[1], [1], [0], [0], [0, 0, 1, 0], [], []>} : vector<16x32xbf16>, vector<16x32xbf16>, vector<16x16xf32> -> vector<16x16xf32>
    %cst_33 = arith.constant dense<0xFF800000> : vector<16xf32>
    %118 = vector.multi_reduction <maximumf>, %117, %cst_33 [1] : vector<16x16xf32> to vector<16xf32>
    %119 = vector.shape_cast %118 : vector<16xf32> to vector<16x1xf32>
    %120 = vector.broadcast %119 : vector<16x1xf32> to vector<16x16xf32>
    %121 = arith.subf %117, %120 : vector<16x16xf32>
    %122 = math.exp %121 : vector<16x16xf32>
    %cst_34 = arith.constant dense<0.000000e+00> : vector<16xf32>
    %123 = vector.multi_reduction <add>, %122, %cst_34 [1] : vector<16x16xf32> to vector<16xf32>
    %124 = vector.shape_cast %123 : vector<16xf32> to vector<16x1xf32>
    %125 = tpu.reciprocal %124 {approx = true} : vector<16x1xf32> -> vector<16x1xf32>
    %126 = vector.broadcast %125 : vector<16x1xf32> to vector<16x16xf32>
    %127 = arith.mulf %122, %126 : vector<16x16xf32>
    %cst_35 = arith.constant dense<0xFF800000> : vector<16xf32>
    %128 = vector.multi_reduction <maximumf>, %127, %cst_35 [1] : vector<16x16xf32> to vector<16xf32>
    %129 = vector.shape_cast %128 : vector<16xf32> to vector<16x1xf32>
    %130 = vector.broadcast %129 : vector<16x1xf32> to vector<16x16xf32>
    %131 = arith.subf %127, %130 : vector<16x16xf32>
    %132 = math.exp %131 : vector<16x16xf32>
    %cst_36 = arith.constant dense<0.000000e+00> : vector<16xf32>
    %133 = vector.multi_reduction <add>, %132, %cst_36 [1] : vector<16x16xf32> to vector<16xf32>
    %134 = vector.shape_cast %133 : vector<16xf32> to vector<16x1xf32>
    %135 = tpu.reciprocal %134 {approx = true} : vector<16x1xf32> -> vector<16x1xf32>
    %136 = vector.broadcast %135 : vector<16x1xf32> to vector<16x16xf32>
    %137 = arith.mulf %132, %136 : vector<16x16xf32>
    %138 = arith.truncf %137 : vector<16x16xf32> to vector<16x16xbf16>
    %139 = vector.extract_strided_slice %36 {offsets = [0, 96], sizes = [16, 32], strides = [1, 1]} : vector<16x128xbf16> to vector<16x32xbf16>
    %cst_37 = arith.constant dense<0.000000e+00> : vector<16x32xf32>
    %140 = tpu.matmul %138, %139, %cst_37 {dimension_numbers = #tpu.dot_dimension_numbers<[1], [0], [0], [1], [0, 0, 1, 1], [], []>} : vector<16x16xbf16>, vector<16x32xbf16>, vector<16x32xf32> -> vector<16x32xf32>
    %141 = tpu.concatenate %62, %88, %114, %140 in 1 : vector<16x32xf32>, vector<16x32xf32>, vector<16x32xf32>, vector<16x32xf32> -> vector<16x128xf32>
    %142 = arith.truncf %141 : vector<16x128xf32> to vector<16x128xbf16>
    %c0_38 = arith.constant 0 : index
    %c0_39 = arith.constant 0 : index
    %143 = vector.load %arg5[%c0_38, %c0_39] : memref<128x128xbf16, #tpu.memory_space<vmem>>, vector<128x128xbf16>
    %cst_40 = arith.constant dense<0.000000e+00> : vector<16x128xf32>
    %144 = tpu.matmul %142, %143, %cst_40 {dimension_numbers = #tpu.dot_dimension_numbers<[1], [0], [0], [1], [0, 0, 1, 1], [], []>} : vector<16x128xbf16>, vector<128x128xbf16>, vector<16x128xf32> -> vector<16x128xf32>
    %c0_41 = arith.constant 0 : index
    %c0_42 = arith.constant 0 : index
    %145 = vector.load %arg6[%c0_41, %c0_42] : memref<1x128xf32, #tpu.memory_space<vmem>>, vector<1x128xf32>
    %146 = vector.broadcast %145 : vector<1x128xf32> to vector<16x128xf32>
    %147 = arith.addf %144, %146 : vector<16x128xf32>
    %148 = arith.addf %1, %147 : vector<16x128xf32>
    %c0_43 = arith.constant 0 : index
    %c0_44 = arith.constant 0 : index
    %c0_45 = arith.constant 0 : index
    %149 = vector.load %arg7[%c0_43, %c0_44, %c0_45] : memref<1x16x128xf32, #tpu.memory_space<vmem>>, vector<1x16x128xf32>
    %150 = vector.shape_cast %149 : vector<1x16x128xf32> to vector<16x128xf32>
    %151 = vector.shape_cast %148 : vector<16x128xf32> to vector<1x16x128xf32>
    tpu.vector_store %arg7[%c0_43, %c0_44, %c0_45], %151 {strides = array<i32>} : memref<1x16x128xf32, #tpu.memory_space<vmem>>, vector<1x16x128xf32>,
    return
  }
  func.func @transform_0(%arg0: i32) -> (i32, i32, i32) {
    %c0_i32 = arith.constant 0 : i32
    %c0_i32_0 = arith.constant 0 : i32
    %c0_i32_1 = arith.constant 0 : i32
    return %arg0, %c0_i32, %c0_i32_0 : i32, i32, i32
  }
  func.func @transform_1(%arg0: i32) -> (i32, i32) {
    %c0_i32 = arith.constant 0 : i32
    %c0_i32_0 = arith.constant 0 : i32
    %c0_i32_1 = arith.constant 0 : i32
    return %c0_i32, %c0_i32_0 : i32, i32
  }
  func.func @transform_2(%arg0: i32) -> (i32, i32) {
    %c0_i32 = arith.constant 0 : i32
    %c0_i32_0 = arith.constant 0 : i32
    %c0_i32_1 = arith.constant 0 : i32
    return %c0_i32, %c0_i32_0 : i32, i32
  }
  func.func @transform_3(%arg0: i32) -> (i32, i32) {
    %c0_i32 = arith.constant 0 : i32
    %c0_i32_0 = arith.constant 0 : i32
    %c0_i32_1 = arith.constant 0 : i32
    return %c0_i32, %c0_i32_0 : i32, i32
  }
  func.func @transform_4(%arg0: i32) -> (i32, i32) {
    %c0_i32 = arith.constant 0 : i32
    %c0_i32_0 = arith.constant 0 : i32
    %c0_i32_1 = arith.constant 0 : i32
    return %c0_i32, %c0_i32_0 : i32, i32
  }
  func.func @transform_5(%arg0: i32) -> (i32, i32) {
    %c0_i32 = arith.constant 0 : i32
    %c0_i32_0 = arith.constant 0 : i32
    %c0_i32_1 = arith.constant 0 : i32
    return %c0_i32, %c0_i32_0 : i32, i32
  }
  func.func @transform_6(%arg0: i32) -> (i32, i32, i32) {
    %c0_i32 = arith.constant 0 : i32
    %c0_i32_0 = arith.constant 0 : i32
    %c0_i32_1 = arith.constant 0 : i32
    return %arg0, %c0_i32, %c0_i32_0 : i32, i32, i32
  }
}

</mosaic_0001>

<llo_original>
// kernel: transformer_forward.5
$region0: #{transformer_forward.5}
  #allocation0 [shape = 'u32[]', space=smem, size = 0x4, offset = 0x4, fixed_abs, tag = 'smem constant byte address 0x4 - core index']
  #allocation1 [shape = 'u32[144,128]{1,0:T(1,128)}', space=vmem, size = 0x12000, scoped, tag = 'internal scratch']
  %s0 = inlined_call_operand.vmem [shape: f32[32,128], index: 0, kind: input, shape index: {}]
  %s1 = inlined_call_operand.vmem [shape: f32[1,128], index: 1, kind: input, shape index: {}]
  %s2 = inlined_call_operand.vmem [shape: f32[1,128], index: 2, kind: input, shape index: {}]
  %s3 = inlined_call_operand.vmem [shape: bf16[128,256], index: 3, kind: input, shape index: {}]
  %s4 = inlined_call_operand.vmem [shape: f32[1,256], index: 4, kind: input, shape index: {}]
  %s5 = inlined_call_operand.vmem [shape: bf16[256,128], index: 5, kind: input, shape index: {}]
  %s6 = inlined_call_operand.vmem [shape: f32[1,128], index: 6, kind: input, shape index: {}]
  %s7 = inlined_call_operand.vmem [shape: f32[32,128], index: 7, kind: output, shape index: {}]
  %s8 = sld [smem:[#allocation0]]
  $region61: #{transformer_forward.5} parent=0
    _
  %s10 = ssub.s32 1, %s8
  %s11 = scalar_select 0, %s10, %s8
  loop: start=0, step=1, limit=4
  $region2: #{transformer_forward.5} parent=0 // loop_pre_header
    _
  $region3: #{transformer_forward.5} parent=0 // loop_header
    %s13 = sphi 0, %s17
    %p14 = scmp.ge.s32.totalorder %s13, 4
    %s23 = sphi 0, %s25
    %s26 = sphi 0, %s23
    %s27 = sphi 0, %s26
    %s43 = sphi 0, %s27
    %s47 = sphi 0, %s47
    %s49 = sphi 0, %s47
    %s50 = sphi 0, %s49
    %s64 = sphi 0, %s50
    %s68 = sphi 0, %s68
    %s70 = sphi 0, %s68
    %s71 = sphi 0, %s70
    %s85 = sphi 0, %s71
    %s89 = sphi 0, %s89
    %s91 = sphi 0, %s89
    %s92 = sphi 0, %s91
    %s106 = sphi 0, %s92
    %s110 = sphi 0, %s110
    %s112 = sphi 0, %s110
    %s113 = sphi 0, %s112
    %s127 = sphi 0, %s113
    %s131 = sphi 0, %s131
    %s133 = sphi 0, %s131
    %s134 = sphi 0, %s133
    %s148 = sphi 0, %s134
    %s152 = sphi 0, %s152
    %s154 = sphi 0, %s152
    %s155 = sphi 0, %s154
    %s169 = sphi 0, %s155
    %s175 = sphi 0, %s177
    %s178 = sphi 0, %s175
    %s179 = sphi 0, %s178
    %s195 = sphi 0, %s179
  $region4: #{transformer_forward.5} parent=0 // loop_header_branch
    %16 = sbr.rel (%p14) target = $region8
  $region5: #{transformer_forward.5} parent=0 // loop_body
    %s18 = ssub.s32 %s13, 1
    %s19 = ssub.s32 %s13, 2
    %s20 = sadd.s32 %s13, 1
    %s21 = ssub.s32 %s13, %s20
    %p22 = scmp.eq.s32.totalorder %s21, 0
    %s24 = sadd.s32 %s23, 1
    %s25 = scalar_select %p22, %s23, %s24
    %p28 = pneg %p22
    %p29 = scmp.eq.s32.totalorder %s13, 1
    %p30 = por %p28, %p29
    %p31 = scmp.ne.s32.totalorder %s23, %s26
    %p32 = scmp.eq.s32.totalorder %s13, 0
    %p33 = por %p31, %p32
    %p34 = scmp.ne.s32.totalorder %s23, %s26
    %p35 = scmp.eq.s32.totalorder %s18, 1
    %p36 = por %p34, %p35
    %p37 = scmp.ne.s32.totalorder %s26, %s27
    %p38 = scmp.eq.s32.totalorder %s18, 0
    %p39 = por %p37, %p38
    %p40 = scmp.ne.s32.totalorder %s26, %s27
    %p41 = scmp.eq.s32.totalorder %s19, 1
    %p42 = por %p40, %p41
    %p44 = scmp.ne.s32.totalorder %s27, %s43
    %p45 = scmp.eq.s32.totalorder %s19, 0
    %p46 = por %p44, %p45
    %s48 = sadd.s32 %s47, 1
    %p51 = scmp.eq.s32.totalorder %s13, 1
    %p52 = scmp.ne.s32.totalorder %s47, %s49
    %p53 = scmp.eq.s32.totalorder %s13, 0
    %p54 = por %p52, %p53
    %p55 = scmp.ne.s32.totalorder %s47, %s49
    %p56 = scmp.eq.s32.totalorder %s18, 1
    %p57 = por %p55, %p56
    %p58 = scmp.ne.s32.totalorder %s49, %s50
    %p59 = scmp.eq.s32.totalorder %s18, 0
    %p60 = por %p58, %p59
    %p61 = scmp.ne.s32.totalorder %s49, %s50
    %p62 = scmp.eq.s32.totalorder %s19, 1
    %p63 = por %p61, %p62
    %p65 = scmp.ne.s32.totalorder %s50, %s64
    %p66 = scmp.eq.s32.totalorder %s19, 0
    %p67 = por %p65, %p66
    %s69 = sadd.s32 %s68, 1
    %p72 = scmp.eq.s32.totalorder %s13, 1
    %p73 = scmp.ne.s32.totalorder %s68, %s70
    %p74 = scmp.eq.s32.totalorder %s13, 0
    %p75 = por %p73, %p74
    %p76 = scmp.ne.s32.totalorder %s68, %s70
    %p77 = scmp.eq.s32.totalorder %s18, 1
    %p78 = por %p76, %p77
    %p79 = scmp.ne.s32.totalorder %s70, %s71
    %p80 = scmp.eq.s32.totalorder %s18, 0
    %p81 = por %p79, %p80
    %p82 = scmp.ne.s32.totalorder %s70, %s71
    %p83 = scmp.eq.s32.totalorder %s19, 1
    %p84 = por %p82, %p83
    %p86 = scmp.ne.s32.totalorder %s71, %s85
    %p87 = scmp.eq.s32.totalorder %s19, 0
    %p88 = por %p86, %p87
    %s90 = sadd.s32 %s89, 1
    %p93 = scmp.eq.s32.totalorder %s13, 1
    %p94 = scmp.ne.s32.totalorder %s89, %s91
    %p95 = scmp.eq.s32.totalorder %s13, 0
    %p96 = por %p94, %p95
    %p97 = scmp.ne.s32.totalorder %s89, %s91
    %p98 = scmp.eq.s32.totalorder %s18, 1
    %p99 = por %p97, %p98
    %p100 = scmp.ne.s32.totalorder %s91, %s92
    %p101 = scmp.eq.s32.totalorder %s18, 0
    %p102 = por %p100, %p101
    %p103 = scmp.ne.s32.totalorder %s91, %s92
    %p104 = scmp.eq.s32.totalorder %s19, 1
    %p105 = por %p103, %p104
    %p107 = scmp.ne.s32.totalorder %s92, %s106
    %p108 = scmp.eq.s32.totalorder %s19, 0
    %p109 = por %p107, %p108
    %s111 = sadd.s32 %s110, 1
    %p114 = scmp.eq.s32.totalorder %s13, 1
    %p115 = scmp.ne.s32.totalorder %s110, %s112
    %p116 = scmp.eq.s32.totalorder %s13, 0
    %p117 = por %p115, %p116
    %p118 = scmp.ne.s32.totalorder %s110, %s112
    %p119 = scmp.eq.s32.totalorder %s18, 1
    %p120 = por %p118, %p119
    %p121 = scmp.ne.s32.totalorder %s112, %s113
    %p122 = scmp.eq.s32.totalorder %s18, 0
    %p123 = por %p121, %p122
    %p124 = scmp.ne.s32.totalorder %s112, %s113
    %p125 = scmp.eq.s32.totalorder %s19, 1
    %p126 = por %p124, %p125
    %p128 = scmp.ne.s32.totalorder %s113, %s127
    %p129 = scmp.eq.s32.totalorder %s19, 0
    %p130 = por %p128, %p129
    %s132 = sadd.s32 %s131, 1
    %p135 = scmp.eq.s32.totalorder %s13, 1
    %p136 = scmp.ne.s32.totalorder %s131, %s133
    %p137 = scmp.eq.s32.totalorder %s13, 0
    %p138 = por %p136, %p137
    %p139 = scmp.ne.s32.totalorder %s131, %s133
    %p140 = scmp.eq.s32.totalorder %s18, 1
    %p141 = por %p139, %p140
    %p142 = scmp.ne.s32.totalorder %s133, %s134
    %p143 = scmp.eq.s32.totalorder %s18, 0
    %p144 = por %p142, %p143
    %p145 = scmp.ne.s32.totalorder %s133, %s134
    %p146 = scmp.eq.s32.totalorder %s19, 1
    %p147 = por %p145, %p146
    %p149 = scmp.ne.s32.totalorder %s134, %s148
    %p150 = scmp.eq.s32.totalorder %s19, 0
    %p151 = por %p149, %p150
    %s153 = sadd.s32 %s152, 1
    %p156 = scmp.eq.s32.totalorder %s13, 1
    %p157 = scmp.ne.s32.totalorder %s152, %s154
    %p158 = scmp.eq.s32.totalorder %s13, 0
    %p159 = por %p157, %p158
    %p160 = scmp.ne.s32.totalorder %s152, %s154
    %p161 = scmp.eq.s32.totalorder %s18, 1
    %p162 = por %p160, %p161
    %p163 = scmp.ne.s32.totalorder %s154, %s155
    %p164 = scmp.eq.s32.totalorder %s18, 0
    %p165 = por %p163, %p164
    %p166 = scmp.ne.s32.totalorder %s154, %s155
    %p167 = scmp.eq.s32.totalorder %s19, 1
    %p168 = por %p166, %p167
    %p170 = scmp.ne.s32.totalorder %s155, %s169
    %p171 = scmp.eq.s32.totalorder %s19, 0
    %p172 = por %p170, %p171
    %s173 = ssub.s32 %s13, %s20
    %p174 = scmp.eq.s32.totalorder %s173, 0
    %s176 = sadd.s32 %s175, 1
    %s177 = scalar_select %p174, %s175, %s176
    %p180 = pneg %p174
    %p181 = scmp.eq.s32.totalorder %s13, 1
    %p182 = por %p180, %p181
    %p183 = scmp.ne.s32.totalorder %s175, %s178
    %p184 = scmp.eq.s32.totalorder %s13, 0
    %p185 = por %p183, %p184
    %p186 = scmp.ne.s32.totalorder %s175, %s178
    %p187 = scmp.eq.s32.totalorder %s18, 1
    %p188 = por %p186, %p187
    %p189 = scmp.ne.s32.totalorder %s178, %s179
    %p190 = scmp.eq.s32.totalorder %s18, 0
    %p191 = por %p189, %p190
    %p192 = scmp.ne.s32.totalorder %s178, %s179
    %p193 = scmp.eq.s32.totalorder %s19, 1
    %p194 = por %p192, %p193
    %p196 = scmp.ne.s32.totalorder %s179, %s195
    %p197 = scmp.eq.s32.totalorder %s19, 0
    %p198 = por %p196, %p197
    %p199 = scmp.le.s32.totalorder 1, %s13
    %p200 = scmp.lt.s32.totalorder %s13, 3
    %p201 = pnand %p199, %p200
    %p202 = pneg %p201
    // Predicated region
    $region9: #{transformer_forward.5} parent=5 // pred_check
      _
    $region10: #{transformer_forward.5} parent=5 // pred_check_branch
      %204 = sbr.rel (%p201) target = $region12
    $region11: #{transformer_forward.5} parent=5 // pred_region
      %s205 = ssub.s32 %s13, 1
      // Predicated region
      $region13: #{transformer_forward.5} parent=11 // pred_check
        %p206 = pneg %p60
      $region14: #{transformer_forward.5} parent=11 // pred_check_branch
        %208 = sbr.rel (%p206) target = $region16
      $region15: #{transformer_forward.5} parent=11 // pred_region
        _
      $region16: #{transformer_forward.5} parent=11 // pred_fallthru
        _
      // Predicated region
      $region17: #{transformer_forward.5} parent=11 // pred_check
        %p209 = pneg %p81
      $region18: #{transformer_forward.5} parent=11 // pred_check_branch
        %211 = sbr.rel (%p209) target = $region20
      $region19: #{transformer_forward.5} parent=11 // pred_region
        _
      $region20: #{transformer_forward.5} parent=11 // pred_fallthru
        _
      // Predicated region
      $region21: #{transformer_forward.5} parent=11 // pred_check
        %p212 = pneg %p102
      $region22: #{transformer_forward.5} parent=11 // pred_check_branch
        %214 = sbr.rel (%p212) target = $region24
      $region23: #{transformer_forward.5} parent=11 // pred_region
        _
      $region24: #{transformer_forward.5} parent=11 // pred_fallthru
        _
      // Predicated region
      $region25: #{transformer_forward.5} parent=11 // pred_check
        %p215 = pneg %p123
      $region26: #{transformer_forward.5} parent=11 // pred_check_branch
        %217 = sbr.rel (%p215) target = $region28
      $region27: #{transformer_forward.5} parent=11 // pred_region
        _
      $region28: #{transformer_forward.5} parent=11 // pred_fallthru
        _
      // Predicated region
      $region29: #{transformer_forward.5} parent=11 // pred_check
        %p218 = pneg %p144
      $region30: #{transformer_forward.5} parent=11 // pred_check_branch
        %220 = sbr.rel (%p218) target = $region32
      $region31: #{transformer_forward.5} parent=11 // pred_region
        _
      $region32: #{transformer_forward.5} parent=11 // pred_fallthru
        _
      // Predicated region
      $region33: #{transformer_forward.5} parent=11 // pred_check
        %p221 = pneg %p165
      $region34: #{transformer_forward.5} parent=11 // pred_check_branch
        %223 = sbr.rel (%p221) target = $region36
      $region35: #{transformer_forward.5} parent=11 // pred_region
        _
      $region36: #{transformer_forward.5} parent=11 // pred_fallthru
        _
    $region12: #{transformer_forward.5} parent=5 // pred_fallthru
      _
    %p224 = scmp.lt.s32.totalorder %s13, 2
    // Predicated region
    $region37: #{transformer_forward.5} parent=5 // pred_check
      %p225 = pneg %p224
    $region38: #{transformer_forward.5} parent=5 // pred_check_branch
      %227 = sbr.rel (%p225) target = $region40
    $region39: #{transformer_forward.5} parent=5 // pred_region
      // Predicated region
      $region41: #{transformer_forward.5} parent=39 // pred_check
        %p228 = pneg %p33
      $region42: #{transformer_forward.5} parent=39 // pred_check_branch
        %230 = sbr.rel (%p228) target = $region44
      $region43: #{transformer_forward.5} parent=39 // pred_region
        %s231 = smul.u32 2, %s13
        %p232 = scmp.lt.s32.totalorder %s231, 3
        %s233 = scalar_select %p232, %s231, 3
        %s234 = smul.addr %s233, 8
        %s235 = scalar_lea.vmem %s0, %s234
        %s236 = smul.u32 2, %s13
      $region44: #{transformer_forward.5} parent=39 // pred_fallthru
        _
    $region40: #{transformer_forward.5} parent=5 // pred_fallthru
      _
    %p237 = scmp.le.s32.totalorder 1, %s13
    %p238 = scmp.lt.s32.totalorder %s13, 3
    %p239 = pnand %p237, %p238
    %p240 = pneg %p239
    // Predicated region
    $region45: #{transformer_forward.5} parent=5 // pred_check
      _
    $region46: #{transformer_forward.5} parent=5 // pred_check_branch
      %242 = sbr.rel (%p239) target = $region48
    $region47: #{transformer_forward.5} parent=5 // pred_region
      %s243 = ssub.s32 %s13, 1
      %s244 = smul.u32 2, %s18
      %p245 = scmp.lt.s32.totalorder %s244, 3
      %s246 = scalar_select %p245, %s244, 3
      %s247 = smul.addr %s246, 8
      %s248 = scalar_lea.vmem %s0, %s247
      %p249 = pneg %p39
      %p250 = pneg %p36
      %p251 = pneg %p60
      %p252 = pneg %p57
      %p253 = pneg %p81
      %p254 = pneg %p78
      %p255 = pneg %p102
      %p256 = pneg %p99
      %p257 = pneg %p123
      %p258 = pneg %p120
      %p259 = pneg %p144
      %p260 = pneg %p141
      %p261 = pneg %p165
      %p262 = pneg %p162
      %p263 = pneg %p191
      %p264 = pneg %p188
      %s265 = smul.u32 2, %s18
      %p266 = scmp.lt.s32.totalorder %s265, 3
      %s267 = scalar_select %p266, %s265, 3
      %s268 = smul.addr %s267, 8
      %s269 = scalar_lea.vmem %s7, %s268
      %s270 = smul.u32 2, %s18
      %p271 = scmp.lt.s32.totalorder %s270, 3
      %s272 = scalar_select %p271, %s270, 3
      %s273 = smul.addr %s272, 8
      %s274 = scalar_lea.vmem %s0, %s273
      %s275 = smul.u32 2, %s18
      %s276 = smul.u32 2, %s18
      %p277 = scmp.lt.s32.totalorder %s276, 3
      %s278 = scalar_select %p277, %s276, 3
      %s279 = smul.addr %s278, 8
      %s280 = scalar_lea.vmem %s7, %s279
      %s281 = smul.u32 2, %s18
      %v283 = vld [vmem:[%s274] sm:$0xff]
      %v284 = vld [vmem:[%s274 + $0x8] sm:$0xff]
      %v285 = vld [vmem:[%s1] sm:$0x1]
      %v286 = vld [vmem:[%s2] sm:$0x1]
      %287 = vadd.xlane.f32.xlu0 %v283
      %v288 = vpop.xlane.xlu0 %287
      %289 = vadd.xlane.f32.xlu0 %v284
      %v290 = vpop.xlane.xlu0 %289
      %v291 = vrcp.pop 128.0
      %v292 = vmul.f32 %v288, %v291
      %v293 = vmul.f32 %v290, %v291
      %v294 = vsub.f32 %v283, %v292
      %v295 = vsub.f32 %v284, %v293
      %v296 = vmul.f32 %v294, %v294
      %v297 = vmul.f32 %v295, %v295
      %298 = vadd.xlane.f32.xlu0 %v296
      %v299 = vpop.xlane.xlu0 %298
      %300 = vadd.xlane.f32.xlu0 %v297
      %v301 = vpop.xlane.xlu0 %300
      %v302 = vmul.f32 %v299, %v291
      %v303 = vmul.f32 %v301, %v291
      %v304 = vadd.f32 %v302, 1e-05
      %v305 = vadd.f32 %v303, 1e-05
      %v306 = vrsqrt.pop %v304
      %v307 = vrsqrt.pop %v305
      %v308 = vmul.f32 %v294, %v306
      %v309 = vmul.f32 %v295, %v307
      %v311 = vlaneseq
      %v312 = vshrl.u32 %v311, 7
      %v313 = vsub.s32 0, %v312
      %v314 = vrot.slane %v285, %v313
      %v316 = vmul.f32 %v308, %v314
      %v317 = vmul.f32 %v309, %v314
      %v319 = vlaneseq
      %v320 = vshrl.u32 %v319, 7
      %v321 = vsub.s32 0, %v320
      %v322 = vrot.slane %v286, %v321
      %v324 = vadd.f32 %v316, %v322
      %v325 = vadd.f32 %v317, %v322
      %v326 = vpack.c.bf16 %v325, %v324
      %v327 = vld [vmem:[%s3] sm:$0xff]
      %v328 = vld [vmem:[%s3 + $0x8] sm:$0xff]
      %v329 = vld [vmem:[%s3 + $0x10] sm:$0xff]
      %v330 = vld [vmem:[%s3 + $0x18] sm:$0xff]
      %v331 = vld [vmem:[%s3 + $0x20] sm:$0xff]
      %v332 = vld [vmem:[%s3 + $0x28] sm:$0xff]
      %v333 = vld [vmem:[%s3 + $0x30] sm:$0xff]
      %v334 = vld [vmem:[%s3 + $0x38] sm:$0xff]
      %v335 = vld [vmem:[%s3 + $0x40] sm:$0xff]
      %v336 = vld [vmem:[%s3 + $0x48] sm:$0xff]
      %v337 = vld [vmem:[%s3 + $0x50] sm:$0xff]
      %v338 = vld [vmem:[%s3 + $0x58] sm:$0xff]
      %v339 = vld [vmem:[%s3 + $0x60] sm:$0xff]
      %v340 = vld [vmem:[%s3 + $0x68] sm:$0xff]
      %v341 = vld [vmem:[%s3 + $0x70] sm:$0xff]
      %v342 = vld [vmem:[%s3 + $0x78] sm:$0xff]
      %v343 = vld [vmem:[%s4] sm:$0x3]
      %v345 = vlaneseq
      %v346 = vshrl.u32 %v345, 7
      %v347 = vsub.s32 0, %v346
      %v348 = vrot.slane %v343, %v347
      %v349 = vlaneseq
      %v350 = vshrl.u32 %v349, 7
      %v351 = vsub.s32 1, %v350
      %v352 = vrot.slane %v343, %v351
      %v371 = vunpack.c.l.b16 %v327
      %v372 = vunpack.c.h.b16 %v327
      %v373 = vunpack.c.l.b16 %v328
      %v374 = vunpack.c.h.b16 %v328
      %v375 = vunpack.c.l.b16 %v329
      %v376 = vunpack.c.h.b16 %v329
      %v377 = vunpack.c.l.b16 %v330
      %v378 = vunpack.c.h.b16 %v330
      %v379 = vunpack.c.l.b16 %v331
      %v380 = vunpack.c.h.b16 %v331
      %v381 = vunpack.c.l.b16 %v332
      %v382 = vunpack.c.h.b16 %v332
      %v383 = vunpack.c.l.b16 %v333
      %v384 = vunpack.c.h.b16 %v333
      %v385 = vunpack.c.l.b16 %v334
      %v386 = vunpack.c.h.b16 %v334
      %v387 = vunpack.c.l.b16 %v335
      %v388 = vunpack.c.h.b16 %v335
      %v389 = vunpack.c.l.b16 %v336
      %v390 = vunpack.c.h.b16 %v336
      %v391 = vunpack.c.l.b16 %v337
      %v392 = vunpack.c.h.b16 %v337
      %v393 = vunpack.c.l.b16 %v338
      %v394 = vunpack.c.h.b16 %v338
      %v395 = vunpack.c.l.b16 %v339
      %v396 = vunpack.c.h.b16 %v339
      %v397 = vunpack.c.l.b16 %v340
      %v398 = vunpack.c.h.b16 %v340
      %v399 = vunpack.c.l.b16 %v341
      %v400 = vunpack.c.h.b16 %v341
      %v401 = vunpack.c.l.b16 %v342
      %v402 = vunpack.c.h.b16 %v342
      %v403 = vpack.c.b16 %v373, %v371
      %v404 = vpack.c.b16 %v374, %v372
      %v405 = vpack.c.b16 %v377, %v375
      %v406 = vpack.c.b16 %v378, %v376
      %v407 = vpack.c.b16 %v381, %v379
      %v408 = vpack.c.b16 %v382, %v380
      %v409 = vpack.c.b16 %v385, %v383
      %v410 = vpack.c.b16 %v386, %v384
      %v411 = vpack.c.b16 %v389, %v387
      %v412 = vpack.c.b16 %v390, %v388
      %v413 = vpack.c.b16 %v393, %v391
      %v414 = vpack.c.b16 %v394, %v392
      %v415 = vpack.c.b16 %v397, %v395
      %v416 = vpack.c.b16 %v398, %v396
      %v417 = vpack.c.b16 %v401, %v399
      %v418 = vpack.c.b16 %v402, %v400
      %435 = vmatprep.subr.bf16.mxu0 %v418
      %436 = vmatpush1.bf16.msra.mxu0 %v417
      %437 = vmatprep.subr.bf16.mxu0 %v416
      %438 = vmatpush1.bf16.msra.mxu0 %v415
      %439 = vmatprep.subr.bf16.mxu0 %v414
      %440 = vmatpush1.bf16.msra.mxu0 %v413
      %441 = vmatprep.subr.bf16.mxu0 %v412
      %442 = vmatpush1.bf16.msra.mxu0 %v411
      %443 = vmatprep.subr.bf16.mxu0 %v410
      %444 = vmatpush1.bf16.msra.mxu0 %v409
      %445 = vmatprep.subr.bf16.mxu0 %v408
      %446 = vmatpush1.bf16.msra.mxu0 %v407
      %447 = vmatprep.subr.bf16.mxu0 %v406
      %448 = vmatpush1.bf16.msra.mxu0 %v405
      %449 = vmatprep.subr.bf16.mxu0 %v404
      %450 = vmatpush1.bf16.msra.mxu0 %v403
      %451 = vmatprep.subr.bf16.mxu0 0
      %452 = vmatpush2.bf16.msra.mxu0 0
      %453 = vmatprep.subr.bf16.mxu0 0
      %454 = vmatpush2.bf16.msra.mxu0 0
      %455 = vmatprep.subr.bf16.mxu0 0
      %456 = vmatpush2.bf16.msra.mxu0 0
      %457 = vmatprep.subr.bf16.mxu0 0
      %458 = vmatpush2.bf16.msra.mxu0 0
      %459 = vmatprep.subr.bf16.mxu0 0
      %460 = vmatpush2.bf16.msra.mxu0 0
      %461 = vmatprep.subr.bf16.mxu0 0
      %462 = vmatpush2.bf16.msra.mxu0 0
      %463 = vmatprep.subr.bf16.mxu0 0
      %464 = vmatpush2.bf16.msra.mxu0 0
      %465 = vmatprep.subr.bf16.mxu0 0
      %466 = vmatpush2.bf16.msra.mxu0 0
      %467 = vmatprep.mubr.bf16.mxu0 0
      %468 = vmatmul.mubr.bf16.gmra.mxu0 %v326
      %v469 = vpop.f32.mrf.mxu0
      %v470 = vadd.f32 %v348, %v469
      %v471 = vpop.f32.mrf.mxu0
      %v472 = vadd.f32 %v352, %v471
      %v473 = vpop.f32.mrf.mxu0
      %v474 = vadd.f32 %v348, %v473
      %v475 = vpop.f32.mrf.mxu0
      %v476 = vadd.f32 %v352, %v475
      %477 = vdwg.mxu0
      %v478 = vmax.f32 %v470, 0.0
      %v479 = vmax.f32 %v472, 0.0
      %v480 = vmax.f32 %v474, 0.0
      %v481 = vmax.f32 %v476, 0.0
      %v482 = vpack.c.bf16 %v480, %v478
      %v483 = vpack.c.bf16 %v481, %v479
      %v484 = vld [vmem:[%s5] sm:$0xf]
      %v485 = vld [vmem:[%s5 + $0x4] sm:$0xf]
      %v486 = vld [vmem:[%s5 + $0x8] sm:$0xf]
      %v487 = vld [vmem:[%s5 + $0xc] sm:$0xf]
      %v488 = vld [vmem:[%s5 + $0x10] sm:$0xf]
      %v489 = vld [vmem:[%s5 + $0x14] sm:$0xf]
      %v490 = vld [vmem:[%s5 + $0x18] sm:$0xf]
      %v491 = vld [vmem:[%s5 + $0x1c] sm:$0xf]
      %v492 = vld [vmem:[%s5 + $0x20] sm:$0xf]
      %v493 = vld [vmem:[%s5 + $0x24] sm:$0xf]
      %v494 = vld [vmem:[%s5 + $0x28] sm:$0xf]
      %v495 = vld [vmem:[%s5 + $0x2c] sm:$0xf]
      %v496 = vld [vmem:[%s5 + $0x30] sm:$0xf]
      %v497 = vld [vmem:[%s5 + $0x34] sm:$0xf]
      %v498 = vld [vmem:[%s5 + $0x38] sm:$0xf]
      %v499 = vld [vmem:[%s5 + $0x3c] sm:$0xf]
      %v500 = vld [vmem:[%s5 + $0x40] sm:$0xf]
      %v501 = vld [vmem:[%s5 + $0x44] sm:$0xf]
      %v502 = vld [vmem:[%s5 + $0x48] sm:$0xf]
      %v503 = vld [vmem:[%s5 + $0x4c] sm:$0xf]
      %v504 = vld [vmem:[%s5 + $0x50] sm:$0xf]
      %v505 = vld [vmem:[%s5 + $0x54] sm:$0xf]
      %v506 = vld [vmem:[%s5 + $0x58] sm:$0xf]
      %v507 = vld [vmem:[%s5 + $0x5c] sm:$0xf]
      %v508 = vld [vmem:[%s5 + $0x60] sm:$0xf]
      %v509 = vld [vmem:[%s5 + $0x64] sm:$0xf]
      %v510 = vld [vmem:[%s5 + $0x68] sm:$0xf]
      %v511 = vld [vmem:[%s5 + $0x6c] sm:$0xf]
      %v512 = vld [vmem:[%s5 + $0x70] sm:$0xf]
      %v513 = vld [vmem:[%s5 + $0x74] sm:$0xf]
      %v514 = vld [vmem:[%s5 + $0x78] sm:$0xf]
      %v515 = vld [vmem:[%s5 + $0x7c] sm:$0xf]
      %v516 = vld [vmem:[%s6] sm:$0x1]
      %v518 = vlaneseq
      %v519 = vshrl.u32 %v518, 7
      %v520 = vsub.s32 0, %v519
      %v521 = vrot.slane %v516, %v520
      %v555 = vunpack.c.l.b16 %v484
      %v556 = vunpack.c.l.b16 %v485
      %v557 = vunpack.c.l.b16 %v486
      %v558 = vunpack.c.l.b16 %v487
      %v559 = vunpack.c.l.b16 %v488
      %v560 = vunpack.c.l.b16 %v489
      %v561 = vunpack.c.l.b16 %v490
      %v562 = vunpack.c.l.b16 %v491
      %v563 = vunpack.c.l.b16 %v492
      %v564 = vunpack.c.l.b16 %v493
      %v565 = vunpack.c.l.b16 %v494
      %v566 = vunpack.c.l.b16 %v495
      %v567 = vunpack.c.l.b16 %v496
      %v568 = vunpack.c.l.b16 %v497
      %v569 = vunpack.c.l.b16 %v498
      %v570 = vunpack.c.l.b16 %v499
      %v571 = vunpack.c.l.b16 %v500
      %v572 = vunpack.c.l.b16 %v501
      %v573 = vunpack.c.l.b16 %v502
      %v574 = vunpack.c.l.b16 %v503
      %v575 = vunpack.c.l.b16 %v504
      %v576 = vunpack.c.l.b16 %v505
      %v577 = vunpack.c.l.b16 %v506
      %v578 = vunpack.c.l.b16 %v507
      %v579 = vunpack.c.l.b16 %v508
      %v580 = vunpack.c.l.b16 %v509
      %v581 = vunpack.c.l.b16 %v510
      %v582 = vunpack.c.l.b16 %v511
      %v583 = vunpack.c.l.b16 %v512
      %v584 = vunpack.c.l.b16 %v513
      %v585 = vunpack.c.l.b16 %v514
      %v586 = vunpack.c.l.b16 %v515
      %v587 = vpack.c.b16 %v556, %v555
      %v588 = vpack.c.b16 %v558, %v557
      %v589 = vpack.c.b16 %v560, %v559
      %v590 = vpack.c.b16 %v562, %v561
      %v591 = vpack.c.b16 %v564, %v563
      %v592 = vpack.c.b16 %v566, %v565
      %v593 = vpack.c.b16 %v568, %v567
      %v594 = vpack.c.b16 %v570, %v569
      %v595 = vpack.c.b16 %v572, %v571
      %v596 = vpack.c.b16 %v574, %v573
      %v597 = vpack.c.b16 %v576, %v575
      %v598 = vpack.c.b16 %v578, %v577
      %v599 = vpack.c.b16 %v580, %v579
      %v600 = vpack.c.b16 %v582, %v581
      %v601 = vpack.c.b16 %v584, %v583
      %v602 = vpack.c.b16 %v586, %v585
      %619 = vmatprep.subr.bf16.mxu0 0
      %620 = vmatpush1.bf16.msra.mxu0 %v594
      %621 = vmatprep.subr.bf16.mxu0 0
      %622 = vmatpush1.bf16.msra.mxu0 %v593
      %623 = vmatprep.subr.bf16.mxu0 0
      %624 = vmatpush1.bf16.msra.mxu0 %v592
      %625 = vmatprep.subr.bf16.mxu0 0
      %626 = vmatpush1.bf16.msra.mxu0 %v591
      %627 = vmatprep.subr.bf16.mxu0 0
      %628 = vmatpush1.bf16.msra.mxu0 %v590
      %629 = vmatprep.subr.bf16.mxu0 0
      %630 = vmatpush1.bf16.msra.mxu0 %v589
      %631 = vmatprep.subr.bf16.mxu0 0
      %632 = vmatpush1.bf16.msra.mxu0 %v588
      %633 = vmatprep.subr.bf16.mxu0 0
      %634 = vmatpush1.bf16.msra.mxu0 %v587
      %635 = vmatprep.subr.bf16.mxu0 0
      %636 = vmatpush2.bf16.msra.mxu0 %v602
      %637 = vmatprep.subr.bf16.mxu0 0
      %638 = vmatpush2.bf16.msra.mxu0 %v601
      %639 = vmatprep.subr.bf16.mxu0 0
      %640 = vmatpush2.bf16.msra.mxu0 %v600
      %641 = vmatprep.subr.bf16.mxu0 0
      %642 = vmatpush2.bf16.msra.mxu0 %v599
      %643 = vmatprep.subr.bf16.mxu0 0
      %644 = vmatpush2.bf16.msra.mxu0 %v598
      %645 = vmatprep.subr.bf16.mxu0 0
      %646 = vmatpush2.bf16.msra.mxu0 %v597
      %647 = vmatprep.subr.bf16.mxu0 0
      %648 = vmatpush2.bf16.msra.mxu0 %v596
      %649 = vmatprep.subr.bf16.mxu0 0
      %650 = vmatpush2.bf16.msra.mxu0 %v595
      %651 = vmatprep.mubr.bf16.mxu0 %v483
      %652 = vmatmul.mubr.bf16.gmra.mxu0 %v482
      %v653 = vpop.f32.mrf.mxu0
      %v654 = vadd.f32 %v521, %v653
      %v655 = vpop.f32.mrf.mxu0
      %v656 = vpop.f32.mrf.mxu0
      %v657 = vadd.f32 %v521, %v656
      %v658 = vpop.f32.mrf.mxu0
      %659 = vdwg.mxu0
      %v660 = vadd.f32 %v283, %v654
      %v661 = vadd.f32 %v284, %v657
      %662 = vst [vmem:[%s280] sm:$0xff] %v660
      %663 = vst [vmem:[%s280 + $0x8] sm:$0xff] %v661
      %s664 = smul.u32 2, %s18
      %p665 = scmp.lt.s32.totalorder %s664, 3
      %s666 = scalar_select %p665, %s664, 3
      %s667 = smul.addr %s666, 8
      %s668 = scalar_lea.vmem %s7, %s667
      // Predicated region
      $region49: #{transformer_forward.5} parent=47 // pred_check
        %p669 = pneg %p188
      $region50: #{transformer_forward.5} parent=47 // pred_check_branch
        %671 = sbr.rel (%p669) target = $region52
      $region51: #{transformer_forward.5} parent=47 // pred_region
        %s672 = smul.u32 2, %s18
      $region52: #{transformer_forward.5} parent=47 // pred_fallthru
        _
    $region48: #{transformer_forward.5} parent=5 // pred_fallthru
      _
    %p673 = scmp.le.s32.totalorder 2, %s13
    // Predicated region
    $region53: #{transformer_forward.5} parent=5 // pred_check
      %p674 = pneg %p673
    $region54: #{transformer_forward.5} parent=5 // pred_check_branch
      %676 = sbr.rel (%p674) target = $region56
    $region55: #{transformer_forward.5} parent=5 // pred_region
      %s677 = ssub.s32 %s13, 2
      // Predicated region
      $region57: #{transformer_forward.5} parent=55 // pred_check
        %p678 = pneg %p194
      $region58: #{transformer_forward.5} parent=55 // pred_check_branch
        %680 = sbr.rel (%p678) target = $region60
      $region59: #{transformer_forward.5} parent=55 // pred_region
        %s681 = smul.u32 2, %s19
        %p682 = scmp.lt.s32.totalorder %s681, 3
        %s683 = scalar_select %p682, %s681, 3
        %s684 = smul.addr %s683, 8
        %s685 = scalar_lea.vmem %s7, %s684
      $region60: #{transformer_forward.5} parent=55 // pred_fallthru
        _
    $region56: #{transformer_forward.5} parent=5 // pred_fallthru
      _
  $region6: #{transformer_forward.5} parent=0 // loop_footer
    %s17 = sadd.s32 1, %s13
  $region7: #{transformer_forward.5} parent=0 // loop_footer_branch
    %12 = sbr.rel target = $region3
  $region8: #{transformer_forward.5} parent=0 // loop_exit
    _

// kernel: transformer_forward.6
$region0: #{transformer_forward.6}
  #allocation0 [shape = 'u32[]', space=smem, size = 0x4, offset = 0x4, fixed_abs, tag = 'smem constant byte address 0x4 - core index']
  #allocation1 [shape = 'u32[144,128]{1,0:T(1,128)}', space=vmem, size = 0x12000, scoped, tag = 'internal scratch']
  %s0 = inlined_call_operand.vmem [shape: f32[2,16,128], index: 0, kind: input, shape index: {}]
  %s1 = inlined_call_operand.vmem [shape: f32[1,128], index: 1, kind: input, shape index: {}]
  %s2 = inlined_call_operand.vmem [shape: f32[1,128], index: 2, kind: input, shape index: {}]
  %s3 = inlined_call_operand.vmem [shape: bf16[128,384], index: 3, kind: input, shape index: {}]
  %s4 = inlined_call_operand.vmem [shape: bf16[128,128], index: 4, kind: input, shape index: {}]
  %s5 = inlined_call_operand.vmem [shape: f32[1,128], index: 5, kind: input, shape index: {}]
  %s6 = inlined_call_operand.vmem [shape: f32[2,16,128], index: 6, kind: output, shape index: {}]
  %s7 = sld [smem:[#allocation0]]
  $region57: #{transformer_forward.6} parent=0
    _
  %s9 = ssub.s32 1, %s7
  %s10 = scalar_select 0, %s9, %s7
  loop: start=0, step=1, limit=4
  $region2: #{transformer_forward.6} parent=0 // loop_pre_header
    _
  $region3: #{transformer_forward.6} parent=0 // loop_header
    %s12 = sphi 0, %s16
    %p13 = scmp.ge.s32.totalorder %s12, 4
    %s22 = sphi 0, %s24
    %s25 = sphi 0, %s22
    %s26 = sphi 0, %s25
    %s42 = sphi 0, %s26
    %s46 = sphi 0, %s46
    %s48 = sphi 0, %s46
    %s49 = sphi 0, %s48
    %s63 = sphi 0, %s49
    %s67 = sphi 0, %s67
    %s69 = sphi 0, %s67
    %s70 = sphi 0, %s69
    %s84 = sphi 0, %s70
    %s88 = sphi 0, %s88
    %s90 = sphi 0, %s88
    %s91 = sphi 0, %s90
    %s105 = sphi 0, %s91
    %s109 = sphi 0, %s109
    %s111 = sphi 0, %s109
    %s112 = sphi 0, %s111
    %s126 = sphi 0, %s112
    %s130 = sphi 0, %s130
    %s132 = sphi 0, %s130
    %s133 = sphi 0, %s132
    %s147 = sphi 0, %s133
    %s153 = sphi 0, %s155
    %s156 = sphi 0, %s153
    %s157 = sphi 0, %s156
    %s173 = sphi 0, %s157
  $region4: #{transformer_forward.6} parent=0 // loop_header_branch
    %15 = sbr.rel (%p13) target = $region8
  $region5: #{transformer_forward.6} parent=0 // loop_body
    %s17 = ssub.s32 %s12, 1
    %s18 = ssub.s32 %s12, 2
    %s19 = sadd.s32 %s12, 1
    %s20 = ssub.s32 %s12, %s19
    %p21 = scmp.eq.s32.totalorder %s20, 0
    %s23 = sadd.s32 %s22, 1
    %s24 = scalar_select %p21, %s22, %s23
    %p27 = pneg %p21
    %p28 = scmp.eq.s32.totalorder %s12, 1
    %p29 = por %p27, %p28
    %p30 = scmp.ne.s32.totalorder %s22, %s25
    %p31 = scmp.eq.s32.totalorder %s12, 0
    %p32 = por %p30, %p31
    %p33 = scmp.ne.s32.totalorder %s22, %s25
    %p34 = scmp.eq.s32.totalorder %s17, 1
    %p35 = por %p33, %p34
    %p36 = scmp.ne.s32.totalorder %s25, %s26
    %p37 = scmp.eq.s32.totalorder %s17, 0
    %p38 = por %p36, %p37
    %p39 = scmp.ne.s32.totalorder %s25, %s26
    %p40 = scmp.eq.s32.totalorder %s18, 1
    %p41 = por %p39, %p40
    %p43 = scmp.ne.s32.totalorder %s26, %s42
    %p44 = scmp.eq.s32.totalorder %s18, 0
    %p45 = por %p43, %p44
    %s47 = sadd.s32 %s46, 1
    %p50 = scmp.eq.s32.totalorder %s12, 1
    %p51 = scmp.ne.s32.totalorder %s46, %s48
    %p52 = scmp.eq.s32.totalorder %s12, 0
    %p53 = por %p51, %p52
    %p54 = scmp.ne.s32.totalorder %s46, %s48
    %p55 = scmp.eq.s32.totalorder %s17, 1
    %p56 = por %p54, %p55
    %p57 = scmp.ne.s32.totalorder %s48, %s49
    %p58 = scmp.eq.s32.totalorder %s17, 0
    %p59 = por %p57, %p58
    %p60 = scmp.ne.s32.totalorder %s48, %s49
    %p61 = scmp.eq.s32.totalorder %s18, 1
    %p62 = por %p60, %p61
    %p64 = scmp.ne.s32.totalorder %s49, %s63
    %p65 = scmp.eq.s32.totalorder %s18, 0
    %p66 = por %p64, %p65
    %s68 = sadd.s32 %s67, 1
    %p71 = scmp.eq.s32.totalorder %s12, 1
    %p72 = scmp.ne.s32.totalorder %s67, %s69
    %p73 = scmp.eq.s32.totalorder %s12, 0
    %p74 = por %p72, %p73
    %p75 = scmp.ne.s32.totalorder %s67, %s69
    %p76 = scmp.eq.s32.totalorder %s17, 1
    %p77 = por %p75, %p76
    %p78 = scmp.ne.s32.totalorder %s69, %s70
    %p79 = scmp.eq.s32.totalorder %s17, 0
    %p80 = por %p78, %p79
    %p81 = scmp.ne.s32.totalorder %s69, %s70
    %p82 = scmp.eq.s32.totalorder %s18, 1
    %p83 = por %p81, %p82
    %p85 = scmp.ne.s32.totalorder %s70, %s84
    %p86 = scmp.eq.s32.totalorder %s18, 0
    %p87 = por %p85, %p86
    %s89 = sadd.s32 %s88, 1
    %p92 = scmp.eq.s32.totalorder %s12, 1
    %p93 = scmp.ne.s32.totalorder %s88, %s90
    %p94 = scmp.eq.s32.totalorder %s12, 0
    %p95 = por %p93, %p94
    %p96 = scmp.ne.s32.totalorder %s88, %s90
    %p97 = scmp.eq.s32.totalorder %s17, 1
    %p98 = por %p96, %p97
    %p99 = scmp.ne.s32.totalorder %s90, %s91
    %p100 = scmp.eq.s32.totalorder %s17, 0
    %p101 = por %p99, %p100
    %p102 = scmp.ne.s32.totalorder %s90, %s91
    %p103 = scmp.eq.s32.totalorder %s18, 1
    %p104 = por %p102, %p103
    %p106 = scmp.ne.s32.totalorder %s91, %s105
    %p107 = scmp.eq.s32.totalorder %s18, 0
    %p108 = por %p106, %p107
    %s110 = sadd.s32 %s109, 1
    %p113 = scmp.eq.s32.totalorder %s12, 1
    %p114 = scmp.ne.s32.totalorder %s109, %s111
    %p115 = scmp.eq.s32.totalorder %s12, 0
    %p116 = por %p114, %p115
    %p117 = scmp.ne.s32.totalorder %s109, %s111
    %p118 = scmp.eq.s32.totalorder %s17, 1
    %p119 = por %p117, %p118
    %p120 = scmp.ne.s32.totalorder %s111, %s112
    %p121 = scmp.eq.s32.totalorder %s17, 0
    %p122 = por %p120, %p121
    %p123 = scmp.ne.s32.totalorder %s111, %s112
    %p124 = scmp.eq.s32.totalorder %s18, 1
    %p125 = por %p123, %p124
    %p127 = scmp.ne.s32.totalorder %s112, %s126
    %p128 = scmp.eq.s32.totalorder %s18, 0
    %p129 = por %p127, %p128
    %s131 = sadd.s32 %s130, 1
    %p134 = scmp.eq.s32.totalorder %s12, 1
    %p135 = scmp.ne.s32.totalorder %s130, %s132
    %p136 = scmp.eq.s32.totalorder %s12, 0
    %p137 = por %p135, %p136
    %p138 = scmp.ne.s32.totalorder %s130, %s132
    %p139 = scmp.eq.s32.totalorder %s17, 1
    %p140 = por %p138, %p139
    %p141 = scmp.ne.s32.totalorder %s132, %s133
    %p142 = scmp.eq.s32.totalorder %s17, 0
    %p143 = por %p141, %p142
    %p144 = scmp.ne.s32.totalorder %s132, %s133
    %p145 = scmp.eq.s32.totalorder %s18, 1
    %p146 = por %p144, %p145
    %p148 = scmp.ne.s32.totalorder %s133, %s147
    %p149 = scmp.eq.s32.totalorder %s18, 0
    %p150 = por %p148, %p149
    %s151 = ssub.s32 %s12, %s19
    %p152 = scmp.eq.s32.totalorder %s151, 0
    %s154 = sadd.s32 %s153, 1
    %s155 = scalar_select %p152, %s153, %s154
    %p158 = pneg %p152
    %p159 = scmp.eq.s32.totalorder %s12, 1
    %p160 = por %p158, %p159
    %p161 = scmp.ne.s32.totalorder %s153, %s156
    %p162 = scmp.eq.s32.totalorder %s12, 0
    %p163 = por %p161, %p162
    %p164 = scmp.ne.s32.totalorder %s153, %s156
    %p165 = scmp.eq.s32.totalorder %s17, 1
    %p166 = por %p164, %p165
    %p167 = scmp.ne.s32.totalorder %s156, %s157
    %p168 = scmp.eq.s32.totalorder %s17, 0
    %p169 = por %p167, %p168
    %p170 = scmp.ne.s32.totalorder %s156, %s157
    %p171 = scmp.eq.s32.totalorder %s18, 1
    %p172 = por %p170, %p171
    %p174 = scmp.ne.s32.totalorder %s157, %s173
    %p175 = scmp.eq.s32.totalorder %s18, 0
    %p176 = por %p174, %p175
    %p177 = scmp.le.s32.totalorder 1, %s12
    %p178 = scmp.lt.s32.totalorder %s12, 3
    %p179 = pnand %p177, %p178
    %p180 = pneg %p179
    // Predicated region
    $region9: #{transformer_forward.6} parent=5 // pred_check
      _
    $region10: #{transformer_forward.6} parent=5 // pred_check_branch
      %182 = sbr.rel (%p179) target = $region12
    $region11: #{transformer_forward.6} parent=5 // pred_region
      %s183 = ssub.s32 %s12, 1
      // Predicated region
      $region13: #{transformer_forward.6} parent=11 // pred_check
        %p184 = pneg %p59
      $region14: #{transformer_forward.6} parent=11 // pred_check_branch
        %186 = sbr.rel (%p184) target = $region16
      $region15: #{transformer_forward.6} parent=11 // pred_region
        _
      $region16: #{transformer_forward.6} parent=11 // pred_fallthru
        _
      // Predicated region
      $region17: #{transformer_forward.6} parent=11 // pred_check
        %p187 = pneg %p80
      $region18: #{transformer_forward.6} parent=11 // pred_check_branch
        %189 = sbr.rel (%p187) target = $region20
      $region19: #{transformer_forward.6} parent=11 // pred_region
        _
      $region20: #{transformer_forward.6} parent=11 // pred_fallthru
        _
      // Predicated region
      $region21: #{transformer_forward.6} parent=11 // pred_check
        %p190 = pneg %p101
      $region22: #{transformer_forward.6} parent=11 // pred_check_branch
        %192 = sbr.rel (%p190) target = $region24
      $region23: #{transformer_forward.6} parent=11 // pred_region
        _
      $region24: #{transformer_forward.6} parent=11 // pred_fallthru
        _
      // Predicated region
      $region25: #{transformer_forward.6} parent=11 // pred_check
        %p193 = pneg %p122
      $region26: #{transformer_forward.6} parent=11 // pred_check_branch
        %195 = sbr.rel (%p193) target = $region28
      $region27: #{transformer_forward.6} parent=11 // pred_region
        _
      $region28: #{transformer_forward.6} parent=11 // pred_fallthru
        _
      // Predicated region
      $region29: #{transformer_forward.6} parent=11 // pred_check
        %p196 = pneg %p143
      $region30: #{transformer_forward.6} parent=11 // pred_check_branch
        %198 = sbr.rel (%p196) target = $region32
      $region31: #{transformer_forward.6} parent=11 // pred_region
        _
      $region32: #{transformer_forward.6} parent=11 // pred_fallthru
        _
    $region12: #{transformer_forward.6} parent=5 // pred_fallthru
      _
    %p199 = scmp.lt.s32.totalorder %s12, 2
    // Predicated region
    $region33: #{transformer_forward.6} parent=5 // pred_check
      %p200 = pneg %p199
    $region34: #{transformer_forward.6} parent=5 // pred_check_branch
      %202 = sbr.rel (%p200) target = $region36
    $region35: #{transformer_forward.6} parent=5 // pred_region
      // Predicated region
      $region37: #{transformer_forward.6} parent=35 // pred_check
        %p203 = pneg %p32
      $region38: #{transformer_forward.6} parent=35 // pred_check_branch
        %205 = sbr.rel (%p203) target = $region40
      $region39: #{transformer_forward.6} parent=35 // pred_region
        %p206 = scmp.lt.s32.totalorder %s12, 1
        %s207 = scalar_select %p206, %s12, 1
        %s208 = smul.addr %s207, 2
        %s209 = smul.addr %s208, 8
        %s210 = scalar_lea.vmem %s0, %s209
      $region40: #{transformer_forward.6} parent=35 // pred_fallthru
        _
    $region36: #{transformer_forward.6} parent=5 // pred_fallthru
      _
    %p211 = scmp.le.s32.totalorder 1, %s12
    %p212 = scmp.lt.s32.totalorder %s12, 3
    %p213 = pnand %p211, %p212
    %p214 = pneg %p213
    // Predicated region
    $region41: #{transformer_forward.6} parent=5 // pred_check
      _
    $region42: #{transformer_forward.6} parent=5 // pred_check_branch
      %216 = sbr.rel (%p213) target = $region44
    $region43: #{transformer_forward.6} parent=5 // pred_region
      %s217 = ssub.s32 %s12, 1
      %p218 = scmp.lt.s32.totalorder %s17, 1
      %s219 = scalar_select %p218, %s17, 1
      %s220 = smul.addr %s219, 2
      %s221 = smul.addr %s220, 8
      %s222 = scalar_lea.vmem %s0, %s221
      %p223 = pneg %p38
      %p224 = pneg %p35
      %p225 = pneg %p59
      %p226 = pneg %p56
      %p227 = pneg %p80
      %p228 = pneg %p77
      %p229 = pneg %p101
      %p230 = pneg %p98
      %p231 = pneg %p122
      %p232 = pneg %p119
      %p233 = pneg %p143
      %p234 = pneg %p140
      %p235 = pneg %p169
      %p236 = pneg %p166
      %p237 = scmp.lt.s32.totalorder %s17, 1
      %s238 = scalar_select %p237, %s17, 1
      %s239 = smul.addr %s238, 2
      %s240 = smul.addr %s239, 8
      %s241 = scalar_lea.vmem %s6, %s240
      %p242 = scmp.lt.s32.totalorder %s17, 1
      %s243 = scalar_select %p242, %s17, 1
      %s244 = smul.addr %s243, 2
      %s245 = smul.addr %s244, 8
      %s246 = scalar_lea.vmem %s0, %s245
      %p247 = scmp.lt.s32.totalorder %s17, 1
      %s248 = scalar_select %p247, %s17, 1
      %s249 = smul.addr %s248, 2
      %s250 = smul.addr %s249, 8
      %s251 = scalar_lea.vmem %s6, %s250
      %v253 = vld [vmem:[%s246] sm:$0xff]
      %v254 = vld [vmem:[%s246 + $0x8] sm:$0xff]
      %v255 = vld [vmem:[%s1] sm:$0x1]
      %v256 = vld [vmem:[%s2] sm:$0x1]
      %257 = vadd.xlane.f32.xlu0 %v253
      %v258 = vpop.xlane.xlu0 %257
      %259 = vadd.xlane.f32.xlu0 %v254
      %v260 = vpop.xlane.xlu0 %259
      %v261 = vrcp.pop 128.0
      %v262 = vmul.f32 %v258, %v261
      %v263 = vmul.f32 %v260, %v261
      %v264 = vsub.f32 %v253, %v262
      %v265 = vsub.f32 %v254, %v263
      %v266 = vmul.f32 %v264, %v264
      %v267 = vmul.f32 %v265, %v265
      %268 = vadd.xlane.f32.xlu0 %v266
      %v269 = vpop.xlane.xlu0 %268
      %270 = vadd.xlane.f32.xlu0 %v267
      %v271 = vpop.xlane.xlu0 %270
      %v272 = vmul.f32 %v269, %v261
      %v273 = vmul.f32 %v271, %v261
      %v274 = vadd.f32 %v272, 1e-05
      %v275 = vadd.f32 %v273, 1e-05
      %v276 = vrsqrt.pop %v274
      %v277 = vrsqrt.pop %v275
      %v278 = vmul.f32 %v264, %v276
      %v279 = vmul.f32 %v265, %v277
      %v281 = vlaneseq
      %v282 = vshrl.u32 %v281, 7
      %v283 = vsub.s32 0, %v282
      %v284 = vrot.slane %v255, %v283
      %v286 = vmul.f32 %v278, %v284
      %v287 = vmul.f32 %v279, %v284
      %v289 = vlaneseq
      %v290 = vshrl.u32 %v289, 7
      %v291 = vsub.s32 0, %v290
      %v292 = vrot.slane %v256, %v291
      %v294 = vadd.f32 %v286, %v292
      %v295 = vadd.f32 %v287, %v292
      %v296 = vpack.c.bf16 %v295, %v294
      %v297 = vld [vmem:[%s3] sm:$0xff]
      %v298 = vld [vmem:[%s3 + $0x8] sm:$0xf]
      %v299 = vld [vmem:[%s3 + $0xc] sm:$0xff]
      %v300 = vld [vmem:[%s3 + $0x14] sm:$0xf]
      %v301 = vld [vmem:[%s3 + $0x18] sm:$0xff]
      %v302 = vld [vmem:[%s3 + $0x20] sm:$0xf]
      %v303 = vld [vmem:[%s3 + $0x24] sm:$0xff]
      %v304 = vld [vmem:[%s3 + $0x2c] sm:$0xf]
      %v305 = vld [vmem:[%s3 + $0x30] sm:$0xff]
      %v306 = vld [vmem:[%s3 + $0x38] sm:$0xf]
      %v307 = vld [vmem:[%s3 + $0x3c] sm:$0xff]
      %v308 = vld [vmem:[%s3 + $0x44] sm:$0xf]
      %v309 = vld [vmem:[%s3 + $0x48] sm:$0xff]
      %v310 = vld [vmem:[%s3 + $0x50] sm:$0xf]
      %v311 = vld [vmem:[%s3 + $0x54] sm:$0xff]
      %v312 = vld [vmem:[%s3 + $0x5c] sm:$0xf]
      %v313 = vld [vmem:[%s3 + $0x60] sm:$0xff]
      %v314 = vld [vmem:[%s3 + $0x68] sm:$0xf]
      %v315 = vld [vmem:[%s3 + $0x6c] sm:$0xff]
      %v316 = vld [vmem:[%s3 + $0x74] sm:$0xf]
      %v317 = vld [vmem:[%s3 + $0x78] sm:$0xff]
      %v318 = vld [vmem:[%s3 + $0x80] sm:$0xf]
      %v319 = vld [vmem:[%s3 + $0x84] sm:$0xff]
      %v320 = vld [vmem:[%s3 + $0x8c] sm:$0xf]
      %v321 = vld [vmem:[%s3 + $0x90] sm:$0xff]
      %v322 = vld [vmem:[%s3 + $0x98] sm:$0xf]
      %v323 = vld [vmem:[%s3 + $0x9c] sm:$0xff]
      %v324 = vld [vmem:[%s3 + $0xa4] sm:$0xf]
      %v325 = vld [vmem:[%s3 + $0xa8] sm:$0xff]
      %v326 = vld [vmem:[%s3 + $0xb0] sm:$0xf]
      %v327 = vld [vmem:[%s3 + $0xb4] sm:$0xff]
      %v328 = vld [vmem:[%s3 + $0xbc] sm:$0xf]
      %v361 = vunpack.c.l.b16 %v297
      %v362 = vunpack.c.h.b16 %v297
      %v363 = vunpack.c.l.b16 %v298
      %v364 = vunpack.c.l.b16 %v299
      %v365 = vunpack.c.h.b16 %v299
      %v366 = vunpack.c.l.b16 %v300
      %v367 = vunpack.c.l.b16 %v301
      %v368 = vunpack.c.h.b16 %v301
      %v369 = vunpack.c.l.b16 %v302
      %v370 = vunpack.c.l.b16 %v303
      %v371 = vunpack.c.h.b16 %v303
      %v372 = vunpack.c.l.b16 %v304
      %v373 = vunpack.c.l.b16 %v305
      %v374 = vunpack.c.h.b16 %v305
      %v375 = vunpack.c.l.b16 %v306
      %v376 = vunpack.c.l.b16 %v307
      %v377 = vunpack.c.h.b16 %v307
      %v378 = vunpack.c.l.b16 %v308
      %v379 = vunpack.c.l.b16 %v309
      %v380 = vunpack.c.h.b16 %v309
      %v381 = vunpack.c.l.b16 %v310
      %v382 = vunpack.c.l.b16 %v311
      %v383 = vunpack.c.h.b16 %v311
      %v384 = vunpack.c.l.b16 %v312
      %v385 = vunpack.c.l.b16 %v313
      %v386 = vunpack.c.h.b16 %v313
      %v387 = vunpack.c.l.b16 %v314
      %v388 = vunpack.c.l.b16 %v315
      %v389 = vunpack.c.h.b16 %v315
      %v390 = vunpack.c.l.b16 %v316
      %v391 = vunpack.c.l.b16 %v317
      %v392 = vunpack.c.h.b16 %v317
      %v393 = vunpack.c.l.b16 %v318
      %v394 = vunpack.c.l.b16 %v319
      %v395 = vunpack.c.h.b16 %v319
      %v396 = vunpack.c.l.b16 %v320
      %v397 = vunpack.c.l.b16 %v321
      %v398 = vunpack.c.h.b16 %v321
      %v399 = vunpack.c.l.b16 %v322
      %v400 = vunpack.c.l.b16 %v323
      %v401 = vunpack.c.h.b16 %v323
      %v402 = vunpack.c.l.b16 %v324
      %v403 = vunpack.c.l.b16 %v325
      %v404 = vunpack.c.h.b16 %v325
      %v405 = vunpack.c.l.b16 %v326
      %v406 = vunpack.c.l.b16 %v327
      %v407 = vunpack.c.h.b16 %v327
      %v408 = vunpack.c.l.b16 %v328
      %v409 = vpack.c.b16 %v364, %v361
      %v410 = vpack.c.b16 %v365, %v362
      %v411 = vpack.c.b16 %v366, %v363
      %v412 = vpack.c.b16 %v370, %v367
      %v413 = vpack.c.b16 %v371, %v368
      %v414 = vpack.c.b16 %v372, %v369
      %v415 = vpack.c.b16 %v376, %v373
      %v416 = vpack.c.b16 %v377, %v374
      %v417 = vpack.c.b16 %v378, %v375
      %v418 = vpack.c.b16 %v382, %v379
      %v419 = vpack.c.b16 %v383, %v380
      %v420 = vpack.c.b16 %v384, %v381
      %v421 = vpack.c.b16 %v388, %v385
      %v422 = vpack.c.b16 %v389, %v386
      %v423 = vpack.c.b16 %v390, %v387
      %v424 = vpack.c.b16 %v394, %v391
      %v425 = vpack.c.b16 %v395, %v392
      %v426 = vpack.c.b16 %v396, %v393
      %v427 = vpack.c.b16 %v400, %v397
      %v428 = vpack.c.b16 %v401, %v398
      %v429 = vpack.c.b16 %v402, %v399
      %v430 = vpack.c.b16 %v406, %v403
      %v431 = vpack.c.b16 %v407, %v404
      %v432 = vpack.c.b16 %v408, %v405
      %457 = vmatprep.subr.bf16.mxu0 %v431
      %458 = vmatpush1.bf16.msra.mxu0 %v430
      %459 = vmatprep.subr.bf16.mxu0 %v428
      %460 = vmatpush1.bf16.msra.mxu0 %v427
      %461 = vmatprep.subr.bf16.mxu0 %v425
      %462 = vmatpush1.bf16.msra.mxu0 %v424
      %463 = vmatprep.subr.bf16.mxu0 %v422
      %464 = vmatpush1.bf16.msra.mxu0 %v421
      %465 = vmatprep.subr.bf16.mxu0 %v419
      %466 = vmatpush1.bf16.msra.mxu0 %v418
      %467 = vmatprep.subr.bf16.mxu0 %v416
      %468 = vmatpush1.bf16.msra.mxu0 %v415
      %469 = vmatprep.subr.bf16.mxu0 %v413
      %470 = vmatpush1.bf16.msra.mxu0 %v412
      %471 = vmatprep.subr.bf16.mxu0 %v410
      %472 = vmatpush1.bf16.msra.mxu0 %v409
      %473 = vmatprep.subr.bf16.mxu0 0
      %474 = vmatpush2.bf16.msra.mxu0 0
      %475 = vmatprep.subr.bf16.mxu0 0
      %476 = vmatpush2.bf16.msra.mxu0 0
      %477 = vmatprep.subr.bf16.mxu0 0
      %478 = vmatpush2.bf16.msra.mxu0 0
      %479 = vmatprep.subr.bf16.mxu0 0
      %480 = vmatpush2.bf16.msra.mxu0 0
      %481 = vmatprep.subr.bf16.mxu0 0
      %482 = vmatpush2.bf16.msra.mxu0 0
      %483 = vmatprep.subr.bf16.mxu0 0
      %484 = vmatpush2.bf16.msra.mxu0 0
      %485 = vmatprep.subr.bf16.mxu0 0
      %486 = vmatpush2.bf16.msra.mxu0 0
      %487 = vmatprep.subr.bf16.mxu0 0
      %488 = vmatpush2.bf16.msra.mxu0 0
      %489 = vmatprep.mubr.bf16.mxu0 0
      %490 = vmatmul.mubr.bf16.gmra.mxu0 %v296
      %v491 = vpop.f32.mrf.mxu0
      %v492 = vadd.f32 0.0, %v491
      %v493 = vpop.f32.mrf.mxu0
      %v494 = vadd.f32 0.0, %v493
      %v495 = vpop.f32.mrf.mxu0
      %v496 = vadd.f32 0.0, %v495
      %v497 = vpop.f32.mrf.mxu0
      %v498 = vadd.f32 0.0, %v497
      %499 = vdwg.mxu0
      %500 = vmatprep.subr.bf16.mxu0 0
      %501 = vmatpush1.bf16.msra.mxu0 %v432
      %502 = vmatprep.subr.bf16.mxu0 0
      %503 = vmatpush1.bf16.msra.mxu0 %v429
      %504 = vmatprep.subr.bf16.mxu0 0
      %505 = vmatpush1.bf16.msra.mxu0 %v426
      %506 = vmatprep.subr.bf16.mxu0 0
      %507 = vmatpush1.bf16.msra.mxu0 %v423
      %508 = vmatprep.subr.bf16.mxu0 0
      %509 = vmatpush1.bf16.msra.mxu0 %v420
      %510 = vmatprep.subr.bf16.mxu0 0
      %511 = vmatpush1.bf16.msra.mxu0 %v417
      %512 = vmatprep.subr.bf16.mxu0 0
      %513 = vmatpush1.bf16.msra.mxu0 %v414
      %514 = vmatprep.subr.bf16.mxu0 0
      %515 = vmatpush1.bf16.msra.mxu0 %v411
      %516 = vmatprep.subr.bf16.mxu0 0
      %517 = vmatpush2.bf16.msra.mxu0 0
      %518 = vmatprep.subr.bf16.mxu0 0
      %519 = vmatpush2.bf16.msra.mxu0 0
      %520 = vmatprep.subr.bf16.mxu0 0
      %521 = vmatpush2.bf16.msra.mxu0 0
      %522 = vmatprep.subr.bf16.mxu0 0
      %523 = vmatpush2.bf16.msra.mxu0 0
      %524 = vmatprep.subr.bf16.mxu0 0
      %525 = vmatpush2.bf16.msra.mxu0 0
      %526 = vmatprep.subr.bf16.mxu0 0
      %527 = vmatpush2.bf16.msra.mxu0 0
      %528 = vmatprep.subr.bf16.mxu0 0
      %529 = vmatpush2.bf16.msra.mxu0 0
      %530 = vmatprep.subr.bf16.mxu0 0
      %531 = vmatpush2.bf16.msra.mxu0 0
      %532 = vmatprep.mubr.bf16.mxu0 0
      %533 = vmatmul.mubr.bf16.gmra.mxu0 %v296
      %v534 = vpop.f32.mrf.mxu0
      %v535 = vadd.f32 0.0, %v534
      %v536 = vpop.f32.mrf.mxu0
      %v537 = vpop.f32.mrf.mxu0
      %v538 = vadd.f32 0.0, %v537
      %v539 = vpop.f32.mrf.mxu0
      %540 = vdwg.mxu0
      %v541 = vmul.f32 %v492, 0.17677669
      %v542 = vmul.f32 %v496, 0.17677669
      %v543 = vpack.c.bf16 %v542, %v541
      %v544 = vpack.c.bf16 %v498, %v494
      %v545 = vpack.c.bf16 %v538, %v535
      %vm546 = vcmask 261120
      %v548 = vsel %vm546, %v543, 0
      %v551 = vsel %vm546, %v544, 0
      %553 = vmatprep.subr.bf16.mxu0 0
      %554 = vmatpush1.bf16.xpose.msra.mxu0 0
      %555 = vmatprep.subr.bf16.mxu0 0
      %556 = vmatpush1.bf16.xpose.msra.mxu0 0
      %557 = vmatprep.subr.bf16.mxu0 0
      %558 = vmatpush1.bf16.xpose.msra.mxu0 0
      %559 = vmatprep.subr.bf16.mxu0 0
      %560 = vmatpush1.bf16.xpose.msra.mxu0 0
      %561 = vmatprep.subr.bf16.mxu0 0
      %562 = vmatpush1.bf16.xpose.msra.mxu0 0
      %563 = vmatprep.subr.bf16.mxu0 0
      %564 = vmatpush1.bf16.xpose.msra.mxu0 0
      %565 = vmatprep.subr.bf16.mxu0 0
      %566 = vmatpush1.bf16.xpose.msra.mxu0 0
      %567 = vmatprep.subr.bf16.mxu0 0
      %568 = vmatpush1.bf16.xpose.msra.mxu0 %v551
      %569 = vmatprep.subr.bf16.mxu0 0
      %570 = vmatpush2.bf16.xpose.msra.mxu0 0
      %571 = vmatprep.subr.bf16.mxu0 0
      %572 = vmatpush2.bf16.xpose.msra.mxu0 0
      %573 = vmatprep.subr.bf16.mxu0 0
      %574 = vmatpush2.bf16.xpose.msra.mxu0 0
      %575 = vmatprep.subr.bf16.mxu0 0
      %576 = vmatpush2.bf16.xpose.msra.mxu0 0
      %577 = vmatprep.subr.bf16.mxu0 0
      %578 = vmatpush2.bf16.xpose.msra.mxu0 0
      %579 = vmatprep.subr.bf16.mxu0 0
      %580 = vmatpush2.bf16.xpose.msra.mxu0 0
      %581 = vmatprep.subr.bf16.mxu0 0
      %582 = vmatpush2.bf16.xpose.msra.mxu0 0
      %583 = vmatprep.subr.bf16.mxu0 0
      %584 = vmatpush2.bf16.xpose.msra.mxu0 0
      %585 = vmatprep.mubr.bf16.mxu0 0
      %586 = vmatmul.mubr.bf16.gmra.mxu0 %v548
      %v587 = vpop.f32.mrf.mxu0
      %v588 = vadd.f32 0.0, %v587
      %v589 = vpop.f32.mrf.mxu0
      %v590 = vpop.f32.mrf.mxu0
      %v591 = vadd.f32 0.0, %v590
      %v592 = vpop.f32.mrf.mxu0
      %593 = vdwg.mxu0
      %vm594 = vcmask 130048
      %v595 = vsel %vm594, %v588, -inf
      %596 = vmax.xlane.f32.xlu0 %v595
      %v597 = vpop.xlane.xlu0 %596
      %v598 = vsel %vm594, %v591, -inf
      %599 = vmax.xlane.f32.xlu0 %v598
      %v600 = vpop.xlane.xlu0 %599
      %v601 = vsub.f32 %v588, %v597
      %v602 = vsub.f32 %v591, %v600
      %v603 = vmul.f32 %v601, 1.442695
      %v604 = vpow.pop %v603
      %v605 = vmul.f32 %v602, 1.442695
      %v606 = vpow.pop %v605
      %v607 = vsel %vm594, %v604, 0.0
      %608 = vadd.xlane.f32.xlu0 %v607
      %v609 = vpop.xlane.xlu0 %608
      %v610 = vsel %vm594, %v606, 0.0
      %611 = vadd.xlane.f32.xlu0 %v610
      %v612 = vpop.xlane.xlu0 %611
      %v613 = vrcp.pop %v609
      %v614 = vrcp.pop %v612
      %v615 = vmul.f32 %v604, %v613
      %v616 = vmul.f32 %v606, %v614
      %v617 = vsel %vm594, %v615, -inf
      %618 = vmax.xlane.f32.xlu0 %v617
      %v619 = vpop.xlane.xlu0 %618
      %v620 = vsel %vm594, %v616, -inf
      %621 = vmax.xlane.f32.xlu0 %v620
      %v622 = vpop.xlane.xlu0 %621
      %v623 = vsub.f32 %v615, %v619
      %v624 = vsub.f32 %v616, %v622
      %v625 = vmul.f32 %v623, 1.442695
      %v626 = vpow.pop %v625
      %v627 = vmul.f32 %v624, 1.442695
      %v628 = vpow.pop %v627
      %v629 = vsel %vm594, %v626, 0.0
      %630 = vadd.xlane.f32.xlu0 %v629
      %v631 = vpop.xlane.xlu0 %630
      %v632 = vsel %vm594, %v628, 0.0
      %633 = vadd.xlane.f32.xlu0 %v632
      %v634 = vpop.xlane.xlu0 %633
      %v635 = vrcp.pop %v631
      %v636 = vrcp.pop %v634
      %v637 = vmul.f32 %v626, %v635
      %v638 = vmul.f32 %v628, %v636
      %v639 = vpack.c.bf16 %v638, %v637
      %v641 = vsel %vm594, %v639, 0
      %643 = vmatprep.subr.bf16.mxu0 0
      %644 = vmatpush1.bf16.msra.mxu0 0
      %645 = vmatprep.subr.bf16.mxu0 0
      %646 = vmatpush1.bf16.msra.mxu0 0
      %647 = vmatprep.subr.bf16.mxu0 0
      %648 = vmatpush1.bf16.msra.mxu0 0
      %649 = vmatprep.subr.bf16.mxu0 0
      %650 = vmatpush1.bf16.msra.mxu0 0
      %651 = vmatprep.subr.bf16.mxu0 0
      %652 = vmatpush1.bf16.msra.mxu0 0
      %653 = vmatprep.subr.bf16.mxu0 0
      %654 = vmatpush1.bf16.msra.mxu0 0
      %655 = vmatprep.subr.bf16.mxu0 0
      %656 = vmatpush1.bf16.msra.mxu0 0
      %657 = vmatprep.subr.bf16.mxu0 0
      %658 = vmatpush1.bf16.msra.mxu0 %v545
      %659 = vmatprep.subr.bf16.mxu0 0
      %660 = vmatpush2.bf16.msra.mxu0 0
      %661 = vmatprep.subr.bf16.mxu0 0
      %662 = vmatpush2.bf16.msra.mxu0 0
      %663 = vmatprep.subr.bf16.mxu0 0
      %664 = vmatpush2.bf16.msra.mxu0 0
      %665 = vmatprep.subr.bf16.mxu0 0
      %666 = vmatpush2.bf16.msra.mxu0 0
      %667 = vmatprep.subr.bf16.mxu0 0
      %668 = vmatpush2.bf16.msra.mxu0 0
      %669 = vmatprep.subr.bf16.mxu0 0
      %670 = vmatpush2.bf16.msra.mxu0 0
      %671 = vmatprep.subr.bf16.mxu0 0
      %672 = vmatpush2.bf16.msra.mxu0 0
      %673 = vmatprep.subr.bf16.mxu0 0
      %674 = vmatpush2.bf16.msra.mxu0 0
      %675 = vmatprep.mubr.bf16.mxu0 0
      %676 = vmatmul.mubr.bf16.gmra.mxu0 %v641
      %v677 = vpop.f32.mrf.mxu0
      %v678 = vadd.f32 0.0, %v677
      %v679 = vpop.f32.mrf.mxu0
      %v680 = vpop.f32.mrf.mxu0
      %v681 = vadd.f32 0.0, %v680
      %v682 = vpop.f32.mrf.mxu0
      %683 = vdwg.mxu0
      %685 = vrot.lane.b32.xlu0 %v543, 96
      %v686 = vpop.permute.xlu0 %685
      %688 = vrot.lane.b32.xlu0 %v544, 96
      %v689 = vpop.permute.xlu0 %688
      %v691 = vsel %vm546, %v686, 0
      %v694 = vsel %vm546, %v689, 0
      %696 = vmatprep.subr.bf16.mxu0 0
      %697 = vmatpush1.bf16.xpose.msra.mxu0 0
      %698 = vmatprep.subr.bf16.mxu0 0
      %699 = vmatpush1.bf16.xpose.msra.mxu0 0
      %700 = vmatprep.subr.bf16.mxu0 0
      %701 = vmatpush1.bf16.xpose.msra.mxu0 0
      %702 = vmatprep.subr.bf16.mxu0 0
      %703 = vmatpush1.bf16.xpose.msra.mxu0 0
      %704 = vmatprep.subr.bf16.mxu0 0
      %705 = vmatpush1.bf16.xpose.msra.mxu0 0
      %706 = vmatprep.subr.bf16.mxu0 0
      %707 = vmatpush1.bf16.xpose.msra.mxu0 0
      %708 = vmatprep.subr.bf16.mxu0 0
      %709 = vmatpush1.bf16.xpose.msra.mxu0 0
      %710 = vmatprep.subr.bf16.mxu0 0
      %711 = vmatpush1.bf16.xpose.msra.mxu0 %v694
      %712 = vmatprep.subr.bf16.mxu0 0
      %713 = vmatpush2.bf16.xpose.msra.mxu0 0
      %714 = vmatprep.subr.bf16.mxu0 0
      %715 = vmatpush2.bf16.xpose.msra.mxu0 0
      %716 = vmatprep.subr.bf16.mxu0 0
      %717 = vmatpush2.bf16.xpose.msra.mxu0 0
      %718 = vmatprep.subr.bf16.mxu0 0
      %719 = vmatpush2.bf16.xpose.msra.mxu0 0
      %720 = vmatprep.subr.bf16.mxu0 0
      %721 = vmatpush2.bf16.xpose.msra.mxu0 0
      %722 = vmatprep.subr.bf16.mxu0 0
      %723 = vmatpush2.bf16.xpose.msra.mxu0 0
      %724 = vmatprep.subr.bf16.mxu0 0
      %725 = vmatpush2.bf16.xpose.msra.mxu0 0
      %726 = vmatprep.subr.bf16.mxu0 0
      %727 = vmatpush2.bf16.xpose.msra.mxu0 0
      %728 = vmatprep.mubr.bf16.mxu0 0
      %729 = vmatmul.mubr.bf16.gmra.mxu0 %v691
      %v730 = vpop.f32.mrf.mxu0
      %v731 = vadd.f32 0.0, %v730
      %v732 = vpop.f32.mrf.mxu0
      %v733 = vpop.f32.mrf.mxu0
      %v734 = vadd.f32 0.0, %v733
      %v735 = vpop.f32.mrf.mxu0
      %736 = vdwg.mxu0
      %v737 = vsel %vm594, %v731, -inf
      %738 = vmax.xlane.f32.xlu0 %v737
      %v739 = vpop.xlane.xlu0 %738
      %v740 = vsel %vm594, %v734, -inf
      %741 = vmax.xlane.f32.xlu0 %v740
      %v742 = vpop.xlane.xlu0 %741
      %v743 = vsub.f32 %v731, %v739
      %v744 = vsub.f32 %v734, %v742
      %v745 = vmul.f32 %v743, 1.442695
      %v746 = vpow.pop %v745
      %v747 = vmul.f32 %v744, 1.442695
      %v748 = vpow.pop %v747
      %v749 = vsel %vm594, %v746, 0.0
      %750 = vadd.xlane.f32.xlu0 %v749
      %v751 = vpop.xlane.xlu0 %750
      %v752 = vsel %vm594, %v748, 0.0
      %753 = vadd.xlane.f32.xlu0 %v752
      %v754 = vpop.xlane.xlu0 %753
      %v755 = vrcp.pop %v751
      %v756 = vrcp.pop %v754
      %v757 = vmul.f32 %v746, %v755
      %v758 = vmul.f32 %v748, %v756
      %v759 = vsel %vm594, %v757, -inf
      %760 = vmax.xlane.f32.xlu0 %v759
      %v761 = vpop.xlane.xlu0 %760
      %v762 = vsel %vm594, %v758, -inf
      %763 = vmax.xlane.f32.xlu0 %v762
      %v764 = vpop.xlane.xlu0 %763
      %v765 = vsub.f32 %v757, %v761
      %v766 = vsub.f32 %v758, %v764
      %v767 = vmul.f32 %v765, 1.442695
      %v768 = vpow.pop %v767
      %v769 = vmul.f32 %v766, 1.442695
      %v770 = vpow.pop %v769
      %v771 = vsel %vm594, %v768, 0.0
      %772 = vadd.xlane.f32.xlu0 %v771
      %v773 = vpop.xlane.xlu0 %772
      %v774 = vsel %vm594, %v770, 0.0
      %775 = vadd.xlane.f32.xlu0 %v774
      %v776 = vpop.xlane.xlu0 %775
      %v777 = vrcp.pop %v773
      %v778 = vrcp.pop %v776
      %v779 = vmul.f32 %v768, %v777
      %v780 = vmul.f32 %v770, %v778
      %v781 = vpack.c.bf16 %v780, %v779
      %783 = vrot.lane.b32.xlu0 %v545, 96
      %v784 = vpop.permute.xlu0 %783
      %v787 = vsel %vm594, %v781, 0
      %789 = vmatprep.subr.bf16.mxu0 0
      %790 = vmatpush1.bf16.msra.mxu0 0
      %791 = vmatprep.subr.bf16.mxu0 0
      %792 = vmatpush1.bf16.msra.mxu0 0
      %793 = vmatprep.subr.bf16.mxu0 0
      %794 = vmatpush1.bf16.msra.mxu0 0
      %795 = vmatprep.subr.bf16.mxu0 0
      %796 = vmatpush1.bf16.msra.mxu0 0
      %797 = vmatprep.subr.bf16.mxu0 0
      %798 = vmatpush1.bf16.msra.mxu0 0
      %799 = vmatprep.subr.bf16.mxu0 0
      %800 = vmatpush1.bf16.msra.mxu0 0
      %801 = vmatprep.subr.bf16.mxu0 0
      %802 = vmatpush1.bf16.msra.mxu0 0
      %803 = vmatprep.subr.bf16.mxu0 0
      %804 = vmatpush1.bf16.msra.mxu0 %v784
      %805 = vmatprep.subr.bf16.mxu0 0
      %806 = vmatpush2.bf16.msra.mxu0 0
      %807 = vmatprep.subr.bf16.mxu0 0
      %808 = vmatpush2.bf16.msra.mxu0 0
      %809 = vmatprep.subr.bf16.mxu0 0
      %810 = vmatpush2.bf16.msra.mxu0 0
      %811 = vmatprep.subr.bf16.mxu0 0
      %812 = vmatpush2.bf16.msra.mxu0 0
      %813 = vmatprep.subr.bf16.mxu0 0
      %814 = vmatpush2.bf16.msra.mxu0 0
      %815 = vmatprep.subr.bf16.mxu0 0
      %816 = vmatpush2.bf16.msra.mxu0 0
      %817 = vmatprep.subr.bf16.mxu0 0
      %818 = vmatpush2.bf16.msra.mxu0 0
      %819 = vmatprep.subr.bf16.mxu0 0
      %820 = vmatpush2.bf16.msra.mxu0 0
      %821 = vmatprep.mubr.bf16.mxu0 0
      %822 = vmatmul.mubr.bf16.gmra.mxu0 %v787
      %v823 = vpop.f32.mrf.mxu0
      %v824 = vadd.f32 0.0, %v823
      %v825 = vpop.f32.mrf.mxu0
      %v826 = vpop.f32.mrf.mxu0
      %v827 = vadd.f32 0.0, %v826
      %v828 = vpop.f32.mrf.mxu0
      %829 = vdwg.mxu0
      %830 = vrot.lane.b32.xlu0 %v543, 64
      %v831 = vpop.permute.xlu0 %830
      %832 = vrot.lane.b32.xlu0 %v544, 64
      %v833 = vpop.permute.xlu0 %832
      %v835 = vsel %vm546, %v831, 0
      %v838 = vsel %vm546, %v833, 0
      %840 = vmatprep.subr.bf16.mxu0 0
      %841 = vmatpush1.bf16.xpose.msra.mxu0 0
      %842 = vmatprep.subr.bf16.mxu0 0
      %843 = vmatpush1.bf16.xpose.msra.mxu0 0
      %844 = vmatprep.subr.bf16.mxu0 0
      %845 = vmatpush1.bf16.xpose.msra.mxu0 0
      %846 = vmatprep.subr.bf16.mxu0 0
      %847 = vmatpush1.bf16.xpose.msra.mxu0 0
      %848 = vmatprep.subr.bf16.mxu0 0
      %849 = vmatpush1.bf16.xpose.msra.mxu0 0
      %850 = vmatprep.subr.bf16.mxu0 0
      %851 = vmatpush1.bf16.xpose.msra.mxu0 0
      %852 = vmatprep.subr.bf16.mxu0 0
      %853 = vmatpush1.bf16.xpose.msra.mxu0 0
      %854 = vmatprep.subr.bf16.mxu0 0
      %855 = vmatpush1.bf16.xpose.msra.mxu0 %v838
      %856 = vmatprep.subr.bf16.mxu0 0
      %857 = vmatpush2.bf16.xpose.msra.mxu0 0
      %858 = vmatprep.subr.bf16.mxu0 0
      %859 = vmatpush2.bf16.xpose.msra.mxu0 0
      %860 = vmatprep.subr.bf16.mxu0 0
      %861 = vmatpush2.bf16.xpose.msra.mxu0 0
      %862 = vmatprep.subr.bf16.mxu0 0
      %863 = vmatpush2.bf16.xpose.msra.mxu0 0
      %864 = vmatprep.subr.bf16.mxu0 0
      %865 = vmatpush2.bf16.xpose.msra.mxu0 0
      %866 = vmatprep.subr.bf16.mxu0 0
      %867 = vmatpush2.bf16.xpose.msra.mxu0 0
      %868 = vmatprep.subr.bf16.mxu0 0
      %869 = vmatpush2.bf16.xpose.msra.mxu0 0
      %870 = vmatprep.subr.bf16.mxu0 0
      %871 = vmatpush2.bf16.xpose.msra.mxu0 0
      %872 = vmatprep.mubr.bf16.mxu0 0
      %873 = vmatmul.mubr.bf16.gmra.mxu0 %v835
      %v874 = vpop.f32.mrf.mxu0
      %v875 = vadd.f32 0.0, %v874
      %v876 = vpop.f32.mrf.mxu0
      %v877 = vpop.f32.mrf.mxu0
      %v878 = vadd.f32 0.0, %v877
      %v879 = vpop.f32.mrf.mxu0
      %880 = vdwg.mxu0
      %v881 = vsel %vm594, %v875, -inf
      %882 = vmax.xlane.f32.xlu0 %v881
      %v883 = vpop.xlane.xlu0 %882
      %v884 = vsel %vm594, %v878, -inf
      %885 = vmax.xlane.f32.xlu0 %v884
      %v886 = vpop.xlane.xlu0 %885
      %v887 = vsub.f32 %v875, %v883
      %v888 = vsub.f32 %v878, %v886
      %v889 = vmul.f32 %v887, 1.442695
      %v890 = vpow.pop %v889
      %v891 = vmul.f32 %v888, 1.442695
      %v892 = vpow.pop %v891
      %v893 = vsel %vm594, %v890, 0.0
      %894 = vadd.xlane.f32.xlu0 %v893
      %v895 = vpop.xlane.xlu0 %894
      %v896 = vsel %vm594, %v892, 0.0
      %897 = vadd.xlane.f32.xlu0 %v896
      %v898 = vpop.xlane.xlu0 %897
      %v899 = vrcp.pop %v895
      %v900 = vrcp.pop %v898
      %v901 = vmul.f32 %v890, %v899
      %v902 = vmul.f32 %v892, %v900
      %v903 = vsel %vm594, %v901, -inf
      %904 = vmax.xlane.f32.xlu0 %v903
      %v905 = vpop.xlane.xlu0 %904
      %v906 = vsel %vm594, %v902, -inf
      %907 = vmax.xlane.f32.xlu0 %v906
      %v908 = vpop.xlane.xlu0 %907
      %v909 = vsub.f32 %v901, %v905
      %v910 = vsub.f32 %v902, %v908
      %v911 = vmul.f32 %v909, 1.442695
      %v912 = vpow.pop %v911
      %v913 = vmul.f32 %v910, 1.442695
      %v914 = vpow.pop %v913
      %v915 = vsel %vm594, %v912, 0.0
      %916 = vadd.xlane.f32.xlu0 %v915
      %v917 = vpop.xlane.xlu0 %916
      %v918 = vsel %vm594, %v914, 0.0
      %919 = vadd.xlane.f32.xlu0 %v918
      %v920 = vpop.xlane.xlu0 %919
      %v921 = vrcp.pop %v917
      %v922 = vrcp.pop %v920
      %v923 = vmul.f32 %v912, %v921
      %v924 = vmul.f32 %v914, %v922
      %v925 = vpack.c.bf16 %v924, %v923
      %926 = vrot.lane.b32.xlu0 %v545, 64
      %v927 = vpop.permute.xlu0 %926
      %v930 = vsel %vm594, %v925, 0
      %932 = vmatprep.subr.bf16.mxu0 0
      %933 = vmatpush1.bf16.msra.mxu0 0
      %934 = vmatprep.subr.bf16.mxu0 0
      %935 = vmatpush1.bf16.msra.mxu0 0
      %936 = vmatprep.subr.bf16.mxu0 0
      %937 = vmatpush1.bf16.msra.mxu0 0
      %938 = vmatprep.subr.bf16.mxu0 0
      %939 = vmatpush1.bf16.msra.mxu0 0
      %940 = vmatprep.subr.bf16.mxu0 0
      %941 = vmatpush1.bf16.msra.mxu0 0
      %942 = vmatprep.subr.bf16.mxu0 0
      %943 = vmatpush1.bf16.msra.mxu0 0
      %944 = vmatprep.subr.bf16.mxu0 0
      %945 = vmatpush1.bf16.msra.mxu0 0
      %946 = vmatprep.subr.bf16.mxu0 0
      %947 = vmatpush1.bf16.msra.mxu0 %v927
      %948 = vmatprep.subr.bf16.mxu0 0
      %949 = vmatpush2.bf16.msra.mxu0 0
      %950 = vmatprep.subr.bf16.mxu0 0
      %951 = vmatpush2.bf16.msra.mxu0 0
      %952 = vmatprep.subr.bf16.mxu0 0
      %953 = vmatpush2.bf16.msra.mxu0 0
      %954 = vmatprep.subr.bf16.mxu0 0
      %955 = vmatpush2.bf16.msra.mxu0 0
      %956 = vmatprep.subr.bf16.mxu0 0
      %957 = vmatpush2.bf16.msra.mxu0 0
      %958 = vmatprep.subr.bf16.mxu0 0
      %959 = vmatpush2.bf16.msra.mxu0 0
      %960 = vmatprep.subr.bf16.mxu0 0
      %961 = vmatpush2.bf16.msra.mxu0 0
      %962 = vmatprep.subr.bf16.mxu0 0
      %963 = vmatpush2.bf16.msra.mxu0 0
      %964 = vmatprep.mubr.bf16.mxu0 0
      %965 = vmatmul.mubr.bf16.gmra.mxu0 %v930
      %v966 = vpop.f32.mrf.mxu0
      %v967 = vadd.f32 0.0, %v966
      %v968 = vpop.f32.mrf.mxu0
      %v969 = vpop.f32.mrf.mxu0
      %v970 = vadd.f32 0.0, %v969
      %v971 = vpop.f32.mrf.mxu0
      %972 = vdwg.mxu0
      %973 = vrot.lane.b32.xlu0 %v543, 32
      %v974 = vpop.permute.xlu0 %973
      %975 = vrot.lane.b32.xlu0 %v544, 32
      %v976 = vpop.permute.xlu0 %975
      %v978 = vsel %vm546, %v974, 0
      %v981 = vsel %vm546, %v976, 0
      %983 = vmatprep.subr.bf16.mxu0 0
      %984 = vmatpush1.bf16.xpose.msra.mxu0 0
      %985 = vmatprep.subr.bf16.mxu0 0
      %986 = vmatpush1.bf16.xpose.msra.mxu0 0
      %987 = vmatprep.subr.bf16.mxu0 0
      %988 = vmatpush1.bf16.xpose.msra.mxu0 0
      %989 = vmatprep.subr.bf16.mxu0 0
      %990 = vmatpush1.bf16.xpose.msra.mxu0 0
      %991 = vmatprep.subr.bf16.mxu0 0
      %992 = vmatpush1.bf16.xpose.msra.mxu0 0
      %993 = vmatprep.subr.bf16.mxu0 0
      %994 = vmatpush1.bf16.xpose.msra.mxu0 0
      %995 = vmatprep.subr.bf16.mxu0 0
      %996 = vmatpush1.bf16.xpose.msra.mxu0 0
      %997 = vmatprep.subr.bf16.mxu0 0
      %998 = vmatpush1.bf16.xpose.msra.mxu0 %v981
      %999 = vmatprep.subr.bf16.mxu0 0
      %1000 = vmatpush2.bf16.xpose.msra.mxu0 0
      %1001 = vmatprep.subr.bf16.mxu0 0
      %1002 = vmatpush2.bf16.xpose.msra.mxu0 0
      %1003 = vmatprep.subr.bf16.mxu0 0
      %1004 = vmatpush2.bf16.xpose.msra.mxu0 0
      %1005 = vmatprep.subr.bf16.mxu0 0
      %1006 = vmatpush2.bf16.xpose.msra.mxu0 0
      %1007 = vmatprep.subr.bf16.mxu0 0
      %1008 = vmatpush2.bf16.xpose.msra.mxu0 0
      %1009 = vmatprep.subr.bf16.mxu0 0
      %1010 = vmatpush2.bf16.xpose.msra.mxu0 0
      %1011 = vmatprep.subr.bf16.mxu0 0
      %1012 = vmatpush2.bf16.xpose.msra.mxu0 0
      %1013 = vmatprep.subr.bf16.mxu0 0
      %1014 = vmatpush2.bf16.xpose.msra.mxu0 0
      %1015 = vmatprep.mubr.bf16.mxu0 0
      %1016 = vmatmul.mubr.bf16.gmra.mxu0 %v978
      %v1017 = vpop.f32.mrf.mxu0
      %v1018 = vadd.f32 0.0, %v1017
      %v1019 = vpop.f32.mrf.mxu0
      %v1020 = vpop.f32.mrf.mxu0
      %v1021 = vadd.f32 0.0, %v1020
      %v1022 = vpop.f32.mrf.mxu0
      %1023 = vdwg.mxu0
      %v1024 = vsel %vm594, %v1018, -inf
      %1025 = vmax.xlane.f32.xlu0 %v1024
      %v1026 = vpop.xlane.xlu0 %1025
      %v1027 = vsel %vm594, %v1021, -inf
      %1028 = vmax.xlane.f32.xlu0 %v1027
      %v1029 = vpop.xlane.xlu0 %1028
      %v1030 = vsub.f32 %v1018, %v1026
      %v1031 = vsub.f32 %v1021, %v1029
      %v1032 = vmul.f32 %v1030, 1.442695
      %v1033 = vpow.pop %v1032
      %v1034 = vmul.f32 %v1031, 1.442695
      %v1035 = vpow.pop %v1034
      %v1036 = vsel %vm594, %v1033, 0.0
      %1037 = vadd.xlane.f32.xlu0 %v1036
      %v1038 = vpop.xlane.xlu0 %1037
      %v1039 = vsel %vm594, %v1035, 0.0
      %1040 = vadd.xlane.f32.xlu0 %v1039
      %v1041 = vpop.xlane.xlu0 %1040
      %v1042 = vrcp.pop %v1038
      %v1043 = vrcp.pop %v1041
      %v1044 = vmul.f32 %v1033, %v1042
      %v1045 = vmul.f32 %v1035, %v1043
      %v1046 = vsel %vm594, %v1044, -inf
      %1047 = vmax.xlane.f32.xlu0 %v1046
      %v1048 = vpop.xlane.xlu0 %1047
      %v1049 = vsel %vm594, %v1045, -inf
      %1050 = vmax.xlane.f32.xlu0 %v1049
      %v1051 = vpop.xlane.xlu0 %1050
      %v1052 = vsub.f32 %v1044, %v1048
      %v1053 = vsub.f32 %v1045, %v1051
      %v1054 = vmul.f32 %v1052, 1.442695
      %v1055 = vpow.pop %v1054
      %v1056 = vmul.f32 %v1053, 1.442695
      %v1057 = vpow.pop %v1056
      %v1058 = vsel %vm594, %v1055, 0.0
      %1059 = vadd.xlane.f32.xlu0 %v1058
      %v1060 = vpop.xlane.xlu0 %1059
      %v1061 = vsel %vm594, %v1057, 0.0
      %1062 = vadd.xlane.f32.xlu0 %v1061
      %v1063 = vpop.xlane.xlu0 %1062
      %v1064 = vrcp.pop %v1060
      %v1065 = vrcp.pop %v1063
      %v1066 = vmul.f32 %v1055, %v1064
      %v1067 = vmul.f32 %v1057, %v1065
      %v1068 = vpack.c.bf16 %v1067, %v1066
      %1069 = vrot.lane.b32.xlu0 %v545, 32
      %v1070 = vpop.permute.xlu0 %1069
      %v1073 = vsel %vm594, %v1068, 0
      %1075 = vmatprep.subr.bf16.mxu0 0
      %1076 = vmatpush1.bf16.msra.mxu0 0
      %1077 = vmatprep.subr.bf16.mxu0 0
      %1078 = vmatpush1.bf16.msra.mxu0 0
      %1079 = vmatprep.subr.bf16.mxu0 0
      %1080 = vmatpush1.bf16.msra.mxu0 0
      %1081 = vmatprep.subr.bf16.mxu0 0
      %1082 = vmatpush1.bf16.msra.mxu0 0
      %1083 = vmatprep.subr.bf16.mxu0 0
      %1084 = vmatpush1.bf16.msra.mxu0 0
      %1085 = vmatprep.subr.bf16.mxu0 0
      %1086 = vmatpush1.bf16.msra.mxu0 0
      %1087 = vmatprep.subr.bf16.mxu0 0
      %1088 = vmatpush1.bf16.msra.mxu0 0
      %1089 = vmatprep.subr.bf16.mxu0 0
      %1090 = vmatpush1.bf16.msra.mxu0 %v1070
      %1091 = vmatprep.subr.bf16.mxu0 0
      %1092 = vmatpush2.bf16.msra.mxu0 0
      %1093 = vmatprep.subr.bf16.mxu0 0
      %1094 = vmatpush2.bf16.msra.mxu0 0
      %1095 = vmatprep.subr.bf16.mxu0 0
      %1096 = vmatpush2.bf16.msra.mxu0 0
      %1097 = vmatprep.subr.bf16.mxu0 0
      %1098 = vmatpush2.bf16.msra.mxu0 0
      %1099 = vmatprep.subr.bf16.mxu0 0
      %1100 = vmatpush2.bf16.msra.mxu0 0
      %1101 = vmatprep.subr.bf16.mxu0 0
      %1102 = vmatpush2.bf16.msra.mxu0 0
      %1103 = vmatprep.subr.bf16.mxu0 0
      %1104 = vmatpush2.bf16.msra.mxu0 0
      %1105 = vmatprep.subr.bf16.mxu0 0
      %1106 = vmatpush2.bf16.msra.mxu0 0
      %1107 = vmatprep.mubr.bf16.mxu0 0
      %1108 = vmatmul.mubr.bf16.gmra.mxu0 %v1073
      %v1109 = vpop.f32.mrf.mxu0
      %v1110 = vadd.f32 0.0, %v1109
      %v1111 = vpop.f32.mrf.mxu0
      %v1112 = vpop.f32.mrf.mxu0
      %v1113 = vadd.f32 0.0, %v1112
      %v1114 = vpop.f32.mrf.mxu0
      %1115 = vdwg.mxu0
      %1118 = vrot.lane.b32.xlu0 %v824, 32
      %v1119 = vpop.permute.xlu0 %1118
      %1120 = vrot.lane.b32.xlu0 %v827, 32
      %v1121 = vpop.permute.xlu0 %1120
      %1126 = vrot.lane.b32.xlu0 %v967, 64
      %v1127 = vpop.permute.xlu0 %1126
      %1128 = vrot.lane.b32.xlu0 %v970, 64
      %v1129 = vpop.permute.xlu0 %1128
      %1134 = vrot.lane.b32.xlu0 %v1110, 96
      %v1135 = vpop.permute.xlu0 %1134
      %1136 = vrot.lane.b32.xlu0 %v1113, 96
      %v1137 = vpop.permute.xlu0 %1136
      %v1140 = vsel %vm546, %v678, %v1119
      %v1141 = vsel %vm546, %v681, %v1121
      %vm1142 = vcmask 523264
      %v1143 = vsel %vm1142, %v1140, %v1127
      %v1144 = vsel %vm1142, %v1141, %v1129
      %vm1145 = vcmask 785408
      %v1146 = vsel %vm1145, %v1143, %v1135
      %v1147 = vsel %vm1145, %v1144, %v1137
      %v1148 = vpack.c.bf16 %v1147, %v1146
      %v1149 = vld [vmem:[%s4] sm:$0xf]
      %v1150 = vld [vmem:[%s4 + $0x4] sm:$0xf]
      %v1151 = vld [vmem:[%s4 + $0x8] sm:$0xf]
      %v1152 = vld [vmem:[%s4 + $0xc] sm:$0xf]
      %v1153 = vld [vmem:[%s4 + $0x10] sm:$0xf]
      %v1154 = vld [vmem:[%s4 + $0x14] sm:$0xf]
      %v1155 = vld [vmem:[%s4 + $0x18] sm:$0xf]
      %v1156 = vld [vmem:[%s4 + $0x1c] sm:$0xf]
      %v1157 = vld [vmem:[%s4 + $0x20] sm:$0xf]
      %v1158 = vld [vmem:[%s4 + $0x24] sm:$0xf]
      %v1159 = vld [vmem:[%s4 + $0x28] sm:$0xf]
      %v1160 = vld [vmem:[%s4 + $0x2c] sm:$0xf]
      %v1161 = vld [vmem:[%s4 + $0x30] sm:$0xf]
      %v1162 = vld [vmem:[%s4 + $0x34] sm:$0xf]
      %v1163 = vld [vmem:[%s4 + $0x38] sm:$0xf]
      %v1164 = vld [vmem:[%s4 + $0x3c] sm:$0xf]
      %v1165 = vld [vmem:[%s5] sm:$0x1]
      %v1167 = vlaneseq
      %v1168 = vshrl.u32 %v1167, 7
      %v1169 = vsub.s32 0, %v1168
      %v1170 = vrot.slane %v1165, %v1169
      %v1188 = vunpack.c.l.b16 %v1149
      %v1189 = vunpack.c.l.b16 %v1150
      %v1190 = vunpack.c.l.b16 %v1151
      %v1191 = vunpack.c.l.b16 %v1152
      %v1192 = vunpack.c.l.b16 %v1153
      %v1193 = vunpack.c.l.b16 %v1154
      %v1194 = vunpack.c.l.b16 %v1155
      %v1195 = vunpack.c.l.b16 %v1156
      %v1196 = vunpack.c.l.b16 %v1157
      %v1197 = vunpack.c.l.b16 %v1158
      %v1198 = vunpack.c.l.b16 %v1159
      %v1199 = vunpack.c.l.b16 %v1160
      %v1200 = vunpack.c.l.b16 %v1161
      %v1201 = vunpack.c.l.b16 %v1162
      %v1202 = vunpack.c.l.b16 %v1163
      %v1203 = vunpack.c.l.b16 %v1164
      %v1204 = vpack.c.b16 %v1189, %v1188
      %v1205 = vpack.c.b16 %v1191, %v1190
      %v1206 = vpack.c.b16 %v1193, %v1192
      %v1207 = vpack.c.b16 %v1195, %v1194
      %v1208 = vpack.c.b16 %v1197, %v1196
      %v1209 = vpack.c.b16 %v1199, %v1198
      %v1210 = vpack.c.b16 %v1201, %v1200
      %v1211 = vpack.c.b16 %v1203, %v1202
      %1220 = vmatprep.subr.bf16.mxu0 0
      %1221 = vmatpush1.bf16.msra.mxu0 %v1211
      %1222 = vmatprep.subr.bf16.mxu0 0
      %1223 = vmatpush1.bf16.msra.mxu0 %v1210
      %1224 = vmatprep.subr.bf16.mxu0 0
      %1225 = vmatpush1.bf16.msra.mxu0 %v1209
      %1226 = vmatprep.subr.bf16.mxu0 0
      %1227 = vmatpush1.bf16.msra.mxu0 %v1208
      %1228 = vmatprep.subr.bf16.mxu0 0
      %1229 = vmatpush1.bf16.msra.mxu0 %v1207
      %1230 = vmatprep.subr.bf16.mxu0 0
      %1231 = vmatpush1.bf16.msra.mxu0 %v1206
      %1232 = vmatprep.subr.bf16.mxu0 0
      %1233 = vmatpush1.bf16.msra.mxu0 %v1205
      %1234 = vmatprep.subr.bf16.mxu0 0
      %1235 = vmatpush1.bf16.msra.mxu0 %v1204
      %1236 = vmatprep.subr.bf16.mxu0 0
      %1237 = vmatpush2.bf16.msra.mxu0 0
      %1238 = vmatprep.subr.bf16.mxu0 0
      %1239 = vmatpush2.bf16.msra.mxu0 0
      %1240 = vmatprep.subr.bf16.mxu0 0
      %1241 = vmatpush2.bf16.msra.mxu0 0
      %1242 = vmatprep.subr.bf16.mxu0 0
      %1243 = vmatpush2.bf16.msra.mxu0 0
      %1244 = vmatprep.subr.bf16.mxu0 0
      %1245 = vmatpush2.bf16.msra.mxu0 0
      %1246 = vmatprep.subr.bf16.mxu0 0
      %1247 = vmatpush2.bf16.msra.mxu0 0
      %1248 = vmatprep.subr.bf16.mxu0 0
      %1249 = vmatpush2.bf16.msra.mxu0 0
      %1250 = vmatprep.subr.bf16.mxu0 0
      %1251 = vmatpush2.bf16.msra.mxu0 0
      %1252 = vmatprep.mubr.bf16.mxu0 0
      %1253 = vmatmul.mubr.bf16.gmra.mxu0 %v1148
      %v1254 = vpop.f32.mrf.mxu0
      %v1255 = vadd.f32 %v1170, %v1254
      %v1256 = vpop.f32.mrf.mxu0
      %v1257 = vpop.f32.mrf.mxu0
      %v1258 = vadd.f32 %v1170, %v1257
      %v1259 = vpop.f32.mrf.mxu0
      %1260 = vdwg.mxu0
      %v1261 = vadd.f32 %v253, %v1255
      %v1262 = vadd.f32 %v254, %v1258
      %1263 = vst [vmem:[%s251] sm:$0xff] %v1261
      %1264 = vst [vmem:[%s251 + $0x8] sm:$0xff] %v1262
      %p1265 = scmp.lt.s32.totalorder %s17, 1
      %s1266 = scalar_select %p1265, %s17, 1
      %s1267 = smul.addr %s1266, 2
      %s1268 = smul.addr %s1267, 8
      %s1269 = scalar_lea.vmem %s6, %s1268
      // Predicated region
      $region45: #{transformer_forward.6} parent=43 // pred_check
        %p1270 = pneg %p166
      $region46: #{transformer_forward.6} parent=43 // pred_check_branch
        %1272 = sbr.rel (%p1270) target = $region48
      $region47: #{transformer_forward.6} parent=43 // pred_region
        _
      $region48: #{transformer_forward.6} parent=43 // pred_fallthru
        _
    $region44: #{transformer_forward.6} parent=5 // pred_fallthru
      _
    %p1273 = scmp.le.s32.totalorder 2, %s12
    // Predicated region
    $region49: #{transformer_forward.6} parent=5 // pred_check
      %p1274 = pneg %p1273
    $region50: #{transformer_forward.6} parent=5 // pred_check_branch
      %1276 = sbr.rel (%p1274) target = $region52
    $region51: #{transformer_forward.6} parent=5 // pred_region
      %s1277 = ssub.s32 %s12, 2
      // Predicated region
      $region53: #{transformer_forward.6} parent=51 // pred_check
        %p1278 = pneg %p172
      $region54: #{transformer_forward.6} parent=51 // pred_check_branch
        %1280 = sbr.rel (%p1278) target = $region56
      $region55: #{transformer_forward.6} parent=51 // pred_region
        %p1281 = scmp.lt.s32.totalorder %s18, 1
        %s1282 = scalar_select %p1281, %s18, 1
        %s1283 = smul.addr %s1282, 2
        %s1284 = smul.addr %s1283, 8
        %s1285 = scalar_lea.vmem %s6, %s1284
      $region56: #{transformer_forward.6} parent=51 // pred_fallthru
        _
    $region52: #{transformer_forward.6} parent=5 // pred_fallthru
      _
  $region6: #{transformer_forward.6} parent=0 // loop_footer
    %s16 = sadd.s32 1, %s12
  $region7: #{transformer_forward.6} parent=0 // loop_footer_branch
    %11 = sbr.rel target = $region3
  $region8: #{transformer_forward.6} parent=0 // loop_exit
    _

// kernel: transformer_forward.4
$region0: #{transformer_forward.4}
  #allocation0 [shape = 'u32[]', space=smem, size = 0x4, offset = 0x4, fixed_abs, tag = 'smem constant byte address 0x4 - core index']
  #allocation1 [shape = 'u32[144,128]{1,0:T(1,128)}', space=vmem, size = 0x12000, scoped, tag = 'internal scratch']
  %s0 = inlined_call_operand.hbm [shape: f32[2,16,128], index: 0, kind: input, shape index: {}]
  %s1 = inlined_call_operand.vmem [shape: f32[1,128], index: 1, kind: input, shape index: {}]
  %s2 = inlined_call_operand.vmem [shape: f32[1,128], index: 2, kind: input, shape index: {}]
  %s3 = inlined_call_operand.hbm [shape: bf16[128,384], index: 3, kind: input, shape index: {}]
  %s4 = inlined_call_operand.hbm [shape: bf16[128,128], index: 4, kind: input, shape index: {}]
  %s5 = inlined_call_operand.hbm [shape: f32[1,128], index: 5, kind: input, shape index: {}]
  %s6 = inlined_call_operand.vmem [shape: f32[2,16,128], index: 6, kind: output, shape index: {}]
  %s7 = sld [smem:[#allocation0]]
  $region73: #{transformer_forward.4} parent=0
    _
  %s9 = ssub.s32 1, %s7
  %s10 = scalar_select 0, %s9, %s7
  $region1: #{transformer_forward.4} parent=0
    #allocation2 [shape = 'u8[16384]{0}', space=vmem, size = 0x4000, scoped, tag = 'input window, operand 0']
    #allocation3 [shape = 's32[2]{0}', space=sflag, size = 0x8, scoped, tag = 'scoped memory for transformer_forward.4']
    #allocation4 [shape = 'u8[98304]{0}', space=vmem, size = 0x18000, scoped, tag = 'input window, operand 3, single buffered']
    #allocation5 [shape = 's32[1]{0}', space=sflag, size = 0x4, scoped, tag = 'scoped memory for transformer_forward.4']
    #allocation6 [shape = 'u8[32768]{0}', space=vmem, size = 0x8000, scoped, tag = 'input window, operand 4, single buffered']
    #allocation7 [shape = 'u8[512]{0}', space=vmem, size = 0x400, scoped, tag = 'input window, operand 5, single buffered']
    #allocation8 [shape = 's32[1]{0}', space=sflag, size = 0x4, scoped, tag = 'scoped memory for transformer_forward.4']
    %11 = vsyncpa [#allocation3], 0
    %s12 = scalar_lea.sflag [#allocation3], 1
    %13 = vsyncpa %s12, 0
    %14 = vsyncpa [#allocation5], 0
    %15 = vsyncpa [#allocation8], 0
    loop: start=0, step=1, limit=4
    $region2: #{transformer_forward.4} parent=1 // loop_pre_header
      _
    $region3: #{transformer_forward.4} parent=1 // loop_header
      %s17 = sphi 0, %s21
      %p18 = scmp.ge.s32.totalorder %s17, 4
      %s27 = sphi 0, %s29
      %s30 = sphi 0, %s27
      %s31 = sphi 0, %s30
      %s47 = sphi 0, %s31
      %s51 = sphi 0, %s51
      %s53 = sphi 0, %s51
      %s54 = sphi 0, %s53
      %s68 = sphi 0, %s54
      %s72 = sphi 0, %s72
      %s74 = sphi 0, %s72
      %s75 = sphi 0, %s74
      %s89 = sphi 0, %s75
      %s93 = sphi 0, %s93
      %s95 = sphi 0, %s93
      %s96 = sphi 0, %s95
      %s110 = sphi 0, %s96
      %s114 = sphi 0, %s114
      %s116 = sphi 0, %s114
      %s117 = sphi 0, %s116
      %s131 = sphi 0, %s117
      %s135 = sphi 0, %s135
      %s137 = sphi 0, %s135
      %s138 = sphi 0, %s137
      %s152 = sphi 0, %s138
      %s158 = sphi 0, %s160
      %s161 = sphi 0, %s158
      %s162 = sphi 0, %s161
      %s178 = sphi 0, %s162
    $region4: #{transformer_forward.4} parent=1 // loop_header_branch
      %20 = sbr.rel (%p18) target = $region8
    $region5: #{transformer_forward.4} parent=1 // loop_body
      %s22 = ssub.s32 %s17, 1
      %s23 = ssub.s32 %s17, 2
      %s24 = sadd.s32 %s17, 1
      %s25 = ssub.s32 %s17, %s24
      %p26 = scmp.eq.s32.totalorder %s25, 0
      %s28 = sadd.s32 %s27, 1
      %s29 = scalar_select %p26, %s27, %s28
      %p32 = pneg %p26
      %p33 = scmp.eq.s32.totalorder %s17, 1
      %p34 = por %p32, %p33
      %p35 = scmp.ne.s32.totalorder %s27, %s30
      %p36 = scmp.eq.s32.totalorder %s17, 0
      %p37 = por %p35, %p36
      %p38 = scmp.ne.s32.totalorder %s27, %s30
      %p39 = scmp.eq.s32.totalorder %s22, 1
      %p40 = por %p38, %p39
      %p41 = scmp.ne.s32.totalorder %s30, %s31
      %p42 = scmp.eq.s32.totalorder %s22, 0
      %p43 = por %p41, %p42
      %p44 = scmp.ne.s32.totalorder %s30, %s31
      %p45 = scmp.eq.s32.totalorder %s23, 1
      %p46 = por %p44, %p45
      %p48 = scmp.ne.s32.totalorder %s31, %s47
      %p49 = scmp.eq.s32.totalorder %s23, 0
      %p50 = por %p48, %p49
      %s52 = sadd.s32 %s51, 1
      %p55 = scmp.eq.s32.totalorder %s17, 1
      %p56 = scmp.ne.s32.totalorder %s51, %s53
      %p57 = scmp.eq.s32.totalorder %s17, 0
      %p58 = por %p56, %p57
      %p59 = scmp.ne.s32.totalorder %s51, %s53
      %p60 = scmp.eq.s32.totalorder %s22, 1
      %p61 = por %p59, %p60
      %p62 = scmp.ne.s32.totalorder %s53, %s54
      %p63 = scmp.eq.s32.totalorder %s22, 0
      %p64 = por %p62, %p63
      %p65 = scmp.ne.s32.totalorder %s53, %s54
      %p66 = scmp.eq.s32.totalorder %s23, 1
      %p67 = por %p65, %p66
      %p69 = scmp.ne.s32.totalorder %s54, %s68
      %p70 = scmp.eq.s32.totalorder %s23, 0
      %p71 = por %p69, %p70
      %s73 = sadd.s32 %s72, 1
      %p76 = scmp.eq.s32.totalorder %s17, 1
      %p77 = scmp.ne.s32.totalorder %s72, %s74
      %p78 = scmp.eq.s32.totalorder %s17, 0
      %p79 = por %p77, %p78
      %p80 = scmp.ne.s32.totalorder %s72, %s74
      %p81 = scmp.eq.s32.totalorder %s22, 1
      %p82 = por %p80, %p81
      %p83 = scmp.ne.s32.totalorder %s74, %s75
      %p84 = scmp.eq.s32.totalorder %s22, 0
      %p85 = por %p83, %p84
      %p86 = scmp.ne.s32.totalorder %s74, %s75
      %p87 = scmp.eq.s32.totalorder %s23, 1
      %p88 = por %p86, %p87
      %p90 = scmp.ne.s32.totalorder %s75, %s89
      %p91 = scmp.eq.s32.totalorder %s23, 0
      %p92 = por %p90, %p91
      %s94 = sadd.s32 %s93, 1
      %p97 = scmp.eq.s32.totalorder %s17, 1
      %p98 = scmp.ne.s32.totalorder %s93, %s95
      %p99 = scmp.eq.s32.totalorder %s17, 0
      %p100 = por %p98, %p99
      %p101 = scmp.ne.s32.totalorder %s93, %s95
      %p102 = scmp.eq.s32.totalorder %s22, 1
      %p103 = por %p101, %p102
      %p104 = scmp.ne.s32.totalorder %s95, %s96
      %p105 = scmp.eq.s32.totalorder %s22, 0
      %p106 = por %p104, %p105
      %p107 = scmp.ne.s32.totalorder %s95, %s96
      %p108 = scmp.eq.s32.totalorder %s23, 1
      %p109 = por %p107, %p108
      %p111 = scmp.ne.s32.totalorder %s96, %s110
      %p112 = scmp.eq.s32.totalorder %s23, 0
      %p113 = por %p111, %p112
      %s115 = sadd.s32 %s114, 1
      %p118 = scmp.eq.s32.totalorder %s17, 1
      %p119 = scmp.ne.s32.totalorder %s114, %s116
      %p120 = scmp.eq.s32.totalorder %s17, 0
      %p121 = por %p119, %p120
      %p122 = scmp.ne.s32.totalorder %s114, %s116
      %p123 = scmp.eq.s32.totalorder %s22, 1
      %p124 = por %p122, %p123
      %p125 = scmp.ne.s32.totalorder %s116, %s117
      %p126 = scmp.eq.s32.totalorder %s22, 0
      %p127 = por %p125, %p126
      %p128 = scmp.ne.s32.totalorder %s116, %s117
      %p129 = scmp.eq.s32.totalorder %s23, 1
      %p130 = por %p128, %p129
      %p132 = scmp.ne.s32.totalorder %s117, %s131
      %p133 = scmp.eq.s32.totalorder %s23, 0
      %p134 = por %p132, %p133
      %s136 = sadd.s32 %s135, 1
      %p139 = scmp.eq.s32.totalorder %s17, 1
      %p140 = scmp.ne.s32.totalorder %s135, %s137
      %p141 = scmp.eq.s32.totalorder %s17, 0
      %p142 = por %p140, %p141
      %p143 = scmp.ne.s32.totalorder %s135, %s137
      %p144 = scmp.eq.s32.totalorder %s22, 1
      %p145 = por %p143, %p144
      %p146 = scmp.ne.s32.totalorder %s137, %s138
      %p147 = scmp.eq.s32.totalorder %s22, 0
      %p148 = por %p146, %p147
      %p149 = scmp.ne.s32.totalorder %s137, %s138
      %p150 = scmp.eq.s32.totalorder %s23, 1
      %p151 = por %p149, %p150
      %p153 = scmp.ne.s32.totalorder %s138, %s152
      %p154 = scmp.eq.s32.totalorder %s23, 0
      %p155 = por %p153, %p154
      %s156 = ssub.s32 %s17, %s24
      %p157 = scmp.eq.s32.totalorder %s156, 0
      %s159 = sadd.s32 %s158, 1
      %s160 = scalar_select %p157, %s158, %s159
      %p163 = pneg %p157
      %p164 = scmp.eq.s32.totalorder %s17, 1
      %p165 = por %p163, %p164
      %p166 = scmp.ne.s32.totalorder %s158, %s161
      %p167 = scmp.eq.s32.totalorder %s17, 0
      %p168 = por %p166, %p167
      %p169 = scmp.ne.s32.totalorder %s158, %s161
      %p170 = scmp.eq.s32.totalorder %s22, 1
      %p171 = por %p169, %p170
      %p172 = scmp.ne.s32.totalorder %s161, %s162
      %p173 = scmp.eq.s32.totalorder %s22, 0
      %p174 = por %p172, %p173
      %p175 = scmp.ne.s32.totalorder %s161, %s162
      %p176 = scmp.eq.s32.totalorder %s23, 1
      %p177 = por %p175, %p176
      %p179 = scmp.ne.s32.totalorder %s162, %s178
      %p180 = scmp.eq.s32.totalorder %s23, 0
      %p181 = por %p179, %p180
      %p182 = scmp.le.s32.totalorder 1, %s17
      %p183 = scmp.lt.s32.totalorder %s17, 3
      %p184 = pnand %p182, %p183
      %p185 = pneg %p184
      // Predicated region
      $region9: #{transformer_forward.4} parent=5 // pred_check
        _
      $region10: #{transformer_forward.4} parent=5 // pred_check_branch
        %187 = sbr.rel (%p184) target = $region12
      $region11: #{transformer_forward.4} parent=5 // pred_region
        %s188 = ssub.s32 %s17, 1
        // Predicated region
        $region13: #{transformer_forward.4} parent=11 // pred_check
          %p189 = pneg %p64
        $region14: #{transformer_forward.4} parent=11 // pred_check_branch
          %191 = sbr.rel (%p189) target = $region16
        $region15: #{transformer_forward.4} parent=11 // pred_region
          _
        $region16: #{transformer_forward.4} parent=11 // pred_fallthru
          _
        // Predicated region
        $region17: #{transformer_forward.4} parent=11 // pred_check
          %p192 = pneg %p85
        $region18: #{transformer_forward.4} parent=11 // pred_check_branch
          %194 = sbr.rel (%p192) target = $region20
        $region19: #{transformer_forward.4} parent=11 // pred_region
          _
        $region20: #{transformer_forward.4} parent=11 // pred_fallthru
          _
        // Predicated region
        $region21: #{transformer_forward.4} parent=11 // pred_check
          %p195 = pneg %p106
        $region22: #{transformer_forward.4} parent=11 // pred_check_branch
          %197 = sbr.rel (%p195) target = $region24
        $region23: #{transformer_forward.4} parent=11 // pred_region
          %s199 = ssub.s32 3072, 3072
          %200 = vsyncadd [#allocation5], %s199
          %s201 = sshll.u32 [#allocation4], 4
          %s202 = int_to_ptr.vmem [resolvable:$true] %s201
          %207 = dma.hbm_to_vmem [thread:$0]  %s3, 3072, %s202, [#allocation5], 192, 192, 12
        $region24: #{transformer_forward.4} parent=11 // pred_fallthru
          _
        // Predicated region
        $region25: #{transformer_forward.4} parent=11 // pred_check
          %p208 = pneg %p127
        $region26: #{transformer_forward.4} parent=11 // pred_check_branch
          %210 = sbr.rel (%p208) target = $region28
        $region27: #{transformer_forward.4} parent=11 // pred_region
          %s212 = ssub.s32 1024, 1024
          %213 = vsyncadd [#allocation5], %s212
          %s214 = sshll.u32 [#allocation6], 4
          %s215 = int_to_ptr.vmem [resolvable:$true] %s214
          %220 = dma.hbm_to_vmem [thread:$0]  %s4, 1024, %s215, [#allocation5], 64, 64, 4
        $region28: #{transformer_forward.4} parent=11 // pred_fallthru
          _
        // Predicated region
        $region29: #{transformer_forward.4} parent=11 // pred_check
          %p221 = pneg %p148
        $region30: #{transformer_forward.4} parent=11 // pred_check_branch
          %223 = sbr.rel (%p221) target = $region32
        $region31: #{transformer_forward.4} parent=11 // pred_region
          %s225 = ssub.s32 16, 16
          %226 = vsyncadd [#allocation8], %s225
          %s228 = sshll.u32 [#allocation7], 4
          %s229 = int_to_ptr.vmem [resolvable:$true] %s228
          %231 = dma.hbm_to_vmem [thread:$0]  %s5, 16, %s229, [#allocation8]
        $region32: #{transformer_forward.4} parent=11 // pred_fallthru
          _
      $region12: #{transformer_forward.4} parent=5 // pred_fallthru
        _
      %p232 = scmp.lt.s32.totalorder %s17, 2
      // Predicated region
      $region33: #{transformer_forward.4} parent=5 // pred_check
        %p233 = pneg %p232
      $region34: #{transformer_forward.4} parent=5 // pred_check_branch
        %235 = sbr.rel (%p233) target = $region36
      $region35: #{transformer_forward.4} parent=5 // pred_region
        // Predicated region
        $region37: #{transformer_forward.4} parent=35 // pred_check
          %p236 = pneg %p37
        $region38: #{transformer_forward.4} parent=35 // pred_check_branch
          %238 = sbr.rel (%p236) target = $region40
        $region39: #{transformer_forward.4} parent=35 // pred_region
          %s239 = sand.u32 %s27, 1
          %s240 = scalar_lea.sflag [#allocation3], %s239
          %s241 = sand.u32 %s27, 1
          %s242 = smul.addr %s241, 16
          %s243 = scalar_lea.vmem [#allocation2], %s242
          %s245 = ssub.s32 256, 256
          %246 = vsyncadd %s240, %s245
          %s247 = smul.addr %s17, 2
          %s248 = smul.addr %s247, 128
          %s249 = scalar_lea.hbm %s0, %s248
          %s250 = sshll.u32 %s243, 4
          %s251 = int_to_ptr.vmem [resolvable:$true] %s250
          %256 = dma.hbm_to_vmem [thread:$0]  %s249, 256, %s251, %s240, 128, 128, 8
        $region40: #{transformer_forward.4} parent=35 // pred_fallthru
          _
      $region36: #{transformer_forward.4} parent=5 // pred_fallthru
        _
      %p257 = scmp.le.s32.totalorder 1, %s17
      %p258 = scmp.lt.s32.totalorder %s17, 3
      %p259 = pnand %p257, %p258
      %p260 = pneg %p259
      // Predicated region
      $region41: #{transformer_forward.4} parent=5 // pred_check
        _
      $region42: #{transformer_forward.4} parent=5 // pred_check_branch
        %262 = sbr.rel (%p259) target = $region44
      $region43: #{transformer_forward.4} parent=5 // pred_region
        %s263 = ssub.s32 %s17, 1
        %s264 = sand.u32 %s30, 1
        %s265 = scalar_lea.sflag [#allocation3], %s264
        %s266 = sand.u32 %s30, 1
        %s267 = smul.addr %s266, 16
        %s268 = scalar_lea.vmem [#allocation2], %s267
        // Predicated region
        $region45: #{transformer_forward.4} parent=43 // pred_check
          %p269 = pneg %p43
        $region46: #{transformer_forward.4} parent=43 // pred_check_branch
          %271 = sbr.rel (%p269) target = $region48
        $region47: #{transformer_forward.4} parent=43 // pred_region
          %272 = dma.done %s265, 256
        $region48: #{transformer_forward.4} parent=43 // pred_fallthru
          _
        // Predicated region
        $region49: #{transformer_forward.4} parent=43 // pred_check
          %p273 = pneg %p106
        $region50: #{transformer_forward.4} parent=43 // pred_check_branch
          %275 = sbr.rel (%p273) target = $region52
        $region51: #{transformer_forward.4} parent=43 // pred_region
          %276 = dma.done [#allocation5], 3072
        $region52: #{transformer_forward.4} parent=43 // pred_fallthru
          _
        // Predicated region
        $region53: #{transformer_forward.4} parent=43 // pred_check
          %p277 = pneg %p127
        $region54: #{transformer_forward.4} parent=43 // pred_check_branch
          %279 = sbr.rel (%p277) target = $region56
        $region55: #{transformer_forward.4} parent=43 // pred_region
          %280 = dma.done [#allocation5], 1024
        $region56: #{transformer_forward.4} parent=43 // pred_fallthru
          _
        // Predicated region
        $region57: #{transformer_forward.4} parent=43 // pred_check
          %p281 = pneg %p148
        $region58: #{transformer_forward.4} parent=43 // pred_check_branch
          %283 = sbr.rel (%p281) target = $region60
        $region59: #{transformer_forward.4} parent=43 // pred_region
          %284 = dma.done [#allocation8], 16
        $region60: #{transformer_forward.4} parent=43 // pred_fallthru
          _
        %s285 = sand.u32 %s30, 1
        %s286 = scalar_lea.sflag [#allocation3], %s285
        %s287 = sand.u32 %s30, 1
        %s288 = smul.addr %s287, 16
        %s289 = scalar_lea.vmem [#allocation2], %s288
        %p290 = pneg %p43
        %p291 = pneg %p40
        %p292 = pneg %p64
        %p293 = pneg %p61
        %p294 = pneg %p85
        %p295 = pneg %p82
        %p296 = pneg %p106
        %p297 = pneg %p103
        %p298 = pneg %p127
        %p299 = pneg %p124
        %p300 = pneg %p148
        %p301 = pneg %p145
        %p302 = pneg %p174
        %p303 = pneg %p171
        %p304 = scmp.lt.s32.totalorder %s22, 1
        %s305 = scalar_select %p304, %s22, 1
        %s306 = smul.addr %s305, 2
        %s307 = smul.addr %s306, 8
        %s308 = scalar_lea.vmem %s6, %s307
        %p309 = scmp.lt.s32.totalorder %s22, 1
        %s310 = scalar_select %p309, %s22, 1
        %s311 = smul.addr %s310, 2
        %s312 = smul.addr %s311, 8
        %s313 = scalar_lea.vmem %s6, %s312
        %v315 = vld [vmem:[%s268] sm:$0xff]
        %v316 = vld [vmem:[%s268 + $0x8] sm:$0xff]
        %v317 = vld [vmem:[%s1] sm:$0x1]
        %v318 = vld [vmem:[%s2] sm:$0x1]
        %319 = vadd.xlane.f32.xlu0 %v315
        %v320 = vpop.xlane.xlu0 %319
        %321 = vadd.xlane.f32.xlu0 %v316
        %v322 = vpop.xlane.xlu0 %321
        %v323 = vrcp.pop 128.0
        %v324 = vmul.f32 %v320, %v323
        %v325 = vmul.f32 %v322, %v323
        %v326 = vsub.f32 %v315, %v324
        %v327 = vsub.f32 %v316, %v325
        %v328 = vmul.f32 %v326, %v326
        %v329 = vmul.f32 %v327, %v327
        %330 = vadd.xlane.f32.xlu0 %v328
        %v331 = vpop.xlane.xlu0 %330
        %332 = vadd.xlane.f32.xlu0 %v329
        %v333 = vpop.xlane.xlu0 %332
        %v334 = vmul.f32 %v331, %v323
        %v335 = vmul.f32 %v333, %v323
        %v336 = vadd.f32 %v334, 1e-05
        %v337 = vadd.f32 %v335, 1e-05
        %v338 = vrsqrt.pop %v336
        %v339 = vrsqrt.pop %v337
        %v340 = vmul.f32 %v326, %v338
        %v341 = vmul.f32 %v327, %v339
        %v343 = vlaneseq
        %v344 = vshrl.u32 %v343, 7
        %v345 = vsub.s32 0, %v344
        %v346 = vrot.slane %v317, %v345
        %v348 = vmul.f32 %v340, %v346
        %v349 = vmul.f32 %v341, %v346
        %v351 = vlaneseq
        %v352 = vshrl.u32 %v351, 7
        %v353 = vsub.s32 0, %v352
        %v354 = vrot.slane %v318, %v353
        %v356 = vadd.f32 %v348, %v354
        %v357 = vadd.f32 %v349, %v354
        %v358 = vpack.c.bf16 %v357, %v356
        %v359 = vld [vmem:[#allocation4] sm:$0xff]
        %v360 = vld [vmem:[#allocation4 + $0x8] sm:$0xf]
        %v361 = vld [vmem:[#allocation4 + $0xc] sm:$0xff]
        %v362 = vld [vmem:[#allocation4 + $0x14] sm:$0xf]
        %v363 = vld [vmem:[#allocation4 + $0x18] sm:$0xff]
        %v364 = vld [vmem:[#allocation4 + $0x20] sm:$0xf]
        %v365 = vld [vmem:[#allocation4 + $0x24] sm:$0xff]
        %v366 = vld [vmem:[#allocation4 + $0x2c] sm:$0xf]
        %v367 = vld [vmem:[#allocation4 + $0x30] sm:$0xff]
        %v368 = vld [vmem:[#allocation4 + $0x38] sm:$0xf]
        %v369 = vld [vmem:[#allocation4 + $0x3c] sm:$0xff]
        %v370 = vld [vmem:[#allocation4 + $0x44] sm:$0xf]
        %v371 = vld [vmem:[#allocation4 + $0x48] sm:$0xff]
        %v372 = vld [vmem:[#allocation4 + $0x50] sm:$0xf]
        %v373 = vld [vmem:[#allocation4 + $0x54] sm:$0xff]
        %v374 = vld [vmem:[#allocation4 + $0x5c] sm:$0xf]
        %v375 = vld [vmem:[#allocation4 + $0x60] sm:$0xff]
        %v376 = vld [vmem:[#allocation4 + $0x68] sm:$0xf]
        %v377 = vld [vmem:[#allocation4 + $0x6c] sm:$0xff]
        %v378 = vld [vmem:[#allocation4 + $0x74] sm:$0xf]
        %v379 = vld [vmem:[#allocation4 + $0x78] sm:$0xff]
        %v380 = vld [vmem:[#allocation4 + $0x80] sm:$0xf]
        %v381 = vld [vmem:[#allocation4 + $0x84] sm:$0xff]
        %v382 = vld [vmem:[#allocation4 + $0x8c] sm:$0xf]
        %v383 = vld [vmem:[#allocation4 + $0x90] sm:$0xff]
        %v384 = vld [vmem:[#allocation4 + $0x98] sm:$0xf]
        %v385 = vld [vmem:[#allocation4 + $0x9c] sm:$0xff]
        %v386 = vld [vmem:[#allocation4 + $0xa4] sm:$0xf]
        %v387 = vld [vmem:[#allocation4 + $0xa8] sm:$0xff]
        %v388 = vld [vmem:[#allocation4 + $0xb0] sm:$0xf]
        %v389 = vld [vmem:[#allocation4 + $0xb4] sm:$0xff]
        %v390 = vld [vmem:[#allocation4 + $0xbc] sm:$0xf]
        %v423 = vunpack.c.l.b16 %v359
        %v424 = vunpack.c.h.b16 %v359
        %v425 = vunpack.c.l.b16 %v360
        %v426 = vunpack.c.l.b16 %v361
        %v427 = vunpack.c.h.b16 %v361
        %v428 = vunpack.c.l.b16 %v362
        %v429 = vunpack.c.l.b16 %v363
        %v430 = vunpack.c.h.b16 %v363
        %v431 = vunpack.c.l.b16 %v364
        %v432 = vunpack.c.l.b16 %v365
        %v433 = vunpack.c.h.b16 %v365
        %v434 = vunpack.c.l.b16 %v366
        %v435 = vunpack.c.l.b16 %v367
        %v436 = vunpack.c.h.b16 %v367
        %v437 = vunpack.c.l.b16 %v368
        %v438 = vunpack.c.l.b16 %v369
        %v439 = vunpack.c.h.b16 %v369
        %v440 = vunpack.c.l.b16 %v370
        %v441 = vunpack.c.l.b16 %v371
        %v442 = vunpack.c.h.b16 %v371
        %v443 = vunpack.c.l.b16 %v372
        %v444 = vunpack.c.l.b16 %v373
        %v445 = vunpack.c.h.b16 %v373
        %v446 = vunpack.c.l.b16 %v374
        %v447 = vunpack.c.l.b16 %v375
        %v448 = vunpack.c.h.b16 %v375
        %v449 = vunpack.c.l.b16 %v376
        %v450 = vunpack.c.l.b16 %v377
        %v451 = vunpack.c.h.b16 %v377
        %v452 = vunpack.c.l.b16 %v378
        %v453 = vunpack.c.l.b16 %v379
        %v454 = vunpack.c.h.b16 %v379
        %v455 = vunpack.c.l.b16 %v380
        %v456 = vunpack.c.l.b16 %v381
        %v457 = vunpack.c.h.b16 %v381
        %v458 = vunpack.c.l.b16 %v382
        %v459 = vunpack.c.l.b16 %v383
        %v460 = vunpack.c.h.b16 %v383
        %v461 = vunpack.c.l.b16 %v384
        %v462 = vunpack.c.l.b16 %v385
        %v463 = vunpack.c.h.b16 %v385
        %v464 = vunpack.c.l.b16 %v386
        %v465 = vunpack.c.l.b16 %v387
        %v466 = vunpack.c.h.b16 %v387
        %v467 = vunpack.c.l.b16 %v388
        %v468 = vunpack.c.l.b16 %v389
        %v469 = vunpack.c.h.b16 %v389
        %v470 = vunpack.c.l.b16 %v390
        %v471 = vpack.c.b16 %v426, %v423
        %v472 = vpack.c.b16 %v427, %v424
        %v473 = vpack.c.b16 %v428, %v425
        %v474 = vpack.c.b16 %v432, %v429
        %v475 = vpack.c.b16 %v433, %v430
        %v476 = vpack.c.b16 %v434, %v431
        %v477 = vpack.c.b16 %v438, %v435
        %v478 = vpack.c.b16 %v439, %v436
        %v479 = vpack.c.b16 %v440, %v437
        %v480 = vpack.c.b16 %v444, %v441
        %v481 = vpack.c.b16 %v445, %v442
        %v482 = vpack.c.b16 %v446, %v443
        %v483 = vpack.c.b16 %v450, %v447
        %v484 = vpack.c.b16 %v451, %v448
        %v485 = vpack.c.b16 %v452, %v449
        %v486 = vpack.c.b16 %v456, %v453
        %v487 = vpack.c.b16 %v457, %v454
        %v488 = vpack.c.b16 %v458, %v455
        %v489 = vpack.c.b16 %v462, %v459
        %v490 = vpack.c.b16 %v463, %v460
        %v491 = vpack.c.b16 %v464, %v461
        %v492 = vpack.c.b16 %v468, %v465
        %v493 = vpack.c.b16 %v469, %v466
        %v494 = vpack.c.b16 %v470, %v467
        %519 = vmatprep.subr.bf16.mxu0 %v493
        %520 = vmatpush1.bf16.msra.mxu0 %v492
        %521 = vmatprep.subr.bf16.mxu0 %v490
        %522 = vmatpush1.bf16.msra.mxu0 %v489
        %523 = vmatprep.subr.bf16.mxu0 %v487
        %524 = vmatpush1.bf16.msra.mxu0 %v486
        %525 = vmatprep.subr.bf16.mxu0 %v484
        %526 = vmatpush1.bf16.msra.mxu0 %v483
        %527 = vmatprep.subr.bf16.mxu0 %v481
        %528 = vmatpush1.bf16.msra.mxu0 %v480
        %529 = vmatprep.subr.bf16.mxu0 %v478
        %530 = vmatpush1.bf16.msra.mxu0 %v477
        %531 = vmatprep.subr.bf16.mxu0 %v475
        %532 = vmatpush1.bf16.msra.mxu0 %v474
        %533 = vmatprep.subr.bf16.mxu0 %v472
        %534 = vmatpush1.bf16.msra.mxu0 %v471
        %535 = vmatprep.subr.bf16.mxu0 0
        %536 = vmatpush2.bf16.msra.mxu0 0
        %537 = vmatprep.subr.bf16.mxu0 0
        %538 = vmatpush2.bf16.msra.mxu0 0
        %539 = vmatprep.subr.bf16.mxu0 0
        %540 = vmatpush2.bf16.msra.mxu0 0
        %541 = vmatprep.subr.bf16.mxu0 0
        %542 = vmatpush2.bf16.msra.mxu0 0
        %543 = vmatprep.subr.bf16.mxu0 0
        %544 = vmatpush2.bf16.msra.mxu0 0
        %545 = vmatprep.subr.bf16.mxu0 0
        %546 = vmatpush2.bf16.msra.mxu0 0
        %547 = vmatprep.subr.bf16.mxu0 0
        %548 = vmatpush2.bf16.msra.mxu0 0
        %549 = vmatprep.subr.bf16.mxu0 0
        %550 = vmatpush2.bf16.msra.mxu0 0
        %551 = vmatprep.mubr.bf16.mxu0 0
        %552 = vmatmul.mubr.bf16.gmra.mxu0 %v358
        %v553 = vpop.f32.mrf.mxu0
        %v554 = vadd.f32 0.0, %v553
        %v555 = vpop.f32.mrf.mxu0
        %v556 = vadd.f32 0.0, %v555
        %v557 = vpop.f32.mrf.mxu0
        %v558 = vadd.f32 0.0, %v557
        %v559 = vpop.f32.mrf.mxu0
        %v560 = vadd.f32 0.0, %v559
        %561 = vdwg.mxu0
        %562 = vmatprep.subr.bf16.mxu0 0
        %563 = vmatpush1.bf16.msra.mxu0 %v494
        %564 = vmatprep.subr.bf16.mxu0 0
        %565 = vmatpush1.bf16.msra.mxu0 %v491
        %566 = vmatprep.subr.bf16.mxu0 0
        %567 = vmatpush1.bf16.msra.mxu0 %v488
        %568 = vmatprep.subr.bf16.mxu0 0
        %569 = vmatpush1.bf16.msra.mxu0 %v485
        %570 = vmatprep.subr.bf16.mxu0 0
        %571 = vmatpush1.bf16.msra.mxu0 %v482
        %572 = vmatprep.subr.bf16.mxu0 0
        %573 = vmatpush1.bf16.msra.mxu0 %v479
        %574 = vmatprep.subr.bf16.mxu0 0
        %575 = vmatpush1.bf16.msra.mxu0 %v476
        %576 = vmatprep.subr.bf16.mxu0 0
        %577 = vmatpush1.bf16.msra.mxu0 %v473
        %578 = vmatprep.subr.bf16.mxu0 0
        %579 = vmatpush2.bf16.msra.mxu0 0
        %580 = vmatprep.subr.bf16.mxu0 0
        %581 = vmatpush2.bf16.msra.mxu0 0
        %582 = vmatprep.subr.bf16.mxu0 0
        %583 = vmatpush2.bf16.msra.mxu0 0
        %584 = vmatprep.subr.bf16.mxu0 0
        %585 = vmatpush2.bf16.msra.mxu0 0
        %586 = vmatprep.subr.bf16.mxu0 0
        %587 = vmatpush2.bf16.msra.mxu0 0
        %588 = vmatprep.subr.bf16.mxu0 0
        %589 = vmatpush2.bf16.msra.mxu0 0
        %590 = vmatprep.subr.bf16.mxu0 0
        %591 = vmatpush2.bf16.msra.mxu0 0
        %592 = vmatprep.subr.bf16.mxu0 0
        %593 = vmatpush2.bf16.msra.mxu0 0
        %594 = vmatprep.mubr.bf16.mxu0 0
        %595 = vmatmul.mubr.bf16.gmra.mxu0 %v358
        %v596 = vpop.f32.mrf.mxu0
        %v597 = vadd.f32 0.0, %v596
        %v598 = vpop.f32.mrf.mxu0
        %v599 = vpop.f32.mrf.mxu0
        %v600 = vadd.f32 0.0, %v599
        %v601 = vpop.f32.mrf.mxu0
        %602 = vdwg.mxu0
        %v603 = vmul.f32 %v554, 0.17677669
        %v604 = vmul.f32 %v558, 0.17677669
        %v605 = vpack.c.bf16 %v604, %v603
        %v606 = vpack.c.bf16 %v560, %v556
        %v607 = vpack.c.bf16 %v600, %v597
        %vm608 = vcmask 261120
        %v610 = vsel %vm608, %v605, 0
        %v613 = vsel %vm608, %v606, 0
        %615 = vmatprep.subr.bf16.mxu0 0
        %616 = vmatpush1.bf16.xpose.msra.mxu0 0
        %617 = vmatprep.subr.bf16.mxu0 0
        %618 = vmatpush1.bf16.xpose.msra.mxu0 0
        %619 = vmatprep.subr.bf16.mxu0 0
        %620 = vmatpush1.bf16.xpose.msra.mxu0 0
        %621 = vmatprep.subr.bf16.mxu0 0
        %622 = vmatpush1.bf16.xpose.msra.mxu0 0
        %623 = vmatprep.subr.bf16.mxu0 0
        %624 = vmatpush1.bf16.xpose.msra.mxu0 0
        %625 = vmatprep.subr.bf16.mxu0 0
        %626 = vmatpush1.bf16.xpose.msra.mxu0 0
        %627 = vmatprep.subr.bf16.mxu0 0
        %628 = vmatpush1.bf16.xpose.msra.mxu0 0
        %629 = vmatprep.subr.bf16.mxu0 0
        %630 = vmatpush1.bf16.xpose.msra.mxu0 %v613
        %631 = vmatprep.subr.bf16.mxu0 0
        %632 = vmatpush2.bf16.xpose.msra.mxu0 0
        %633 = vmatprep.subr.bf16.mxu0 0
        %634 = vmatpush2.bf16.xpose.msra.mxu0 0
        %635 = vmatprep.subr.bf16.mxu0 0
        %636 = vmatpush2.bf16.xpose.msra.mxu0 0
        %637 = vmatprep.subr.bf16.mxu0 0
        %638 = vmatpush2.bf16.xpose.msra.mxu0 0
        %639 = vmatprep.subr.bf16.mxu0 0
        %640 = vmatpush2.bf16.xpose.msra.mxu0 0
        %641 = vmatprep.subr.bf16.mxu0 0
        %642 = vmatpush2.bf16.xpose.msra.mxu0 0
        %643 = vmatprep.subr.bf16.mxu0 0
        %644 = vmatpush2.bf16.xpose.msra.mxu0 0
        %645 = vmatprep.subr.bf16.mxu0 0
        %646 = vmatpush2.bf16.xpose.msra.mxu0 0
        %647 = vmatprep.mubr.bf16.mxu0 0
        %648 = vmatmul.mubr.bf16.gmra.mxu0 %v610
        %v649 = vpop.f32.mrf.mxu0
        %v650 = vadd.f32 0.0, %v649
        %v651 = vpop.f32.mrf.mxu0
        %v652 = vpop.f32.mrf.mxu0
        %v653 = vadd.f32 0.0, %v652
        %v654 = vpop.f32.mrf.mxu0
        %655 = vdwg.mxu0
        %vm656 = vcmask 130048
        %v657 = vsel %vm656, %v650, -inf
        %658 = vmax.xlane.f32.xlu0 %v657
        %v659 = vpop.xlane.xlu0 %658
        %v660 = vsel %vm656, %v653, -inf
        %661 = vmax.xlane.f32.xlu0 %v660
        %v662 = vpop.xlane.xlu0 %661
        %v663 = vsub.f32 %v650, %v659
        %v664 = vsub.f32 %v653, %v662
        %v665 = vmul.f32 %v663, 1.442695
        %v666 = vpow.pop %v665
        %v667 = vmul.f32 %v664, 1.442695
        %v668 = vpow.pop %v667
        %v669 = vsel %vm656, %v666, 0.0
        %670 = vadd.xlane.f32.xlu0 %v669
        %v671 = vpop.xlane.xlu0 %670
        %v672 = vsel %vm656, %v668, 0.0
        %673 = vadd.xlane.f32.xlu0 %v672
        %v674 = vpop.xlane.xlu0 %673
        %v675 = vrcp.pop %v671
        %v676 = vrcp.pop %v674
        %v677 = vmul.f32 %v666, %v675
        %v678 = vmul.f32 %v668, %v676
        %v679 = vsel %vm656, %v677, -inf
        %680 = vmax.xlane.f32.xlu0 %v679
        %v681 = vpop.xlane.xlu0 %680
        %v682 = vsel %vm656, %v678, -inf
        %683 = vmax.xlane.f32.xlu0 %v682
        %v684 = vpop.xlane.xlu0 %683
        %v685 = vsub.f32 %v677, %v681
        %v686 = vsub.f32 %v678, %v684
        %v687 = vmul.f32 %v685, 1.442695
        %v688 = vpow.pop %v687
        %v689 = vmul.f32 %v686, 1.442695
        %v690 = vpow.pop %v689
        %v691 = vsel %vm656, %v688, 0.0
        %692 = vadd.xlane.f32.xlu0 %v691
        %v693 = vpop.xlane.xlu0 %692
        %v694 = vsel %vm656, %v690, 0.0
        %695 = vadd.xlane.f32.xlu0 %v694
        %v696 = vpop.xlane.xlu0 %695
        %v697 = vrcp.pop %v693
        %v698 = vrcp.pop %v696
        %v699 = vmul.f32 %v688, %v697
        %v700 = vmul.f32 %v690, %v698
        %v701 = vpack.c.bf16 %v700, %v699
        %v703 = vsel %vm656, %v701, 0
        %705 = vmatprep.subr.bf16.mxu0 0
        %706 = vmatpush1.bf16.msra.mxu0 0
        %707 = vmatprep.subr.bf16.mxu0 0
        %708 = vmatpush1.bf16.msra.mxu0 0
        %709 = vmatprep.subr.bf16.mxu0 0
        %710 = vmatpush1.bf16.msra.mxu0 0
        %711 = vmatprep.subr.bf16.mxu0 0
        %712 = vmatpush1.bf16.msra.mxu0 0
        %713 = vmatprep.subr.bf16.mxu0 0
        %714 = vmatpush1.bf16.msra.mxu0 0
        %715 = vmatprep.subr.bf16.mxu0 0
        %716 = vmatpush1.bf16.msra.mxu0 0
        %717 = vmatprep.subr.bf16.mxu0 0
        %718 = vmatpush1.bf16.msra.mxu0 0
        %719 = vmatprep.subr.bf16.mxu0 0
        %720 = vmatpush1.bf16.msra.mxu0 %v607
        %721 = vmatprep.subr.bf16.mxu0 0
        %722 = vmatpush2.bf16.msra.mxu0 0
        %723 = vmatprep.subr.bf16.mxu0 0
        %724 = vmatpush2.bf16.msra.mxu0 0
        %725 = vmatprep.subr.bf16.mxu0 0
        %726 = vmatpush2.bf16.msra.mxu0 0
        %727 = vmatprep.subr.bf16.mxu0 0
        %728 = vmatpush2.bf16.msra.mxu0 0
        %729 = vmatprep.subr.bf16.mxu0 0
        %730 = vmatpush2.bf16.msra.mxu0 0
        %731 = vmatprep.subr.bf16.mxu0 0
        %732 = vmatpush2.bf16.msra.mxu0 0
        %733 = vmatprep.subr.bf16.mxu0 0
        %734 = vmatpush2.bf16.msra.mxu0 0
        %735 = vmatprep.subr.bf16.mxu0 0
        %736 = vmatpush2.bf16.msra.mxu0 0
        %737 = vmatprep.mubr.bf16.mxu0 0
        %738 = vmatmul.mubr.bf16.gmra.mxu0 %v703
        %v739 = vpop.f32.mrf.mxu0
        %v740 = vadd.f32 0.0, %v739
        %v741 = vpop.f32.mrf.mxu0
        %v742 = vpop.f32.mrf.mxu0
        %v743 = vadd.f32 0.0, %v742
        %v744 = vpop.f32.mrf.mxu0
        %745 = vdwg.mxu0
        %747 = vrot.lane.b32.xlu0 %v605, 96
        %v748 = vpop.permute.xlu0 %747
        %750 = vrot.lane.b32.xlu0 %v606, 96
        %v751 = vpop.permute.xlu0 %750
        %v753 = vsel %vm608, %v748, 0
        %v756 = vsel %vm608, %v751, 0
        %758 = vmatprep.subr.bf16.mxu0 0
        %759 = vmatpush1.bf16.xpose.msra.mxu0 0
        %760 = vmatprep.subr.bf16.mxu0 0
        %761 = vmatpush1.bf16.xpose.msra.mxu0 0
        %762 = vmatprep.subr.bf16.mxu0 0
        %763 = vmatpush1.bf16.xpose.msra.mxu0 0
        %764 = vmatprep.subr.bf16.mxu0 0
        %765 = vmatpush1.bf16.xpose.msra.mxu0 0
        %766 = vmatprep.subr.bf16.mxu0 0
        %767 = vmatpush1.bf16.xpose.msra.mxu0 0
        %768 = vmatprep.subr.bf16.mxu0 0
        %769 = vmatpush1.bf16.xpose.msra.mxu0 0
        %770 = vmatprep.subr.bf16.mxu0 0
        %771 = vmatpush1.bf16.xpose.msra.mxu0 0
        %772 = vmatprep.subr.bf16.mxu0 0
        %773 = vmatpush1.bf16.xpose.msra.mxu0 %v756
        %774 = vmatprep.subr.bf16.mxu0 0
        %775 = vmatpush2.bf16.xpose.msra.mxu0 0
        %776 = vmatprep.subr.bf16.mxu0 0
        %777 = vmatpush2.bf16.xpose.msra.mxu0 0
        %778 = vmatprep.subr.bf16.mxu0 0
        %779 = vmatpush2.bf16.xpose.msra.mxu0 0
        %780 = vmatprep.subr.bf16.mxu0 0
        %781 = vmatpush2.bf16.xpose.msra.mxu0 0
        %782 = vmatprep.subr.bf16.mxu0 0
        %783 = vmatpush2.bf16.xpose.msra.mxu0 0
        %784 = vmatprep.subr.bf16.mxu0 0
        %785 = vmatpush2.bf16.xpose.msra.mxu0 0
        %786 = vmatprep.subr.bf16.mxu0 0
        %787 = vmatpush2.bf16.xpose.msra.mxu0 0
        %788 = vmatprep.subr.bf16.mxu0 0
        %789 = vmatpush2.bf16.xpose.msra.mxu0 0
        %790 = vmatprep.mubr.bf16.mxu0 0
        %791 = vmatmul.mubr.bf16.gmra.mxu0 %v753
        %v792 = vpop.f32.mrf.mxu0
        %v793 = vadd.f32 0.0, %v792
        %v794 = vpop.f32.mrf.mxu0
        %v795 = vpop.f32.mrf.mxu0
        %v796 = vadd.f32 0.0, %v795
        %v797 = vpop.f32.mrf.mxu0
        %798 = vdwg.mxu0
        %v799 = vsel %vm656, %v793, -inf
        %800 = vmax.xlane.f32.xlu0 %v799
        %v801 = vpop.xlane.xlu0 %800
        %v802 = vsel %vm656, %v796, -inf
        %803 = vmax.xlane.f32.xlu0 %v802
        %v804 = vpop.xlane.xlu0 %803
        %v805 = vsub.f32 %v793, %v801
        %v806 = vsub.f32 %v796, %v804
        %v807 = vmul.f32 %v805, 1.442695
        %v808 = vpow.pop %v807
        %v809 = vmul.f32 %v806, 1.442695
        %v810 = vpow.pop %v809
        %v811 = vsel %vm656, %v808, 0.0
        %812 = vadd.xlane.f32.xlu0 %v811
        %v813 = vpop.xlane.xlu0 %812
        %v814 = vsel %vm656, %v810, 0.0
        %815 = vadd.xlane.f32.xlu0 %v814
        %v816 = vpop.xlane.xlu0 %815
        %v817 = vrcp.pop %v813
        %v818 = vrcp.pop %v816
        %v819 = vmul.f32 %v808, %v817
        %v820 = vmul.f32 %v810, %v818
        %v821 = vsel %vm656, %v819, -inf
        %822 = vmax.xlane.f32.xlu0 %v821
        %v823 = vpop.xlane.xlu0 %822
        %v824 = vsel %vm656, %v820, -inf
        %825 = vmax.xlane.f32.xlu0 %v824
        %v826 = vpop.xlane.xlu0 %825
        %v827 = vsub.f32 %v819, %v823
        %v828 = vsub.f32 %v820, %v826
        %v829 = vmul.f32 %v827, 1.442695
        %v830 = vpow.pop %v829
        %v831 = vmul.f32 %v828, 1.442695
        %v832 = vpow.pop %v831
        %v833 = vsel %vm656, %v830, 0.0
        %834 = vadd.xlane.f32.xlu0 %v833
        %v835 = vpop.xlane.xlu0 %834
        %v836 = vsel %vm656, %v832, 0.0
        %837 = vadd.xlane.f32.xlu0 %v836
        %v838 = vpop.xlane.xlu0 %837
        %v839 = vrcp.pop %v835
        %v840 = vrcp.pop %v838
        %v841 = vmul.f32 %v830, %v839
        %v842 = vmul.f32 %v832, %v840
        %v843 = vpack.c.bf16 %v842, %v841
        %845 = vrot.lane.b32.xlu0 %v607, 96
        %v846 = vpop.permute.xlu0 %845
        %v849 = vsel %vm656, %v843, 0
        %851 = vmatprep.subr.bf16.mxu0 0
        %852 = vmatpush1.bf16.msra.mxu0 0
        %853 = vmatprep.subr.bf16.mxu0 0
        %854 = vmatpush1.bf16.msra.mxu0 0
        %855 = vmatprep.subr.bf16.mxu0 0
        %856 = vmatpush1.bf16.msra.mxu0 0
        %857 = vmatprep.subr.bf16.mxu0 0
        %858 = vmatpush1.bf16.msra.mxu0 0
        %859 = vmatprep.subr.bf16.mxu0 0
        %860 = vmatpush1.bf16.msra.mxu0 0
        %861 = vmatprep.subr.bf16.mxu0 0
        %862 = vmatpush1.bf16.msra.mxu0 0
        %863 = vmatprep.subr.bf16.mxu0 0
        %864 = vmatpush1.bf16.msra.mxu0 0
        %865 = vmatprep.subr.bf16.mxu0 0
        %866 = vmatpush1.bf16.msra.mxu0 %v846
        %867 = vmatprep.subr.bf16.mxu0 0
        %868 = vmatpush2.bf16.msra.mxu0 0
        %869 = vmatprep.subr.bf16.mxu0 0
        %870 = vmatpush2.bf16.msra.mxu0 0
        %871 = vmatprep.subr.bf16.mxu0 0
        %872 = vmatpush2.bf16.msra.mxu0 0
        %873 = vmatprep.subr.bf16.mxu0 0
        %874 = vmatpush2.bf16.msra.mxu0 0
        %875 = vmatprep.subr.bf16.mxu0 0
        %876 = vmatpush2.bf16.msra.mxu0 0
        %877 = vmatprep.subr.bf16.mxu0 0
        %878 = vmatpush2.bf16.msra.mxu0 0
        %879 = vmatprep.subr.bf16.mxu0 0
        %880 = vmatpush2.bf16.msra.mxu0 0
        %881 = vmatprep.subr.bf16.mxu0 0
        %882 = vmatpush2.bf16.msra.mxu0 0
        %883 = vmatprep.mubr.bf16.mxu0 0
        %884 = vmatmul.mubr.bf16.gmra.mxu0 %v849
        %v885 = vpop.f32.mrf.mxu0
        %v886 = vadd.f32 0.0, %v885
        %v887 = vpop.f32.mrf.mxu0
        %v888 = vpop.f32.mrf.mxu0
        %v889 = vadd.f32 0.0, %v888
        %v890 = vpop.f32.mrf.mxu0
        %891 = vdwg.mxu0
        %892 = vrot.lane.b32.xlu0 %v605, 64
        %v893 = vpop.permute.xlu0 %892
        %894 = vrot.lane.b32.xlu0 %v606, 64
        %v895 = vpop.permute.xlu0 %894
        %v897 = vsel %vm608, %v893, 0
        %v900 = vsel %vm608, %v895, 0
        %902 = vmatprep.subr.bf16.mxu0 0
        %903 = vmatpush1.bf16.xpose.msra.mxu0 0
        %904 = vmatprep.subr.bf16.mxu0 0
        %905 = vmatpush1.bf16.xpose.msra.mxu0 0
        %906 = vmatprep.subr.bf16.mxu0 0
        %907 = vmatpush1.bf16.xpose.msra.mxu0 0
        %908 = vmatprep.subr.bf16.mxu0 0
        %909 = vmatpush1.bf16.xpose.msra.mxu0 0
        %910 = vmatprep.subr.bf16.mxu0 0
        %911 = vmatpush1.bf16.xpose.msra.mxu0 0
        %912 = vmatprep.subr.bf16.mxu0 0
        %913 = vmatpush1.bf16.xpose.msra.mxu0 0
        %914 = vmatprep.subr.bf16.mxu0 0
        %915 = vmatpush1.bf16.xpose.msra.mxu0 0
        %916 = vmatprep.subr.bf16.mxu0 0
        %917 = vmatpush1.bf16.xpose.msra.mxu0 %v900
        %918 = vmatprep.subr.bf16.mxu0 0
        %919 = vmatpush2.bf16.xpose.msra.mxu0 0
        %920 = vmatprep.subr.bf16.mxu0 0
        %921 = vmatpush2.bf16.xpose.msra.mxu0 0
        %922 = vmatprep.subr.bf16.mxu0 0
        %923 = vmatpush2.bf16.xpose.msra.mxu0 0
        %924 = vmatprep.subr.bf16.mxu0 0
        %925 = vmatpush2.bf16.xpose.msra.mxu0 0
        %926 = vmatprep.subr.bf16.mxu0 0
        %927 = vmatpush2.bf16.xpose.msra.mxu0 0
        %928 = vmatprep.subr.bf16.mxu0 0
        %929 = vmatpush2.bf16.xpose.msra.mxu0 0
        %930 = vmatprep.subr.bf16.mxu0 0
        %931 = vmatpush2.bf16.xpose.msra.mxu0 0
        %932 = vmatprep.subr.bf16.mxu0 0
        %933 = vmatpush2.bf16.xpose.msra.mxu0 0
        %934 = vmatprep.mubr.bf16.mxu0 0
        %935 = vmatmul.mubr.bf16.gmra.mxu0 %v897
        %v936 = vpop.f32.mrf.mxu0
        %v937 = vadd.f32 0.0, %v936
        %v938 = vpop.f32.mrf.mxu0
        %v939 = vpop.f32.mrf.mxu0
        %v940 = vadd.f32 0.0, %v939
        %v941 = vpop.f32.mrf.mxu0
        %942 = vdwg.mxu0
        %v943 = vsel %vm656, %v937, -inf
        %944 = vmax.xlane.f32.xlu0 %v943
        %v945 = vpop.xlane.xlu0 %944
        %v946 = vsel %vm656, %v940, -inf
        %947 = vmax.xlane.f32.xlu0 %v946
        %v948 = vpop.xlane.xlu0 %947
        %v949 = vsub.f32 %v937, %v945
        %v950 = vsub.f32 %v940, %v948
        %v951 = vmul.f32 %v949, 1.442695
        %v952 = vpow.pop %v951
        %v953 = vmul.f32 %v950, 1.442695
        %v954 = vpow.pop %v953
        %v955 = vsel %vm656, %v952, 0.0
        %956 = vadd.xlane.f32.xlu0 %v955
        %v957 = vpop.xlane.xlu0 %956
        %v958 = vsel %vm656, %v954, 0.0
        %959 = vadd.xlane.f32.xlu0 %v958
        %v960 = vpop.xlane.xlu0 %959
        %v961 = vrcp.pop %v957
        %v962 = vrcp.pop %v960
        %v963 = vmul.f32 %v952, %v961
        %v964 = vmul.f32 %v954, %v962
        %v965 = vsel %vm656, %v963, -inf
        %966 = vmax.xlane.f32.xlu0 %v965
        %v967 = vpop.xlane.xlu0 %966
        %v968 = vsel %vm656, %v964, -inf
        %969 = vmax.xlane.f32.xlu0 %v968
        %v970 = vpop.xlane.xlu0 %969
        %v971 = vsub.f32 %v963, %v967
        %v972 = vsub.f32 %v964, %v970
        %v973 = vmul.f32 %v971, 1.442695
        %v974 = vpow.pop %v973
        %v975 = vmul.f32 %v972, 1.442695
        %v976 = vpow.pop %v975
        %v977 = vsel %vm656, %v974, 0.0
        %978 = vadd.xlane.f32.xlu0 %v977
        %v979 = vpop.xlane.xlu0 %978
        %v980 = vsel %vm656, %v976, 0.0
        %981 = vadd.xlane.f32.xlu0 %v980
        %v982 = vpop.xlane.xlu0 %981
        %v983 = vrcp.pop %v979
        %v984 = vrcp.pop %v982
        %v985 = vmul.f32 %v974, %v983
        %v986 = vmul.f32 %v976, %v984
        %v987 = vpack.c.bf16 %v986, %v985
        %988 = vrot.lane.b32.xlu0 %v607, 64
        %v989 = vpop.permute.xlu0 %988
        %v992 = vsel %vm656, %v987, 0
        %994 = vmatprep.subr.bf16.mxu0 0
        %995 = vmatpush1.bf16.msra.mxu0 0
        %996 = vmatprep.subr.bf16.mxu0 0
        %997 = vmatpush1.bf16.msra.mxu0 0
        %998 = vmatprep.subr.bf16.mxu0 0
        %999 = vmatpush1.bf16.msra.mxu0 0
        %1000 = vmatprep.subr.bf16.mxu0 0
        %1001 = vmatpush1.bf16.msra.mxu0 0
        %1002 = vmatprep.subr.bf16.mxu0 0
        %1003 = vmatpush1.bf16.msra.mxu0 0
        %1004 = vmatprep.subr.bf16.mxu0 0
        %1005 = vmatpush1.bf16.msra.mxu0 0
        %1006 = vmatprep.subr.bf16.mxu0 0
        %1007 = vmatpush1.bf16.msra.mxu0 0
        %1008 = vmatprep.subr.bf16.mxu0 0
        %1009 = vmatpush1.bf16.msra.mxu0 %v989
        %1010 = vmatprep.subr.bf16.mxu0 0
        %1011 = vmatpush2.bf16.msra.mxu0 0
        %1012 = vmatprep.subr.bf16.mxu0 0
        %1013 = vmatpush2.bf16.msra.mxu0 0
        %1014 = vmatprep.subr.bf16.mxu0 0
        %1015 = vmatpush2.bf16.msra.mxu0 0
        %1016 = vmatprep.subr.bf16.mxu0 0
        %1017 = vmatpush2.bf16.msra.mxu0 0
        %1018 = vmatprep.subr.bf16.mxu0 0
        %1019 = vmatpush2.bf16.msra.mxu0 0
        %1020 = vmatprep.subr.bf16.mxu0 0
        %1021 = vmatpush2.bf16.msra.mxu0 0
        %1022 = vmatprep.subr.bf16.mxu0 0
        %1023 = vmatpush2.bf16.msra.mxu0 0
        %1024 = vmatprep.subr.bf16.mxu0 0
        %1025 = vmatpush2.bf16.msra.mxu0 0
        %1026 = vmatprep.mubr.bf16.mxu0 0
        %1027 = vmatmul.mubr.bf16.gmra.mxu0 %v992
        %v1028 = vpop.f32.mrf.mxu0
        %v1029 = vadd.f32 0.0, %v1028
        %v1030 = vpop.f32.mrf.mxu0
        %v1031 = vpop.f32.mrf.mxu0
        %v1032 = vadd.f32 0.0, %v1031
        %v1033 = vpop.f32.mrf.mxu0
        %1034 = vdwg.mxu0
        %1035 = vrot.lane.b32.xlu0 %v605, 32
        %v1036 = vpop.permute.xlu0 %1035
        %1037 = vrot.lane.b32.xlu0 %v606, 32
        %v1038 = vpop.permute.xlu0 %1037
        %v1040 = vsel %vm608, %v1036, 0
        %v1043 = vsel %vm608, %v1038, 0
        %1045 = vmatprep.subr.bf16.mxu0 0
        %1046 = vmatpush1.bf16.xpose.msra.mxu0 0
        %1047 = vmatprep.subr.bf16.mxu0 0
        %1048 = vmatpush1.bf16.xpose.msra.mxu0 0
        %1049 = vmatprep.subr.bf16.mxu0 0
        %1050 = vmatpush1.bf16.xpose.msra.mxu0 0
        %1051 = vmatprep.subr.bf16.mxu0 0
        %1052 = vmatpush1.bf16.xpose.msra.mxu0 0
        %1053 = vmatprep.subr.bf16.mxu0 0
        %1054 = vmatpush1.bf16.xpose.msra.mxu0 0
        %1055 = vmatprep.subr.bf16.mxu0 0
        %1056 = vmatpush1.bf16.xpose.msra.mxu0 0
        %1057 = vmatprep.subr.bf16.mxu0 0
        %1058 = vmatpush1.bf16.xpose.msra.mxu0 0
        %1059 = vmatprep.subr.bf16.mxu0 0
        %1060 = vmatpush1.bf16.xpose.msra.mxu0 %v1043
        %1061 = vmatprep.subr.bf16.mxu0 0
        %1062 = vmatpush2.bf16.xpose.msra.mxu0 0
        %1063 = vmatprep.subr.bf16.mxu0 0
        %1064 = vmatpush2.bf16.xpose.msra.mxu0 0
        %1065 = vmatprep.subr.bf16.mxu0 0
        %1066 = vmatpush2.bf16.xpose.msra.mxu0 0
        %1067 = vmatprep.subr.bf16.mxu0 0
        %1068 = vmatpush2.bf16.xpose.msra.mxu0 0
        %1069 = vmatprep.subr.bf16.mxu0 0
        %1070 = vmatpush2.bf16.xpose.msra.mxu0 0
        %1071 = vmatprep.subr.bf16.mxu0 0
        %1072 = vmatpush2.bf16.xpose.msra.mxu0 0
        %1073 = vmatprep.subr.bf16.mxu0 0
        %1074 = vmatpush2.bf16.xpose.msra.mxu0 0
        %1075 = vmatprep.subr.bf16.mxu0 0
        %1076 = vmatpush2.bf16.xpose.msra.mxu0 0
        %1077 = vmatprep.mubr.bf16.mxu0 0
        %1078 = vmatmul.mubr.bf16.gmra.mxu0 %v1040
        %v1079 = vpop.f32.mrf.mxu0
        %v1080 = vadd.f32 0.0, %v1079
        %v1081 = vpop.f32.mrf.mxu0
        %v1082 = vpop.f32.mrf.mxu0
        %v1083 = vadd.f32 0.0, %v1082
        %v1084 = vpop.f32.mrf.mxu0
        %1085 = vdwg.mxu0
        %v1086 = vsel %vm656, %v1080, -inf
        %1087 = vmax.xlane.f32.xlu0 %v1086
        %v1088 = vpop.xlane.xlu0 %1087
        %v1089 = vsel %vm656, %v1083, -inf
        %1090 = vmax.xlane.f32.xlu0 %v1089
        %v1091 = vpop.xlane.xlu0 %1090
        %v1092 = vsub.f32 %v1080, %v1088
        %v1093 = vsub.f32 %v1083, %v1091
        %v1094 = vmul.f32 %v1092, 1.442695
        %v1095 = vpow.pop %v1094
        %v1096 = vmul.f32 %v1093, 1.442695
        %v1097 = vpow.pop %v1096
        %v1098 = vsel %vm656, %v1095, 0.0
        %1099 = vadd.xlane.f32.xlu0 %v1098
        %v1100 = vpop.xlane.xlu0 %1099
        %v1101 = vsel %vm656, %v1097, 0.0
        %1102 = vadd.xlane.f32.xlu0 %v1101
        %v1103 = vpop.xlane.xlu0 %1102
        %v1104 = vrcp.pop %v1100
        %v1105 = vrcp.pop %v1103
        %v1106 = vmul.f32 %v1095, %v1104
        %v1107 = vmul.f32 %v1097, %v1105
        %v1108 = vsel %vm656, %v1106, -inf
        %1109 = vmax.xlane.f32.xlu0 %v1108
        %v1110 = vpop.xlane.xlu0 %1109
        %v1111 = vsel %vm656, %v1107, -inf
        %1112 = vmax.xlane.f32.xlu0 %v1111
        %v1113 = vpop.xlane.xlu0 %1112
        %v1114 = vsub.f32 %v1106, %v1110
        %v1115 = vsub.f32 %v1107, %v1113
        %v1116 = vmul.f32 %v1114, 1.442695
        %v1117 = vpow.pop %v1116
        %v1118 = vmul.f32 %v1115, 1.442695
        %v1119 = vpow.pop %v1118
        %v1120 = vsel %vm656, %v1117, 0.0
        %1121 = vadd.xlane.f32.xlu0 %v1120
        %v1122 = vpop.xlane.xlu0 %1121
        %v1123 = vsel %vm656, %v1119, 0.0
        %1124 = vadd.xlane.f32.xlu0 %v1123
        %v1125 = vpop.xlane.xlu0 %1124
        %v1126 = vrcp.pop %v1122
        %v1127 = vrcp.pop %v1125
        %v1128 = vmul.f32 %v1117, %v1126
        %v1129 = vmul.f32 %v1119, %v1127
        %v1130 = vpack.c.bf16 %v1129, %v1128
        %1131 = vrot.lane.b32.xlu0 %v607, 32
        %v1132 = vpop.permute.xlu0 %1131
        %v1135 = vsel %vm656, %v1130, 0
        %1137 = vmatprep.subr.bf16.mxu0 0
        %1138 = vmatpush1.bf16.msra.mxu0 0
        %1139 = vmatprep.subr.bf16.mxu0 0
        %1140 = vmatpush1.bf16.msra.mxu0 0
        %1141 = vmatprep.subr.bf16.mxu0 0
        %1142 = vmatpush1.bf16.msra.mxu0 0
        %1143 = vmatprep.subr.bf16.mxu0 0
        %1144 = vmatpush1.bf16.msra.mxu0 0
        %1145 = vmatprep.subr.bf16.mxu0 0
        %1146 = vmatpush1.bf16.msra.mxu0 0
        %1147 = vmatprep.subr.bf16.mxu0 0
        %1148 = vmatpush1.bf16.msra.mxu0 0
        %1149 = vmatprep.subr.bf16.mxu0 0
        %1150 = vmatpush1.bf16.msra.mxu0 0
        %1151 = vmatprep.subr.bf16.mxu0 0
        %1152 = vmatpush1.bf16.msra.mxu0 %v1132
        %1153 = vmatprep.subr.bf16.mxu0 0
        %1154 = vmatpush2.bf16.msra.mxu0 0
        %1155 = vmatprep.subr.bf16.mxu0 0
        %1156 = vmatpush2.bf16.msra.mxu0 0
        %1157 = vmatprep.subr.bf16.mxu0 0
        %1158 = vmatpush2.bf16.msra.mxu0 0
        %1159 = vmatprep.subr.bf16.mxu0 0
        %1160 = vmatpush2.bf16.msra.mxu0 0
        %1161 = vmatprep.subr.bf16.mxu0 0
        %1162 = vmatpush2.bf16.msra.mxu0 0
        %1163 = vmatprep.subr.bf16.mxu0 0
        %1164 = vmatpush2.bf16.msra.mxu0 0
        %1165 = vmatprep.subr.bf16.mxu0 0
        %1166 = vmatpush2.bf16.msra.mxu0 0
        %1167 = vmatprep.subr.bf16.mxu0 0
        %1168 = vmatpush2.bf16.msra.mxu0 0
        %1169 = vmatprep.mubr.bf16.mxu0 0
        %1170 = vmatmul.mubr.bf16.gmra.mxu0 %v1135
        %v1171 = vpop.f32.mrf.mxu0
        %v1172 = vadd.f32 0.0, %v1171
        %v1173 = vpop.f32.mrf.mxu0
        %v1174 = vpop.f32.mrf.mxu0
        %v1175 = vadd.f32 0.0, %v1174
        %v1176 = vpop.f32.mrf.mxu0
        %1177 = vdwg.mxu0
        %1180 = vrot.lane.b32.xlu0 %v886, 32
        %v1181 = vpop.permute.xlu0 %1180
        %1182 = vrot.lane.b32.xlu0 %v889, 32
        %v1183 = vpop.permute.xlu0 %1182
        %1188 = vrot.lane.b32.xlu0 %v1029, 64
        %v1189 = vpop.permute.xlu0 %1188
        %1190 = vrot.lane.b32.xlu0 %v1032, 64
        %v1191 = vpop.permute.xlu0 %1190
        %1196 = vrot.lane.b32.xlu0 %v1172, 96
        %v1197 = vpop.permute.xlu0 %1196
        %1198 = vrot.lane.b32.xlu0 %v1175, 96
        %v1199 = vpop.permute.xlu0 %1198
        %v1202 = vsel %vm608, %v740, %v1181
        %v1203 = vsel %vm608, %v743, %v1183
        %vm1204 = vcmask 523264
        %v1205 = vsel %vm1204, %v1202, %v1189
        %v1206 = vsel %vm1204, %v1203, %v1191
        %vm1207 = vcmask 785408
        %v1208 = vsel %vm1207, %v1205, %v1197
        %v1209 = vsel %vm1207, %v1206, %v1199
        %v1210 = vpack.c.bf16 %v1209, %v1208
        %v1211 = vld [vmem:[#allocation6] sm:$0xf]
        %v1212 = vld [vmem:[#allocation6 + $0x4] sm:$0xf]
        %v1213 = vld [vmem:[#allocation6 + $0x8] sm:$0xf]
        %v1214 = vld [vmem:[#allocation6 + $0xc] sm:$0xf]
        %v1215 = vld [vmem:[#allocation6 + $0x10] sm:$0xf]
        %v1216 = vld [vmem:[#allocation6 + $0x14] sm:$0xf]
        %v1217 = vld [vmem:[#allocation6 + $0x18] sm:$0xf]
        %v1218 = vld [vmem:[#allocation6 + $0x1c] sm:$0xf]
        %v1219 = vld [vmem:[#allocation6 + $0x20] sm:$0xf]
        %v1220 = vld [vmem:[#allocation6 + $0x24] sm:$0xf]
        %v1221 = vld [vmem:[#allocation6 + $0x28] sm:$0xf]
        %v1222 = vld [vmem:[#allocation6 + $0x2c] sm:$0xf]
        %v1223 = vld [vmem:[#allocation6 + $0x30] sm:$0xf]
        %v1224 = vld [vmem:[#allocation6 + $0x34] sm:$0xf]
        %v1225 = vld [vmem:[#allocation6 + $0x38] sm:$0xf]
        %v1226 = vld [vmem:[#allocation6 + $0x3c] sm:$0xf]
        %v1227 = vld [vmem:[#allocation7] sm:$0x1]
        %v1229 = vlaneseq
        %v1230 = vshrl.u32 %v1229, 7
        %v1231 = vsub.s32 0, %v1230
        %v1232 = vrot.slane %v1227, %v1231
        %v1250 = vunpack.c.l.b16 %v1211
        %v1251 = vunpack.c.l.b16 %v1212
        %v1252 = vunpack.c.l.b16 %v1213
        %v1253 = vunpack.c.l.b16 %v1214
        %v1254 = vunpack.c.l.b16 %v1215
        %v1255 = vunpack.c.l.b16 %v1216
        %v1256 = vunpack.c.l.b16 %v1217
        %v1257 = vunpack.c.l.b16 %v1218
        %v1258 = vunpack.c.l.b16 %v1219
        %v1259 = vunpack.c.l.b16 %v1220
        %v1260 = vunpack.c.l.b16 %v1221
        %v1261 = vunpack.c.l.b16 %v1222
        %v1262 = vunpack.c.l.b16 %v1223
        %v1263 = vunpack.c.l.b16 %v1224
        %v1264 = vunpack.c.l.b16 %v1225
        %v1265 = vunpack.c.l.b16 %v1226
        %v1266 = vpack.c.b16 %v1251, %v1250
        %v1267 = vpack.c.b16 %v1253, %v1252
        %v1268 = vpack.c.b16 %v1255, %v1254
        %v1269 = vpack.c.b16 %v1257, %v1256
        %v1270 = vpack.c.b16 %v1259, %v1258
        %v1271 = vpack.c.b16 %v1261, %v1260
        %v1272 = vpack.c.b16 %v1263, %v1262
        %v1273 = vpack.c.b16 %v1265, %v1264
        %1282 = vmatprep.subr.bf16.mxu0 0
        %1283 = vmatpush1.bf16.msra.mxu0 %v1273
        %1284 = vmatprep.subr.bf16.mxu0 0
        %1285 = vmatpush1.bf16.msra.mxu0 %v1272
        %1286 = vmatprep.subr.bf16.mxu0 0
        %1287 = vmatpush1.bf16.msra.mxu0 %v1271
        %1288 = vmatprep.subr.bf16.mxu0 0
        %1289 = vmatpush1.bf16.msra.mxu0 %v1270
        %1290 = vmatprep.subr.bf16.mxu0 0
        %1291 = vmatpush1.bf16.msra.mxu0 %v1269
        %1292 = vmatprep.subr.bf16.mxu0 0
        %1293 = vmatpush1.bf16.msra.mxu0 %v1268
        %1294 = vmatprep.subr.bf16.mxu0 0
        %1295 = vmatpush1.bf16.msra.mxu0 %v1267
        %1296 = vmatprep.subr.bf16.mxu0 0
        %1297 = vmatpush1.bf16.msra.mxu0 %v1266
        %1298 = vmatprep.subr.bf16.mxu0 0
        %1299 = vmatpush2.bf16.msra.mxu0 0
        %1300 = vmatprep.subr.bf16.mxu0 0
        %1301 = vmatpush2.bf16.msra.mxu0 0
        %1302 = vmatprep.subr.bf16.mxu0 0
        %1303 = vmatpush2.bf16.msra.mxu0 0
        %1304 = vmatprep.subr.bf16.mxu0 0
        %1305 = vmatpush2.bf16.msra.mxu0 0
        %1306 = vmatprep.subr.bf16.mxu0 0
        %1307 = vmatpush2.bf16.msra.mxu0 0
        %1308 = vmatprep.subr.bf16.mxu0 0
        %1309 = vmatpush2.bf16.msra.mxu0 0
        %1310 = vmatprep.subr.bf16.mxu0 0
        %1311 = vmatpush2.bf16.msra.mxu0 0
        %1312 = vmatprep.subr.bf16.mxu0 0
        %1313 = vmatpush2.bf16.msra.mxu0 0
        %1314 = vmatprep.mubr.bf16.mxu0 0
        %1315 = vmatmul.mubr.bf16.gmra.mxu0 %v1210
        %v1316 = vpop.f32.mrf.mxu0
        %v1317 = vadd.f32 %v1232, %v1316
        %v1318 = vpop.f32.mrf.mxu0
        %v1319 = vpop.f32.mrf.mxu0
        %v1320 = vadd.f32 %v1232, %v1319
        %v1321 = vpop.f32.mrf.mxu0
        %1322 = vdwg.mxu0
        %v1323 = vadd.f32 %v315, %v1317
        %v1324 = vadd.f32 %v316, %v1320
        %1325 = vst [vmem:[%s313] sm:$0xff] %v1323
        %1326 = vst [vmem:[%s313 + $0x8] sm:$0xff] %v1324
        %p1327 = scmp.lt.s32.totalorder %s22, 1
        %s1328 = scalar_select %p1327, %s22, 1
        %s1329 = smul.addr %s1328, 2
        %s1330 = smul.addr %s1329, 8
        %s1331 = scalar_lea.vmem %s6, %s1330
        // Predicated region
        $region61: #{transformer_forward.4} parent=43 // pred_check
          %p1332 = pneg %p171
        $region62: #{transformer_forward.4} parent=43 // pred_check_branch
          %1334 = sbr.rel (%p1332) target = $region64
        $region63: #{transformer_forward.4} parent=43 // pred_region
          _
        $region64: #{transformer_forward.4} parent=43 // pred_fallthru
          _
      $region44: #{transformer_forward.4} parent=5 // pred_fallthru
        _
      %p1335 = scmp.le.s32.totalorder 2, %s17
      // Predicated region
      $region65: #{transformer_forward.4} parent=5 // pred_check
        %p1336 = pneg %p1335
      $region66: #{transformer_forward.4} parent=5 // pred_check_branch
        %1338 = sbr.rel (%p1336) target = $region68
      $region67: #{transformer_forward.4} parent=5 // pred_region
        %s1339 = ssub.s32 %s17, 2
        // Predicated region
        $region69: #{transformer_forward.4} parent=67 // pred_check
          %p1340 = pneg %p177
        $region70: #{transformer_forward.4} parent=67 // pred_check_branch
          %1342 = sbr.rel (%p1340) target = $region72
        $region71: #{transformer_forward.4} parent=67 // pred_region
          %p1343 = scmp.lt.s32.totalorder %s23, 1
          %s1344 = scalar_select %p1343, %s23, 1
          %s1345 = smul.addr %s1344, 2
          %s1346 = smul.addr %s1345, 8
          %s1347 = scalar_lea.vmem %s6, %s1346
        $region72: #{transformer_forward.4} parent=67 // pred_fallthru
          _
      $region68: #{transformer_forward.4} parent=5 // pred_fallthru
        _
    $region6: #{transformer_forward.4} parent=1 // loop_footer
      %s21 = sadd.s32 1, %s17
    $region7: #{transformer_forward.4} parent=1 // loop_footer_branch
      %16 = sbr.rel target = $region3
    $region8: #{transformer_forward.4} parent=1 // loop_exit
      _
    %1348 = vsyncpa [#allocation3], 1
    %s1349 = scalar_lea.sflag [#allocation3], 1
    %1350 = vsyncpa %s1349, 1
    %1351 = vsyncpa [#allocation5], 1
    %1352 = vsyncpa [#allocation8], 1

</llo_original>
